<compile_context>
chip_gen: v7x
topology: tpu7x:2x2x1
jax: 0.10.0
libtpu: 0.0.40
codegen_flags: <defaults>
</compile_context>

<pallas_src>
import math
import functools

import jax
import jax.numpy as jnp
from jax.experimental import pallas as pl
from jax.experimental.pallas import tpu as pltpu


# ----------------------------- kernel ---------------------------------------
def _cross_mha_kernel(v_ref, l_ref, wq_ref, bq_ref, wkv_ref, bkv_ref,
                      wo_ref, bo_ref, ln_ref, g_ref, vo_ref, lo_ref, *,
                      num_heads, hd_pad):
    # v_ref:  (B, Nv, D)   l_ref: (B, Nl, D)            (D unpadded, e.g. 32)
    # wq_ref: (2, D, H*hd_pad)        bq_ref: (2, H*hd_pad)    [q scale folded]
    # wkv_ref:(2, D, 2*H*hd_pad)      bkv_ref:(2, 2*H*hd_pad)  [K|V fused cols]
    # wo_ref: (2, H*hd_pad, D)        bo_ref: (2, D)
    # ln_ref: (4, D) = [ln_v_g, ln_v_b, ln_l_g, ln_l_b]
    # g_ref:  (2, D) = [gamma_v, gamma_l]
    H = num_heads
    HDP = H * hd_pad
    B, Nv, D = v_ref.shape
    Nl = l_ref.shape[1]

    v = v_ref[...]                                 # (B, Nv, D)
    l = l_ref[...]                                 # (B, Nl, D)
    v2d = v.reshape(B * Nv, D)                     # trivial leading-dim merges
    l2d = l.reshape(B * Nl, D)
    inv_d = 1.0 / D

    def layernorm(x, gamma, beta):
        mu = jnp.sum(x, axis=-1, keepdims=True) * inv_d
        diff = x - mu
        var = jnp.sum(diff * diff, axis=-1, keepdims=True) * inv_d
        return diff * jax.lax.rsqrt(var + 1e-5) * gamma + beta

    v_norm = layernorm(v2d, ln_ref[0], ln_ref[1])  # (B*Nv, D)
    l_norm = layernorm(l2d, ln_ref[2], ln_ref[3])  # (B*Nl, D)

    def split_heads(x2d, n):
        # (B*n, H*hd_pad) -> (H*B, n, hd_pad); batch index g = h*B + b.
        x3 = x2d.reshape(B, n, HDP)
        parts = [x3[:, :, h * hd_pad:(h + 1) * hd_pad] for h in range(H)]
        return jnp.stack(parts).reshape(H * B, n, hd_pad)

    def mha(q_in, kv_in, nq, nk, d):   # d: static direction (0: v->l, 1: l->v)
        # Single 2-D matmuls: (B*n, D) @ (D, 128) and (B*n, D) @ (D, 256).
        q2d = jnp.dot(q_in, wq_ref[d],
                      preferred_element_type=jnp.float32) + bq_ref[d]
        kv2d = jnp.dot(kv_in, wkv_ref[d],
                       preferred_element_type=jnp.float32) + bkv_ref[d]
        k2d = kv2d[:, :HDP]
        vv2d = kv2d[:, HDP:]

        qh = split_heads(q2d, nq)                  # (H*B, nq, hd_pad)
        kh = split_heads(k2d, nk)                  # (H*B, nk, hd_pad)
        vh = split_heads(vv2d, nk)

        # Scores: 1/sqrt(head_dim) already folded into wq/bq.
        s = jnp.einsum('gqc,gkc->gqk', qh, kh,
                       preferred_element_type=jnp.float32)
        s = s - jnp.max(s, axis=-1, keepdims=True)
        e = jnp.exp(s)
        p = e / jnp.sum(e, axis=-1, keepdims=True)     # exact divide (tiny)
        ctx = jnp.einsum('gqk,gkc->gqc', p, vh,
                         preferred_element_type=jnp.float32)   # (H*B, nq, hd_pad)

        # Lane-concat heads back -> single (B*nq, 128) @ (128, D) out-proj.
        ctx4 = ctx.reshape(H, B, nq, hd_pad)
        ctx_m = jnp.concatenate([ctx4[h] for h in range(H)], axis=-1)  # (B,nq,HDP)
        out = jnp.dot(ctx_m.reshape(B * nq, HDP), wo_ref[d],
                      preferred_element_type=jnp.float32) + bo_ref[d]
        return out.reshape(B, nq, D)

    upd_v = mha(v_norm, l_norm, Nv, Nl, 0)   # attn_v_to_l(q=v_norm, k=v=l_norm)
    upd_l = mha(l_norm, v_norm, Nl, Nv, 1)   # attn_l_to_v(q=l_norm, k=v=v_norm)

    # Dropout / DropPath are identity in eval mode.
    vo_ref[...] = v + g_ref[0] * upd_v
    lo_ref[...] = l + g_ref[1] * upd_l


# --------------------- one-time parameter packing ---------------------------
def pack_cross_mha_params(params, *, num_heads):
    """Repack weights ONCE at module init (not in the per-call path).

    Heads are concatenated along output columns (each padded hd -> hd_pad so
    H*hd_pad is lane-dense); K and V weights are fused column-wise; the query
    1/sqrt(head_dim) scale is folded into Wq/bq.
    """
    W, b, LN, G = params["W"], params["b"], params["ln"], params["gamma"]
    d_model = W.shape[-1]
    H = num_heads
    hd = d_model // H
    hd_pad = max(hd, -(-128 // H))
    hd_pad = ((hd_pad + 7) // 8) * 8
    scale = 1.0 / math.sqrt(hd)

    def pack_in(w, bias, do_scale):
        # w: (D, D) with y = x @ w; split output columns into heads, pad hd.
        w3 = w.reshape(d_model, H, hd)
        b2 = bias.reshape(H, hd)
        if do_scale:                                   # fold 1/sqrt(hd)
            w3 = w3 * scale
            b2 = b2 * scale
        w3 = jnp.pad(w3, ((0, 0), (0, 0), (0, hd_pad - hd)))
        b2 = jnp.pad(b2, ((0, 0), (0, hd_pad - hd)))
        return w3.reshape(d_model, H * hd_pad), b2.reshape(H * hd_pad)

    def pack_out(w):
        # w: (D, D) with y = ctx @ w; split input rows into heads, pad hd.
        w3 = w.reshape(H, hd, d_model)
        w3 = jnp.pad(w3, ((0, 0), (0, hd_pad - hd), (0, 0)))
        return w3.reshape(H * hd_pad, d_model)

    WQ, BQ, WKV, BKV, WO, BO = [], [], [], [], [], []
    for base in (0, 4):                        # dir 0: v->l, dir 1: l->v
        wq, bq = pack_in(W[base + 0], b[base + 0], True)
        wk, bk = pack_in(W[base + 1], b[base + 1], False)
        wv, bv = pack_in(W[base + 2], b[base + 2], False)
        WQ.append(wq)
        BQ.append(bq)
        WKV.append(jnp.concatenate([wk, wv], axis=1))      # (D, 2*H*hd_pad)
        BKV.append(jnp.concatenate([bk, bv], axis=0))
        WO.append(pack_out(W[base + 3]))
        BO.append(b[base + 3])

    packed = {
        "wq": jnp.stack(WQ), "bq": jnp.stack(BQ),
        "wkv": jnp.stack(WKV), "bkv": jnp.stack(BKV),
        "wo": jnp.stack(WO), "bo": jnp.stack(BO),
        "ln": LN.astype(jnp.float32), "g": G.astype(jnp.float32),
    }
    return packed, hd_pad


# ------------------------------ wrapper --------------------------------------
def cross_modal_mha(v, l, packed, *, num_heads, hd_pad):
    B, Nv, D = v.shape
    _, Nl, Dl = l.shape
    assert D == Dl, "module requires v_dim == l_dim"
    HDP = num_heads * hd_pad

    kernel = functools.partial(_cross_mha_kernel,
                               num_heads=num_heads, hd_pad=hd_pad)

    def full(shape):
        return pl.BlockSpec(shape, lambda i: (0,) * len(shape))

    in_specs = [
        full((B, Nv, D)), full((B, Nl, D)),
        full((2, D, HDP)), full((2, HDP)),
        full((2, D, 2 * HDP)), full((2, 2 * HDP)),
        full((2, HDP, D)), full((2, D)),
        full((4, D)), full((2, D)),
    ]
    out_specs = (full((B, Nv, D)), full((B, Nl, D)))

    # TODO(synk): on v7x (2 TensorCores) a grid=(2,) "parallel" split over the
    # two attention directions (or over batch) would keep both cores busy.
    return pl.pallas_call(
        kernel,
        out_shape=(jax.ShapeDtypeStruct((B, Nv, D), jnp.float32),
                   jax.ShapeDtypeStruct((B, Nl, D), jnp.float32)),
        grid=(1,),
        in_specs=in_specs,
        out_specs=out_specs,
        compiler_params=pltpu.CompilerParams(
            dimension_semantics=("arbitrary",)),
    )(v, l, packed["wq"], packed["bq"], packed["wkv"], packed["bkv"],
      packed["wo"], packed["bo"], packed["ln"], packed["g"])


# ------------------------- pure-JAX reference -------------------------------
def _reference(v, l, params, *, num_heads):
    W, Bv, LN, G = params["W"], params["b"], params["ln"], params["gamma"]
    D = v.shape[-1]
    hd = D // num_heads

    def ln(x, g, b):
        mu = jnp.mean(x, -1, keepdims=True)
        var = jnp.mean((x - mu) ** 2, -1, keepdims=True)
        return (x - mu) / jnp.sqrt(var + 1e-5) * g + b

    def mha(q_in, kv_in, base):
        q = q_in @ W[base + 0] + Bv[base + 0]
        k = kv_in @ W[base + 1] + Bv[base + 1]
        vv = kv_in @ W[base + 2] + Bv[base + 2]
        B_, Nq, _ = q.shape
        Nk = k.shape[1]
        qh = q.reshape(B_, Nq, num_heads, hd).transpose(0, 2, 1, 3)
        kh = k.reshape(B_, Nk, num_heads, hd).transpose(0, 2, 1, 3)
        vh = vv.reshape(B_, Nk, num_heads, hd).transpose(0, 2, 1, 3)
        scores = jnp.einsum("bhqd,bhkd->bhqk", qh, kh) / math.sqrt(hd)
        attn = jax.nn.softmax(scores, axis=-1)
        ctx = jnp.einsum("bhqk,bhkd->bhqd", attn, vh)
        ctx = ctx.transpose(0, 2, 1, 3).reshape(B_, Nq, D)
        return ctx @ W[base + 3] + Bv[base + 3]

    v_norm = ln(v, LN[0], LN[1])
    l_norm = ln(l, LN[2], LN[3])
    upd_v = mha(v_norm, l_norm, 0)
    upd_l = mha(l_norm, v_norm, 4)
    return v + G[0] * upd_v, l + G[1] * upd_l


if __name__ == "__main__":
    # v_dim == l_dim == 32 is required by the module (attn_v_to_l's key/value
    # Linears are v_dim x v_dim but applied to l).
    B, Nv, Nl, D, H = 2, 16, 8, 32, 4
    init_values = 0.1   # larger than the 1e-4 default so the check exercises attention

    key = jax.random.PRNGKey(0)
    kv, kl, kw, kb = jax.random.split(key, 4)

    v = jax.random.normal(kv, (B, Nv, D), dtype=jnp.float32)
    l = jax.random.normal(kl, (B, Nl, D), dtype=jnp.float32)

    params = {
        # W stored pre-transposed so y = x @ W + b matches torch nn.Linear.
        "W": 0.05 * jax.random.normal(kw, (8, D, D), dtype=jnp.float32),
        "b": 0.01 * jax.random.normal(kb, (8, D), dtype=jnp.float32),
        "ln": jnp.stack([jnp.ones(D), jnp.zeros(D),
                         jnp.ones(D), jnp.zeros(D)]).astype(jnp.float32),
        "gamma": jnp.full((2, D), init_values, dtype=jnp.float32),
    }

    # One-time weight packing (module init) -- hoisted out of the call path.
    packed, hd_pad = pack_cross_mha_params(params, num_heads=H)

    v_out, l_out = cross_modal_mha(v, l, packed, num_heads=H, hd_pad=hd_pad)
    jax.block_until_ready((v_out, l_out))

    v_ref, l_ref = _reference(v, l, params, num_heads=H)
    assert jnp.allclose(v_out, v_ref, atol=1e-5, rtol=1e-5), \
        float(jnp.max(jnp.abs(v_out - v_ref)))
    assert jnp.allclose(l_out, l_ref, atol=1e-5, rtol=1e-5), \
        float(jnp.max(jnp.abs(l_out - l_ref)))

    print("KERNEL_OK")
</pallas_src>

<mosaic_0001>
module attributes {stable_mosaic.version = 11 : i64} {
  func.func @_cross_mha_kernel(%arg0: i32, %arg1: memref<2x16x32xf32, #tpu.memory_space<vmem>>, %arg2: memref<2x8x32xf32, #tpu.memory_space<vmem>>, %arg3: memref<2x32x128xf32, #tpu.memory_space<vmem>>, %arg4: memref<2x128xf32, #tpu.memory_space<vmem>>, %arg5: memref<2x32x256xf32, #tpu.memory_space<vmem>>, %arg6: memref<2x256xf32, #tpu.memory_space<vmem>>, %arg7: memref<2x128x32xf32, #tpu.memory_space<vmem>>, %arg8: memref<2x32xf32, #tpu.memory_space<vmem>>, %arg9: memref<4x32xf32, #tpu.memory_space<vmem>>, %arg10: memref<2x32xf32, #tpu.memory_space<vmem>>, %arg11: memref<2x16x32xf32, #tpu.memory_space<vmem>>, %arg12: memref<2x8x32xf32, #tpu.memory_space<vmem>>) attributes {dimension_semantics = [#tpu.dimension_semantics<arbitrary>], iteration_bounds = array<i64: 1>, scalar_prefetch = 0 : i64, scratch_operands = 0 : i64, tpu.core_type = #tpu.core_type<tc>, window_params = [{pipeline_mode = #tpu.pipeline_mode<synchronous>, transform_indices = @transform_0, window_bounds = array<i64: 2, 16, 32>}, {pipeline_mode = #tpu.pipeline_mode<synchronous>, transform_indices = @transform_1, window_bounds = array<i64: 2, 8, 32>}, {pipeline_mode = #tpu.pipeline_mode<synchronous>, transform_indices = @transform_2, window_bounds = array<i64: 2, 32, 128>}, {pipeline_mode = #tpu.pipeline_mode<synchronous>, transform_indices = @transform_3, window_bounds = array<i64: 2, 128>}, {pipeline_mode = #tpu.pipeline_mode<synchronous>, transform_indices = @transform_4, window_bounds = array<i64: 2, 32, 256>}, {pipeline_mode = #tpu.pipeline_mode<synchronous>, transform_indices = @transform_5, window_bounds = array<i64: 2, 256>}, {pipeline_mode = #tpu.pipeline_mode<synchronous>, transform_indices = @transform_6, window_bounds = array<i64: 2, 128, 32>}, {pipeline_mode = #tpu.pipeline_mode<synchronous>, transform_indices = @transform_7, window_bounds = array<i64: 2, 32>}, {pipeline_mode = #tpu.pipeline_mode<synchronous>, transform_indices = @transform_8, window_bounds = array<i64: 4, 32>}, {pipeline_mode = #tpu.pipeline_mode<synchronous>, transform_indices = @transform_9, window_bounds = array<i64: 2, 32>}, {pipeline_mode = #tpu.pipeline_mode<synchronous>, transform_indices = @transform_10, window_bounds = array<i64: 2, 16, 32>}, {pipeline_mode = #tpu.pipeline_mode<synchronous>, transform_indices = @transform_11, window_bounds = array<i64: 2, 8, 32>}]} {
    %c0 = arith.constant 0 : index
    %c0_0 = arith.constant 0 : index
    %c0_1 = arith.constant 0 : index
    %0 = vector.load %arg1[%c0, %c0_0, %c0_1] : memref<2x16x32xf32, #tpu.memory_space<vmem>>, vector<2x16x32xf32>
    %c0_2 = arith.constant 0 : index
    %c0_3 = arith.constant 0 : index
    %c0_4 = arith.constant 0 : index
    %1 = vector.load %arg2[%c0_2, %c0_3, %c0_4] : memref<2x8x32xf32, #tpu.memory_space<vmem>>, vector<2x8x32xf32>
    %2 = vector.shape_cast %0 : vector<2x16x32xf32> to vector<32x32xf32>
    %3 = vector.shape_cast %1 : vector<2x8x32xf32> to vector<16x32xf32>
    %c0_5 = arith.constant 0 : index
    %c0_6 = arith.constant 0 : index
    %4 = vector.load %arg9[%c0_5, %c0_6] : memref<4x32xf32, #tpu.memory_space<vmem>>, vector<1x32xf32>
    %5 = vector.shape_cast %4 : vector<1x32xf32> to vector<32xf32>
    %c1 = arith.constant 1 : index
    %c0_7 = arith.constant 0 : index
    %6 = vector.load %arg9[%c1, %c0_7] : memref<4x32xf32, #tpu.memory_space<vmem>>, vector<1x32xf32>
    %7 = vector.shape_cast %6 : vector<1x32xf32> to vector<32xf32>
    %cst = arith.constant dense<0.000000e+00> : vector<32xf32>
    %8 = vector.multi_reduction <add>, %2, %cst [1] : vector<32x32xf32> to vector<32xf32>
    %9 = vector.shape_cast %8 : vector<32xf32> to vector<32x1xf32>
    %cst_8 = arith.constant 3.125000e-02 : f32
    %10 = vector.broadcast %cst_8 : f32 to vector<32x1xf32>
    %11 = arith.mulf %9, %10 : vector<32x1xf32>
    %12 = vector.broadcast %11 : vector<32x1xf32> to vector<32x32xf32>
    %13 = arith.subf %2, %12 : vector<32x32xf32>
    %14 = arith.mulf %13, %13 : vector<32x32xf32>
    %cst_9 = arith.constant dense<0.000000e+00> : vector<32xf32>
    %15 = vector.multi_reduction <add>, %14, %cst_9 [1] : vector<32x32xf32> to vector<32xf32>
    %16 = vector.shape_cast %15 : vector<32xf32> to vector<32x1xf32>
    %cst_10 = arith.constant 3.125000e-02 : f32
    %17 = vector.broadcast %cst_10 : f32 to vector<32x1xf32>
    %18 = arith.mulf %16, %17 : vector<32x1xf32>
    %cst_11 = arith.constant 9.99999974E-6 : f32
    %19 = vector.broadcast %cst_11 : f32 to vector<32x1xf32>
    %20 = arith.addf %18, %19 : vector<32x1xf32>
    %21 = math.rsqrt %20 : vector<32x1xf32>
    %22 = vector.broadcast %21 : vector<32x1xf32> to vector<32x32xf32>
    %23 = arith.mulf %13, %22 : vector<32x32xf32>
    %24 = vector.shape_cast %5 : vector<32xf32> to vector<1x32xf32>
    %25 = vector.broadcast %24 : vector<1x32xf32> to vector<32x32xf32>
    %26 = arith.mulf %23, %25 : vector<32x32xf32>
    %27 = vector.shape_cast %7 : vector<32xf32> to vector<1x32xf32>
    %28 = vector.broadcast %27 : vector<1x32xf32> to vector<32x32xf32>
    %29 = arith.addf %26, %28 : vector<32x32xf32>
    %c2 = arith.constant 2 : index
    %c0_12 = arith.constant 0 : index
    %30 = vector.load %arg9[%c2, %c0_12] : memref<4x32xf32, #tpu.memory_space<vmem>>, vector<1x32xf32>
    %31 = vector.shape_cast %30 : vector<1x32xf32> to vector<32xf32>
    %c3 = arith.constant 3 : index
    %c0_13 = arith.constant 0 : index
    %32 = vector.load %arg9[%c3, %c0_13] : memref<4x32xf32, #tpu.memory_space<vmem>>, vector<1x32xf32>
    %33 = vector.shape_cast %32 : vector<1x32xf32> to vector<32xf32>
    %cst_14 = arith.constant dense<0.000000e+00> : vector<16xf32>
    %34 = vector.multi_reduction <add>, %3, %cst_14 [1] : vector<16x32xf32> to vector<16xf32>
    %35 = vector.shape_cast %34 : vector<16xf32> to vector<16x1xf32>
    %cst_15 = arith.constant 3.125000e-02 : f32
    %36 = vector.broadcast %cst_15 : f32 to vector<16x1xf32>
    %37 = arith.mulf %35, %36 : vector<16x1xf32>
    %38 = vector.broadcast %37 : vector<16x1xf32> to vector<16x32xf32>
    %39 = arith.subf %3, %38 : vector<16x32xf32>
    %40 = arith.mulf %39, %39 : vector<16x32xf32>
    %cst_16 = arith.constant dense<0.000000e+00> : vector<16xf32>
    %41 = vector.multi_reduction <add>, %40, %cst_16 [1] : vector<16x32xf32> to vector<16xf32>
    %42 = vector.shape_cast %41 : vector<16xf32> to vector<16x1xf32>
    %cst_17 = arith.constant 3.125000e-02 : f32
    %43 = vector.broadcast %cst_17 : f32 to vector<16x1xf32>
    %44 = arith.mulf %42, %43 : vector<16x1xf32>
    %cst_18 = arith.constant 9.99999974E-6 : f32
    %45 = vector.broadcast %cst_18 : f32 to vector<16x1xf32>
    %46 = arith.addf %44, %45 : vector<16x1xf32>
    %47 = math.rsqrt %46 : vector<16x1xf32>
    %48 = vector.broadcast %47 : vector<16x1xf32> to vector<16x32xf32>
    %49 = arith.mulf %39, %48 : vector<16x32xf32>
    %50 = vector.shape_cast %31 : vector<32xf32> to vector<1x32xf32>
    %51 = vector.broadcast %50 : vector<1x32xf32> to vector<16x32xf32>
    %52 = arith.mulf %49, %51 : vector<16x32xf32>
    %53 = vector.shape_cast %33 : vector<32xf32> to vector<1x32xf32>
    %54 = vector.broadcast %53 : vector<1x32xf32> to vector<16x32xf32>
    %55 = arith.addf %52, %54 : vector<16x32xf32>
    %c0_19 = arith.constant 0 : index
    %c0_20 = arith.constant 0 : index
    %c0_21 = arith.constant 0 : index
    %56 = vector.load %arg3[%c0_19, %c0_20, %c0_21] : memref<2x32x128xf32, #tpu.memory_space<vmem>>, vector<1x32x128xf32>
    %57 = vector.shape_cast %56 : vector<1x32x128xf32> to vector<32x128xf32>
    %cst_22 = arith.constant dense<0.000000e+00> : vector<32x128xf32>
    %58 = tpu.matmul %29, %57, %cst_22 {dimension_numbers = #tpu.dot_dimension_numbers<[1], [0], [0], [1], [0, 0, 1, 1], [], []>} : vector<32x32xf32>, vector<32x128xf32>, vector<32x128xf32> -> vector<32x128xf32>
    %c0_23 = arith.constant 0 : index
    %c0_24 = arith.constant 0 : index
    %59 = vector.load %arg4[%c0_23, %c0_24] : memref<2x128xf32, #tpu.memory_space<vmem>>, vector<1x128xf32>
    %60 = vector.shape_cast %59 : vector<1x128xf32> to vector<128xf32>
    %61 = vector.shape_cast %60 : vector<128xf32> to vector<1x128xf32>
    %62 = vector.broadcast %61 : vector<1x128xf32> to vector<32x128xf32>
    %63 = arith.addf %58, %62 : vector<32x128xf32>
    %c0_25 = arith.constant 0 : index
    %c0_26 = arith.constant 0 : index
    %c0_27 = arith.constant 0 : index
    %64 = vector.load %arg5[%c0_25, %c0_26, %c0_27] : memref<2x32x256xf32, #tpu.memory_space<vmem>>, vector<1x32x256xf32>
    %65 = vector.shape_cast %64 : vector<1x32x256xf32> to vector<32x256xf32>
    %cst_28 = arith.constant dense<0.000000e+00> : vector<16x256xf32>
    %66 = tpu.matmul %55, %65, %cst_28 {dimension_numbers = #tpu.dot_dimension_numbers<[1], [0], [0], [1], [0, 0, 1, 1], [], []>} : vector<16x32xf32>, vector<32x256xf32>, vector<16x256xf32> -> vector<16x256xf32>
    %c0_29 = arith.constant 0 : index
    %c0_30 = arith.constant 0 : index
    %67 = vector.load %arg6[%c0_29, %c0_30] : memref<2x256xf32, #tpu.memory_space<vmem>>, vector<1x256xf32>
    %68 = vector.shape_cast %67 : vector<1x256xf32> to vector<256xf32>
    %69 = vector.shape_cast %68 : vector<256xf32> to vector<1x256xf32>
    %70 = vector.broadcast %69 : vector<1x256xf32> to vector<16x256xf32>
    %71 = arith.addf %66, %70 : vector<16x256xf32>
    %72 = vector.extract_strided_slice %71 {offsets = [0, 0], sizes = [16, 128], strides = [1, 1]} : vector<16x256xf32> to vector<16x128xf32>
    %73 = vector.extract_strided_slice %71 {offsets = [0, 128], sizes = [16, 128], strides = [1, 1]} : vector<16x256xf32> to vector<16x128xf32>
    %74 = vector.shape_cast %63 : vector<32x128xf32> to vector<2x16x128xf32>
    %75 = vector.extract_strided_slice %74 {offsets = [0, 0, 0], sizes = [2, 16, 32], strides = [1, 1, 1]} : vector<2x16x128xf32> to vector<2x16x32xf32>
    %76 = vector.extract_strided_slice %74 {offsets = [0, 0, 32], sizes = [2, 16, 32], strides = [1, 1, 1]} : vector<2x16x128xf32> to vector<2x16x32xf32>
    %77 = vector.extract_strided_slice %74 {offsets = [0, 0, 64], sizes = [2, 16, 32], strides = [1, 1, 1]} : vector<2x16x128xf32> to vector<2x16x32xf32>
    %78 = vector.extract_strided_slice %74 {offsets = [0, 0, 96], sizes = [2, 16, 32], strides = [1, 1, 1]} : vector<2x16x128xf32> to vector<2x16x32xf32>
    %79 = vector.shape_cast %75 : vector<2x16x32xf32> to vector<1x2x16x32xf32>
    %80 = vector.shape_cast %76 : vector<2x16x32xf32> to vector<1x2x16x32xf32>
    %81 = vector.shape_cast %77 : vector<2x16x32xf32> to vector<1x2x16x32xf32>
    %82 = vector.shape_cast %78 : vector<2x16x32xf32> to vector<1x2x16x32xf32>
    %83 = tpu.concatenate %79, %80, %81, %82 in 0 : vector<1x2x16x32xf32>, vector<1x2x16x32xf32>, vector<1x2x16x32xf32>, vector<1x2x16x32xf32> -> vector<4x2x16x32xf32>
    %84 = vector.shape_cast %83 : vector<4x2x16x32xf32> to vector<8x16x32xf32>
    %85 = vector.shape_cast %72 : vector<16x128xf32> to vector<2x8x128xf32>
    %86 = vector.extract_strided_slice %85 {offsets = [0, 0, 0], sizes = [2, 8, 32], strides = [1, 1, 1]} : vector<2x8x128xf32> to vector<2x8x32xf32>
    %87 = vector.extract_strided_slice %85 {offsets = [0, 0, 32], sizes = [2, 8, 32], strides = [1, 1, 1]} : vector<2x8x128xf32> to vector<2x8x32xf32>
    %88 = vector.extract_strided_slice %85 {offsets = [0, 0, 64], sizes = [2, 8, 32], strides = [1, 1, 1]} : vector<2x8x128xf32> to vector<2x8x32xf32>
    %89 = vector.extract_strided_slice %85 {offsets = [0, 0, 96], sizes = [2, 8, 32], strides = [1, 1, 1]} : vector<2x8x128xf32> to vector<2x8x32xf32>
    %90 = vector.shape_cast %86 : vector<2x8x32xf32> to vector<1x2x8x32xf32>
    %91 = vector.shape_cast %87 : vector<2x8x32xf32> to vector<1x2x8x32xf32>
    %92 = vector.shape_cast %88 : vector<2x8x32xf32> to vector<1x2x8x32xf32>
    %93 = vector.shape_cast %89 : vector<2x8x32xf32> to vector<1x2x8x32xf32>
    %94 = tpu.concatenate %90, %91, %92, %93 in 0 : vector<1x2x8x32xf32>, vector<1x2x8x32xf32>, vector<1x2x8x32xf32>, vector<1x2x8x32xf32> -> vector<4x2x8x32xf32>
    %95 = vector.shape_cast %94 : vector<4x2x8x32xf32> to vector<8x8x32xf32>
    %96 = vector.shape_cast %73 : vector<16x128xf32> to vector<2x8x128xf32>
    %97 = vector.extract_strided_slice %96 {offsets = [0, 0, 0], sizes = [2, 8, 32], strides = [1, 1, 1]} : vector<2x8x128xf32> to vector<2x8x32xf32>
    %98 = vector.extract_strided_slice %96 {offsets = [0, 0, 32], sizes = [2, 8, 32], strides = [1, 1, 1]} : vector<2x8x128xf32> to vector<2x8x32xf32>
    %99 = vector.extract_strided_slice %96 {offsets = [0, 0, 64], sizes = [2, 8, 32], strides = [1, 1, 1]} : vector<2x8x128xf32> to vector<2x8x32xf32>
    %100 = vector.extract_strided_slice %96 {offsets = [0, 0, 96], sizes = [2, 8, 32], strides = [1, 1, 1]} : vector<2x8x128xf32> to vector<2x8x32xf32>
    %101 = vector.shape_cast %97 : vector<2x8x32xf32> to vector<1x2x8x32xf32>
    %102 = vector.shape_cast %98 : vector<2x8x32xf32> to vector<1x2x8x32xf32>
    %103 = vector.shape_cast %99 : vector<2x8x32xf32> to vector<1x2x8x32xf32>
    %104 = vector.shape_cast %100 : vector<2x8x32xf32> to vector<1x2x8x32xf32>
    %105 = tpu.concatenate %101, %102, %103, %104 in 0 : vector<1x2x8x32xf32>, vector<1x2x8x32xf32>, vector<1x2x8x32xf32>, vector<1x2x8x32xf32> -> vector<4x2x8x32xf32>
    %106 = vector.shape_cast %105 : vector<4x2x8x32xf32> to vector<8x8x32xf32>
    "tpu.trace_start"() <{level = 10 : i32, message = "gqc,gkc->gqk"}> : () -> ()
    %cst_31 = arith.constant dense<0.000000e+00> : vector<8x16x8xf32>
    %107 = tpu.matmul %84, %95, %cst_31 {dimension_numbers = #tpu.dot_dimension_numbers<[2], [2], [1], [1], [0, 0, 0, 1, 1, 1], [0], [0]>} : vector<8x16x32xf32>, vector<8x8x32xf32>, vector<8x16x8xf32> -> vector<8x16x8xf32>
    "tpu.trace_stop"() : () -> ()
    %cst_32 = arith.constant dense<0xFF800000> : vector<8x16xf32>
    %108 = vector.multi_reduction <maximumf>, %107, %cst_32 [2] : vector<8x16x8xf32> to vector<8x16xf32>
    %109 = vector.shape_cast %108 : vector<8x16xf32> to vector<8x16x1xf32>
    %110 = vector.broadcast %109 : vector<8x16x1xf32> to vector<8x16x8xf32>
    %111 = arith.subf %107, %110 : vector<8x16x8xf32>
    %112 = math.exp %111 : vector<8x16x8xf32>
    %cst_33 = arith.constant dense<0.000000e+00> : vector<8x16xf32>
    %113 = vector.multi_reduction <add>, %112, %cst_33 [2] : vector<8x16x8xf32> to vector<8x16xf32>
    %114 = vector.shape_cast %113 : vector<8x16xf32> to vector<8x16x1xf32>
    %115 = vector.broadcast %114 : vector<8x16x1xf32> to vector<8x16x8xf32>
    %116 = arith.divf %112, %115 : vector<8x16x8xf32>
    "tpu.trace_start"() <{level = 10 : i32, message = "gqk,gkc->gqc"}> : () -> ()
    %cst_34 = arith.constant dense<0.000000e+00> : vector<8x16x32xf32>
    %117 = tpu.matmul %116, %106, %cst_34 {dimension_numbers = #tpu.dot_dimension_numbers<[2], [1], [1], [2], [0, 0, 0, 1, 1, 2], [0], [0]>} : vector<8x16x8xf32>, vector<8x8x32xf32>, vector<8x16x32xf32> -> vector<8x16x32xf32>
    "tpu.trace_stop"() : () -> ()
    %118 = vector.shape_cast %117 : vector<8x16x32xf32> to vector<4x2x16x32xf32>
    %119 = vector.extract_strided_slice %118 {offsets = [0, 0, 0, 0], sizes = [1, 2, 16, 32], strides = [1, 1, 1, 1]} : vector<4x2x16x32xf32> to vector<1x2x16x32xf32>
    %120 = vector.shape_cast %119 : vector<1x2x16x32xf32> to vector<2x16x32xf32>
    %121 = vector.extract_strided_slice %118 {offsets = [1, 0, 0, 0], sizes = [1, 2, 16, 32], strides = [1, 1, 1, 1]} : vector<4x2x16x32xf32> to vector<1x2x16x32xf32>
    %122 = vector.shape_cast %121 : vector<1x2x16x32xf32> to vector<2x16x32xf32>
    %123 = vector.extract_strided_slice %118 {offsets = [2, 0, 0, 0], sizes = [1, 2, 16, 32], strides = [1, 1, 1, 1]} : vector<4x2x16x32xf32> to vector<1x2x16x32xf32>
    %124 = vector.shape_cast %123 : vector<1x2x16x32xf32> to vector<2x16x32xf32>
    %125 = vector.extract_strided_slice %118 {offsets = [3, 0, 0, 0], sizes = [1, 2, 16, 32], strides = [1, 1, 1, 1]} : vector<4x2x16x32xf32> to vector<1x2x16x32xf32>
    %126 = vector.shape_cast %125 : vector<1x2x16x32xf32> to vector<2x16x32xf32>
    %127 = tpu.concatenate %120, %122, %124, %126 in 2 : vector<2x16x32xf32>, vector<2x16x32xf32>, vector<2x16x32xf32>, vector<2x16x32xf32> -> vector<2x16x128xf32>
    %128 = vector.shape_cast %127 : vector<2x16x128xf32> to vector<32x128xf32>
    %c0_35 = arith.constant 0 : index
    %c0_36 = arith.constant 0 : index
    %c0_37 = arith.constant 0 : index
    %129 = vector.load %arg7[%c0_35, %c0_36, %c0_37] : memref<2x128x32xf32, #tpu.memory_space<vmem>>, vector<1x128x32xf32>
    %130 = vector.shape_cast %129 : vector<1x128x32xf32> to vector<128x32xf32>
    %cst_38 = arith.constant dense<0.000000e+00> : vector<32x32xf32>
    %131 = tpu.matmul %128, %130, %cst_38 {dimension_numbers = #tpu.dot_dimension_numbers<[1], [0], [0], [1], [0, 0, 1, 1], [], []>} : vector<32x128xf32>, vector<128x32xf32>, vector<32x32xf32> -> vector<32x32xf32>
    %c0_39 = arith.constant 0 : index
    %c0_40 = arith.constant 0 : index
    %132 = vector.load %arg8[%c0_39, %c0_40] : memref<2x32xf32, #tpu.memory_space<vmem>>, vector<1x32xf32>
    %133 = vector.shape_cast %132 : vector<1x32xf32> to vector<32xf32>
    %134 = vector.shape_cast %133 : vector<32xf32> to vector<1x32xf32>
    %135 = vector.broadcast %134 : vector<1x32xf32> to vector<32x32xf32>
    %136 = arith.addf %131, %135 : vector<32x32xf32>
    %137 = vector.shape_cast %136 : vector<32x32xf32> to vector<2x16x32xf32>
    %c1_41 = arith.constant 1 : index
    %c0_42 = arith.constant 0 : index
    %c0_43 = arith.constant 0 : index
    %138 = vector.load %arg3[%c1_41, %c0_42, %c0_43] : memref<2x32x128xf32, #tpu.memory_space<vmem>>, vector<1x32x128xf32>
    %139 = vector.shape_cast %138 : vector<1x32x128xf32> to vector<32x128xf32>
    %cst_44 = arith.constant dense<0.000000e+00> : vector<16x128xf32>
    %140 = tpu.matmul %55, %139, %cst_44 {dimension_numbers = #tpu.dot_dimension_numbers<[1], [0], [0], [1], [0, 0, 1, 1], [], []>} : vector<16x32xf32>, vector<32x128xf32>, vector<16x128xf32> -> vector<16x128xf32>
    %c1_45 = arith.constant 1 : index
    %c0_46 = arith.constant 0 : index
    %141 = vector.load %arg4[%c1_45, %c0_46] : memref<2x128xf32, #tpu.memory_space<vmem>>, vector<1x128xf32>
    %142 = vector.shape_cast %141 : vector<1x128xf32> to vector<128xf32>
    %143 = vector.shape_cast %142 : vector<128xf32> to vector<1x128xf32>
    %144 = vector.broadcast %143 : vector<1x128xf32> to vector<16x128xf32>
    %145 = arith.addf %140, %144 : vector<16x128xf32>
    %c1_47 = arith.constant 1 : index
    %c0_48 = arith.constant 0 : index
    %c0_49 = arith.constant 0 : index
    %146 = vector.load %arg5[%c1_47, %c0_48, %c0_49] : memref<2x32x256xf32, #tpu.memory_space<vmem>>, vector<1x32x256xf32>
    %147 = vector.shape_cast %146 : vector<1x32x256xf32> to vector<32x256xf32>
    %cst_50 = arith.constant dense<0.000000e+00> : vector<32x256xf32>
    %148 = tpu.matmul %29, %147, %cst_50 {dimension_numbers = #tpu.dot_dimension_numbers<[1], [0], [0], [1], [0, 0, 1, 1], [], []>} : vector<32x32xf32>, vector<32x256xf32>, vector<32x256xf32> -> vector<32x256xf32>
    %c1_51 = arith.constant 1 : index
    %c0_52 = arith.constant 0 : index
    %149 = vector.load %arg6[%c1_51, %c0_52] : memref<2x256xf32, #tpu.memory_space<vmem>>, vector<1x256xf32>
    %150 = vector.shape_cast %149 : vector<1x256xf32> to vector<256xf32>
    %151 = vector.shape_cast %150 : vector<256xf32> to vector<1x256xf32>
    %152 = vector.broadcast %151 : vector<1x256xf32> to vector<32x256xf32>
    %153 = arith.addf %148, %152 : vector<32x256xf32>
    %154 = vector.extract_strided_slice %153 {offsets = [0, 0], sizes = [32, 128], strides = [1, 1]} : vector<32x256xf32> to vector<32x128xf32>
    %155 = vector.extract_strided_slice %153 {offsets = [0, 128], sizes = [32, 128], strides = [1, 1]} : vector<32x256xf32> to vector<32x128xf32>
    %156 = vector.shape_cast %145 : vector<16x128xf32> to vector<2x8x128xf32>
    %157 = vector.extract_strided_slice %156 {offsets = [0, 0, 0], sizes = [2, 8, 32], strides = [1, 1, 1]} : vector<2x8x128xf32> to vector<2x8x32xf32>
    %158 = vector.extract_strided_slice %156 {offsets = [0, 0, 32], sizes = [2, 8, 32], strides = [1, 1, 1]} : vector<2x8x128xf32> to vector<2x8x32xf32>
    %159 = vector.extract_strided_slice %156 {offsets = [0, 0, 64], sizes = [2, 8, 32], strides = [1, 1, 1]} : vector<2x8x128xf32> to vector<2x8x32xf32>
    %160 = vector.extract_strided_slice %156 {offsets = [0, 0, 96], sizes = [2, 8, 32], strides = [1, 1, 1]} : vector<2x8x128xf32> to vector<2x8x32xf32>
    %161 = vector.shape_cast %157 : vector<2x8x32xf32> to vector<1x2x8x32xf32>
    %162 = vector.shape_cast %158 : vector<2x8x32xf32> to vector<1x2x8x32xf32>
    %163 = vector.shape_cast %159 : vector<2x8x32xf32> to vector<1x2x8x32xf32>
    %164 = vector.shape_cast %160 : vector<2x8x32xf32> to vector<1x2x8x32xf32>
    %165 = tpu.concatenate %161, %162, %163, %164 in 0 : vector<1x2x8x32xf32>, vector<1x2x8x32xf32>, vector<1x2x8x32xf32>, vector<1x2x8x32xf32> -> vector<4x2x8x32xf32>
    %166 = vector.shape_cast %165 : vector<4x2x8x32xf32> to vector<8x8x32xf32>
    %167 = vector.shape_cast %154 : vector<32x128xf32> to vector<2x16x128xf32>
    %168 = vector.extract_strided_slice %167 {offsets = [0, 0, 0], sizes = [2, 16, 32], strides = [1, 1, 1]} : vector<2x16x128xf32> to vector<2x16x32xf32>
    %169 = vector.extract_strided_slice %167 {offsets = [0, 0, 32], sizes = [2, 16, 32], strides = [1, 1, 1]} : vector<2x16x128xf32> to vector<2x16x32xf32>
    %170 = vector.extract_strided_slice %167 {offsets = [0, 0, 64], sizes = [2, 16, 32], strides = [1, 1, 1]} : vector<2x16x128xf32> to vector<2x16x32xf32>
    %171 = vector.extract_strided_slice %167 {offsets = [0, 0, 96], sizes = [2, 16, 32], strides = [1, 1, 1]} : vector<2x16x128xf32> to vector<2x16x32xf32>
    %172 = vector.shape_cast %168 : vector<2x16x32xf32> to vector<1x2x16x32xf32>
    %173 = vector.shape_cast %169 : vector<2x16x32xf32> to vector<1x2x16x32xf32>
    %174 = vector.shape_cast %170 : vector<2x16x32xf32> to vector<1x2x16x32xf32>
    %175 = vector.shape_cast %171 : vector<2x16x32xf32> to vector<1x2x16x32xf32>
    %176 = tpu.concatenate %172, %173, %174, %175 in 0 : vector<1x2x16x32xf32>, vector<1x2x16x32xf32>, vector<1x2x16x32xf32>, vector<1x2x16x32xf32> -> vector<4x2x16x32xf32>
    %177 = vector.shape_cast %176 : vector<4x2x16x32xf32> to vector<8x16x32xf32>
    %178 = vector.shape_cast %155 : vector<32x128xf32> to vector<2x16x128xf32>
    %179 = vector.extract_strided_slice %178 {offsets = [0, 0, 0], sizes = [2, 16, 32], strides = [1, 1, 1]} : vector<2x16x128xf32> to vector<2x16x32xf32>
    %180 = vector.extract_strided_slice %178 {offsets = [0, 0, 32], sizes = [2, 16, 32], strides = [1, 1, 1]} : vector<2x16x128xf32> to vector<2x16x32xf32>
    %181 = vector.extract_strided_slice %178 {offsets = [0, 0, 64], sizes = [2, 16, 32], strides = [1, 1, 1]} : vector<2x16x128xf32> to vector<2x16x32xf32>
    %182 = vector.extract_strided_slice %178 {offsets = [0, 0, 96], sizes = [2, 16, 32], strides = [1, 1, 1]} : vector<2x16x128xf32> to vector<2x16x32xf32>
    %183 = vector.shape_cast %179 : vector<2x16x32xf32> to vector<1x2x16x32xf32>
    %184 = vector.shape_cast %180 : vector<2x16x32xf32> to vector<1x2x16x32xf32>
    %185 = vector.shape_cast %181 : vector<2x16x32xf32> to vector<1x2x16x32xf32>
    %186 = vector.shape_cast %182 : vector<2x16x32xf32> to vector<1x2x16x32xf32>
    %187 = tpu.concatenate %183, %184, %185, %186 in 0 : vector<1x2x16x32xf32>, vector<1x2x16x32xf32>, vector<1x2x16x32xf32>, vector<1x2x16x32xf32> -> vector<4x2x16x32xf32>
    %188 = vector.shape_cast %187 : vector<4x2x16x32xf32> to vector<8x16x32xf32>
    "tpu.trace_start"() <{level = 10 : i32, message = "gqc,gkc->gqk"}> : () -> ()
    %cst_53 = arith.constant dense<0.000000e+00> : vector<8x8x16xf32>
    %189 = tpu.matmul %166, %177, %cst_53 {dimension_numbers = #tpu.dot_dimension_numbers<[2], [2], [1], [1], [0, 0, 0, 1, 1, 1], [0], [0]>} : vector<8x8x32xf32>, vector<8x16x32xf32>, vector<8x8x16xf32> -> vector<8x8x16xf32>
    "tpu.trace_stop"() : () -> ()
    %cst_54 = arith.constant dense<0xFF800000> : vector<8x8xf32>
    %190 = vector.multi_reduction <maximumf>, %189, %cst_54 [2] : vector<8x8x16xf32> to vector<8x8xf32>
    %191 = vector.shape_cast %190 : vector<8x8xf32> to vector<8x8x1xf32>
    %192 = vector.broadcast %191 : vector<8x8x1xf32> to vector<8x8x16xf32>
    %193 = arith.subf %189, %192 : vector<8x8x16xf32>
    %194 = math.exp %193 : vector<8x8x16xf32>
    %cst_55 = arith.constant dense<0.000000e+00> : vector<8x8xf32>
    %195 = vector.multi_reduction <add>, %194, %cst_55 [2] : vector<8x8x16xf32> to vector<8x8xf32>
    %196 = vector.shape_cast %195 : vector<8x8xf32> to vector<8x8x1xf32>
    %197 = vector.broadcast %196 : vector<8x8x1xf32> to vector<8x8x16xf32>
    %198 = arith.divf %194, %197 : vector<8x8x16xf32>
    "tpu.trace_start"() <{level = 10 : i32, message = "gqk,gkc->gqc"}> : () -> ()
    %cst_56 = arith.constant dense<0.000000e+00> : vector<8x8x32xf32>
    %199 = tpu.matmul %198, %188, %cst_56 {dimension_numbers = #tpu.dot_dimension_numbers<[2], [1], [1], [2], [0, 0, 0, 1, 1, 2], [0], [0]>} : vector<8x8x16xf32>, vector<8x16x32xf32>, vector<8x8x32xf32> -> vector<8x8x32xf32>
    "tpu.trace_stop"() : () -> ()
    %200 = vector.shape_cast %199 : vector<8x8x32xf32> to vector<4x2x8x32xf32>
    %201 = vector.extract_strided_slice %200 {offsets = [0, 0, 0, 0], sizes = [1, 2, 8, 32], strides = [1, 1, 1, 1]} : vector<4x2x8x32xf32> to vector<1x2x8x32xf32>
    %202 = vector.shape_cast %201 : vector<1x2x8x32xf32> to vector<2x8x32xf32>
    %203 = vector.extract_strided_slice %200 {offsets = [1, 0, 0, 0], sizes = [1, 2, 8, 32], strides = [1, 1, 1, 1]} : vector<4x2x8x32xf32> to vector<1x2x8x32xf32>
    %204 = vector.shape_cast %203 : vector<1x2x8x32xf32> to vector<2x8x32xf32>
    %205 = vector.extract_strided_slice %200 {offsets = [2, 0, 0, 0], sizes = [1, 2, 8, 32], strides = [1, 1, 1, 1]} : vector<4x2x8x32xf32> to vector<1x2x8x32xf32>
    %206 = vector.shape_cast %205 : vector<1x2x8x32xf32> to vector<2x8x32xf32>
    %207 = vector.extract_strided_slice %200 {offsets = [3, 0, 0, 0], sizes = [1, 2, 8, 32], strides = [1, 1, 1, 1]} : vector<4x2x8x32xf32> to vector<1x2x8x32xf32>
    %208 = vector.shape_cast %207 : vector<1x2x8x32xf32> to vector<2x8x32xf32>
    %209 = tpu.concatenate %202, %204, %206, %208 in 2 : vector<2x8x32xf32>, vector<2x8x32xf32>, vector<2x8x32xf32>, vector<2x8x32xf32> -> vector<2x8x128xf32>
    %210 = vector.shape_cast %209 : vector<2x8x128xf32> to vector<16x128xf32>
    %c1_57 = arith.constant 1 : index
    %c0_58 = arith.constant 0 : index
    %c0_59 = arith.constant 0 : index
    %211 = vector.load %arg7[%c1_57, %c0_58, %c0_59] : memref<2x128x32xf32, #tpu.memory_space<vmem>>, vector<1x128x32xf32>
    %212 = vector.shape_cast %211 : vector<1x128x32xf32> to vector<128x32xf32>
    %cst_60 = arith.constant dense<0.000000e+00> : vector<16x32xf32>
    %213 = tpu.matmul %210, %212, %cst_60 {dimension_numbers = #tpu.dot_dimension_numbers<[1], [0], [0], [1], [0, 0, 1, 1], [], []>} : vector<16x128xf32>, vector<128x32xf32>, vector<16x32xf32> -> vector<16x32xf32>
    %c1_61 = arith.constant 1 : index
    %c0_62 = arith.constant 0 : index
    %214 = vector.load %arg8[%c1_61, %c0_62] : memref<2x32xf32, #tpu.memory_space<vmem>>, vector<1x32xf32>
    %215 = vector.shape_cast %214 : vector<1x32xf32> to vector<32xf32>
    %216 = vector.shape_cast %215 : vector<32xf32> to vector<1x32xf32>
    %217 = vector.broadcast %216 : vector<1x32xf32> to vector<16x32xf32>
    %218 = arith.addf %213, %217 : vector<16x32xf32>
    %219 = vector.shape_cast %218 : vector<16x32xf32> to vector<2x8x32xf32>
    %c0_63 = arith.constant 0 : index
    %c0_64 = arith.constant 0 : index
    %220 = vector.load %arg10[%c0_63, %c0_64] : memref<2x32xf32, #tpu.memory_space<vmem>>, vector<1x32xf32>
    %221 = vector.shape_cast %220 : vector<1x32xf32> to vector<32xf32>
    %222 = vector.shape_cast %221 : vector<32xf32> to vector<1x1x32xf32>
    %223 = vector.broadcast %222 : vector<1x1x32xf32> to vector<2x16x32xf32>
    %224 = arith.mulf %223, %137 : vector<2x16x32xf32>
    %225 = arith.addf %0, %224 : vector<2x16x32xf32>
    %c0_65 = arith.constant 0 : index
    %c0_66 = arith.constant 0 : index
    %c0_67 = arith.constant 0 : index
    %226 = vector.load %arg11[%c0_65, %c0_66, %c0_67] : memref<2x16x32xf32, #tpu.memory_space<vmem>>, vector<2x16x32xf32>
    tpu.vector_store %arg11[%c0_65, %c0_66, %c0_67], %225 {strides = array<i32>} : memref<2x16x32xf32, #tpu.memory_space<vmem>>, vector<2x16x32xf32>,
    %c1_68 = arith.constant 1 : index
    %c0_69 = arith.constant 0 : index
    %227 = vector.load %arg10[%c1_68, %c0_69] : memref<2x32xf32, #tpu.memory_space<vmem>>, vector<1x32xf32>
    %228 = vector.shape_cast %227 : vector<1x32xf32> to vector<32xf32>
    %229 = vector.shape_cast %228 : vector<32xf32> to vector<1x1x32xf32>
    %230 = vector.broadcast %229 : vector<1x1x32xf32> to vector<2x8x32xf32>
    %231 = arith.mulf %230, %219 : vector<2x8x32xf32>
    %232 = arith.addf %1, %231 : vector<2x8x32xf32>
    %c0_70 = arith.constant 0 : index
    %c0_71 = arith.constant 0 : index
    %c0_72 = arith.constant 0 : index
    %233 = vector.load %arg12[%c0_70, %c0_71, %c0_72] : memref<2x8x32xf32, #tpu.memory_space<vmem>>, vector<2x8x32xf32>
    tpu.vector_store %arg12[%c0_70, %c0_71, %c0_72], %232 {strides = array<i32>} : memref<2x8x32xf32, #tpu.memory_space<vmem>>, vector<2x8x32xf32>,
    return
  }
  func.func @transform_0(%arg0: i32) -> (i32, i32, i32) {
    %c0_i32 = arith.constant 0 : i32
    %c0_i32_0 = arith.constant 0 : i32
    %c0_i32_1 = arith.constant 0 : i32
    %c0_i32_2 = arith.constant 0 : i32
    return %c0_i32, %c0_i32_0, %c0_i32_1 : i32, i32, i32
  }
  func.func @transform_1(%arg0: i32) -> (i32, i32, i32) {
    %c0_i32 = arith.constant 0 : i32
    %c0_i32_0 = arith.constant 0 : i32
    %c0_i32_1 = arith.constant 0 : i32
    %c0_i32_2 = arith.constant 0 : i32
    return %c0_i32, %c0_i32_0, %c0_i32_1 : i32, i32, i32
  }
  func.func @transform_2(%arg0: i32) -> (i32, i32, i32) {
    %c0_i32 = arith.constant 0 : i32
    %c0_i32_0 = arith.constant 0 : i32
    %c0_i32_1 = arith.constant 0 : i32
    %c0_i32_2 = arith.constant 0 : i32
    return %c0_i32, %c0_i32_0, %c0_i32_1 : i32, i32, i32
  }
  func.func @transform_3(%arg0: i32) -> (i32, i32) {
    %c0_i32 = arith.constant 0 : i32
    %c0_i32_0 = arith.constant 0 : i32
    %c0_i32_1 = arith.constant 0 : i32
    return %c0_i32, %c0_i32_0 : i32, i32
  }
  func.func @transform_4(%arg0: i32) -> (i32, i32, i32) {
    %c0_i32 = arith.constant 0 : i32
    %c0_i32_0 = arith.constant 0 : i32
    %c0_i32_1 = arith.constant 0 : i32
    %c0_i32_2 = arith.constant 0 : i32
    return %c0_i32, %c0_i32_0, %c0_i32_1 : i32, i32, i32
  }
  func.func @transform_5(%arg0: i32) -> (i32, i32) {
    %c0_i32 = arith.constant 0 : i32
    %c0_i32_0 = arith.constant 0 : i32
    %c0_i32_1 = arith.constant 0 : i32
    return %c0_i32, %c0_i32_0 : i32, i32
  }
  func.func @transform_6(%arg0: i32) -> (i32, i32, i32) {
    %c0_i32 = arith.constant 0 : i32
    %c0_i32_0 = arith.constant 0 : i32
    %c0_i32_1 = arith.constant 0 : i32
    %c0_i32_2 = arith.constant 0 : i32
    return %c0_i32, %c0_i32_0, %c0_i32_1 : i32, i32, i32
  }
  func.func @transform_7(%arg0: i32) -> (i32, i32) {
    %c0_i32 = arith.constant 0 : i32
    %c0_i32_0 = arith.constant 0 : i32
    %c0_i32_1 = arith.constant 0 : i32
    return %c0_i32, %c0_i32_0 : i32, i32
  }
  func.func @transform_8(%arg0: i32) -> (i32, i32) {
    %c0_i32 = arith.constant 0 : i32
    %c0_i32_0 = arith.constant 0 : i32
    %c0_i32_1 = arith.constant 0 : i32
    return %c0_i32, %c0_i32_0 : i32, i32
  }
  func.func @transform_9(%arg0: i32) -> (i32, i32) {
    %c0_i32 = arith.constant 0 : i32
    %c0_i32_0 = arith.constant 0 : i32
    %c0_i32_1 = arith.constant 0 : i32
    return %c0_i32, %c0_i32_0 : i32, i32
  }
  func.func @transform_10(%arg0: i32) -> (i32, i32, i32) {
    %c0_i32 = arith.constant 0 : i32
    %c0_i32_0 = arith.constant 0 : i32
    %c0_i32_1 = arith.constant 0 : i32
    %c0_i32_2 = arith.constant 0 : i32
    return %c0_i32, %c0_i32_0, %c0_i32_1 : i32, i32, i32
  }
  func.func @transform_11(%arg0: i32) -> (i32, i32, i32) {
    %c0_i32 = arith.constant 0 : i32
    %c0_i32_0 = arith.constant 0 : i32
    %c0_i32_1 = arith.constant 0 : i32
    %c0_i32_2 = arith.constant 0 : i32
    return %c0_i32, %c0_i32_0, %c0_i32_1 : i32, i32, i32
  }
}

</mosaic_0001>

<llo_original>
// kernel: tpu_custom_call.1
$region0: #{tpu_custom_call.1}
  #allocation0 [shape = 'u32[]', space=smem, size = 0x4, offset = 0x4, fixed_abs, tag = 'smem constant byte address 0x4 - core index']
  #allocation1 [shape = 'u32[144,128]{1,0:T(1,128)}', space=vmem, size = 0x12000, scoped, tag = 'internal scratch']
  %s0 = inlined_call_operand.vmem [shape: f32[2,16,32], index: 0, kind: input, shape index: {}]
  %s1 = inlined_call_operand.vmem [shape: f32[2,8,32], index: 1, kind: input, shape index: {}]
  %s2 = inlined_call_operand.vmem [shape: f32[2,32,128], index: 2, kind: input, shape index: {}]
  %s3 = inlined_call_operand.vmem [shape: f32[2,128], index: 3, kind: input, shape index: {}]
  %s4 = inlined_call_operand.vmem [shape: f32[2,32,256], index: 4, kind: input, shape index: {}]
  %s5 = inlined_call_operand.vmem [shape: f32[2,256], index: 5, kind: input, shape index: {}]
  %s6 = inlined_call_operand.vmem [shape: f32[2,128,32], index: 6, kind: input, shape index: {}]
  %s7 = inlined_call_operand.vmem [shape: f32[2,32], index: 7, kind: input, shape index: {}]
  %s8 = inlined_call_operand.vmem [shape: f32[4,32], index: 8, kind: input, shape index: {}]
  %s9 = inlined_call_operand.vmem [shape: f32[2,32], index: 9, kind: input, shape index: {}]
  %s10 = inlined_call_operand.hbm [shape: f32[2,16,32], index: 10, kind: output, shape index: {0}]
  %s11 = inlined_call_operand.hbm [shape: f32[2,8,32], index: 11, kind: output, shape index: {1}]
  %12 = xla_tuple %s10, %s11
  %s13 = sld [smem:[#allocation0]]
  $region58: #{tpu_custom_call.1} parent=0
    _
  %s15 = ssub.s32 1, %s13
  %s16 = scalar_select 0, %s15, %s13
  $region1: #{tpu_custom_call.1} parent=0
    #allocation2 [shape = 'u8[16384]{0}', space=vmem, size = 0x4000, scoped, tag = 'output window, operand 0, single buffered']
    #allocation3 [shape = 's32[1]{0}', space=sflag, size = 0x4, scoped, tag = 'scoped memory for tpu_custom_call.1']
    #allocation4 [shape = 'u8[8192]{0}', space=vmem, size = 0x2000, scoped, tag = 'output window, operand 1, single buffered']
    #allocation5 [shape = 's32[1]{0}', space=sflag, size = 0x4, scoped, tag = 'scoped memory for tpu_custom_call.1']
    %17 = vsyncpa [#allocation3], 0
    %18 = vsyncpa [#allocation5], 0
    // Predicated region
    $region2: #{tpu_custom_call.1} parent=1 // pred_check
      _
    $region3: #{tpu_custom_call.1} parent=1 // pred_check_branch
      %20 = sbr.rel (0) target = $region5
    $region4: #{tpu_custom_call.1} parent=1 // pred_region
      _
    $region5: #{tpu_custom_call.1} parent=1 // pred_fallthru
      _
    // Predicated region
    $region6: #{tpu_custom_call.1} parent=1 // pred_check
      _
    $region7: #{tpu_custom_call.1} parent=1 // pred_check_branch
      %22 = sbr.rel (0) target = $region9
    $region8: #{tpu_custom_call.1} parent=1 // pred_region
      _
    $region9: #{tpu_custom_call.1} parent=1 // pred_fallthru
      _
    // Predicated region
    $region10: #{tpu_custom_call.1} parent=1 // pred_check
      _
    $region11: #{tpu_custom_call.1} parent=1 // pred_check_branch
      %24 = sbr.rel (0) target = $region13
    $region12: #{tpu_custom_call.1} parent=1 // pred_region
      _
    $region13: #{tpu_custom_call.1} parent=1 // pred_fallthru
      _
    // Predicated region
    $region14: #{tpu_custom_call.1} parent=1 // pred_check
      _
    $region15: #{tpu_custom_call.1} parent=1 // pred_check_branch
      %26 = sbr.rel (0) target = $region17
    $region16: #{tpu_custom_call.1} parent=1 // pred_region
      _
    $region17: #{tpu_custom_call.1} parent=1 // pred_fallthru
      _
    // Predicated region
    $region18: #{tpu_custom_call.1} parent=1 // pred_check
      _
    $region19: #{tpu_custom_call.1} parent=1 // pred_check_branch
      %28 = sbr.rel (0) target = $region21
    $region20: #{tpu_custom_call.1} parent=1 // pred_region
      _
    $region21: #{tpu_custom_call.1} parent=1 // pred_fallthru
      _
    // Predicated region
    $region22: #{tpu_custom_call.1} parent=1 // pred_check
      _
    $region23: #{tpu_custom_call.1} parent=1 // pred_check_branch
      %30 = sbr.rel (0) target = $region25
    $region24: #{tpu_custom_call.1} parent=1 // pred_region
      _
    $region25: #{tpu_custom_call.1} parent=1 // pred_fallthru
      _
    // Predicated region
    $region26: #{tpu_custom_call.1} parent=1 // pred_check
      _
    $region27: #{tpu_custom_call.1} parent=1 // pred_check_branch
      %32 = sbr.rel (0) target = $region29
    $region28: #{tpu_custom_call.1} parent=1 // pred_region
      _
    $region29: #{tpu_custom_call.1} parent=1 // pred_fallthru
      _
    // Predicated region
    $region30: #{tpu_custom_call.1} parent=1 // pred_check
      _
    $region31: #{tpu_custom_call.1} parent=1 // pred_check_branch
      %34 = sbr.rel (0) target = $region33
    $region32: #{tpu_custom_call.1} parent=1 // pred_region
      _
    $region33: #{tpu_custom_call.1} parent=1 // pred_fallthru
      _
    // Predicated region
    $region34: #{tpu_custom_call.1} parent=1 // pred_check
      _
    $region35: #{tpu_custom_call.1} parent=1 // pred_check_branch
      %36 = sbr.rel (0) target = $region37
    $region36: #{tpu_custom_call.1} parent=1 // pred_region
      _
    $region37: #{tpu_custom_call.1} parent=1 // pred_fallthru
      _
    // Predicated region
    $region38: #{tpu_custom_call.1} parent=1 // pred_check
      _
    $region39: #{tpu_custom_call.1} parent=1 // pred_check_branch
      %38 = sbr.rel (0) target = $region41
    $region40: #{tpu_custom_call.1} parent=1 // pred_region
      _
    $region41: #{tpu_custom_call.1} parent=1 // pred_fallthru
      _
    %v39 = vld [vmem:[%s0] sm:$0xff]
    %v40 = vld [vmem:[%s0 + $0x8] sm:$0xff]
    %v41 = vld [vmem:[%s0 + $0x10] sm:$0xff]
    %v42 = vld [vmem:[%s0 + $0x18] sm:$0xff]
    %v43 = vld [vmem:[%s1] sm:$0xff]
    %v44 = vld [vmem:[%s1 + $0x8] sm:$0xff]
    %v45 = vld [vmem:[%s8] sm:$0x1]
    %v46 = vld [vmem:[%s8 + $0x1] sm:$0x1]
    %vm47 = vcmask 261120
    %v48 = vsel %vm47, %v39, 0.0
    %49 = vadd.xlane.f32.xlu0 %v48
    %v50 = vpop.xlane.xlu0 %49
    %v51 = vsel %vm47, %v40, 0.0
    %52 = vadd.xlane.f32.xlu0 %v51
    %v53 = vpop.xlane.xlu0 %52
    %v54 = vsel %vm47, %v41, 0.0
    %55 = vadd.xlane.f32.xlu0 %v54
    %v56 = vpop.xlane.xlu0 %55
    %v57 = vsel %vm47, %v42, 0.0
    %58 = vadd.xlane.f32.xlu0 %v57
    %v59 = vpop.xlane.xlu0 %58
    %v60 = vmul.f32 %v50, 0.03125
    %v61 = vmul.f32 %v53, 0.03125
    %v62 = vmul.f32 %v56, 0.03125
    %v63 = vmul.f32 %v59, 0.03125
    %v64 = vsub.f32 %v39, %v60
    %v65 = vsub.f32 %v40, %v61
    %v66 = vsub.f32 %v41, %v62
    %v67 = vsub.f32 %v42, %v63
    %v68 = vmul.f32 %v64, %v64
    %v69 = vmul.f32 %v65, %v65
    %v70 = vmul.f32 %v66, %v66
    %v71 = vmul.f32 %v67, %v67
    %v72 = vsel %vm47, %v68, 0.0
    %73 = vadd.xlane.f32.xlu0 %v72
    %v74 = vpop.xlane.xlu0 %73
    %v75 = vsel %vm47, %v69, 0.0
    %76 = vadd.xlane.f32.xlu0 %v75
    %v77 = vpop.xlane.xlu0 %76
    %v78 = vsel %vm47, %v70, 0.0
    %79 = vadd.xlane.f32.xlu0 %v78
    %v80 = vpop.xlane.xlu0 %79
    %v81 = vsel %vm47, %v71, 0.0
    %82 = vadd.xlane.f32.xlu0 %v81
    %v83 = vpop.xlane.xlu0 %82
    %v84 = vmul.f32 %v74, 0.03125
    %v85 = vmul.f32 %v77, 0.03125
    %v86 = vmul.f32 %v80, 0.03125
    %v87 = vmul.f32 %v83, 0.03125
    %v88 = vadd.f32 %v84, 1e-05
    %v89 = vadd.f32 %v85, 1e-05
    %v90 = vadd.f32 %v86, 1e-05
    %v91 = vadd.f32 %v87, 1e-05
    %v92 = vrsqrt.pop %v88
    %v93 = vrsqrt.pop %v89
    %v94 = vrsqrt.pop %v90
    %v95 = vrsqrt.pop %v91
    %v96 = vmul.f32 %v64, %v92
    %v97 = vmul.f32 %v65, %v93
    %v98 = vmul.f32 %v66, %v94
    %v99 = vmul.f32 %v67, %v95
    %v100 = vlaneseq
    %v101 = vshrl.u32 %v100, 7
    %v102 = vsub.s32 0, %v101
    %v103 = vrot.slane %v45, %v102
    %v104 = vmul.f32 %v96, %v103
    %v105 = vmul.f32 %v97, %v103
    %v106 = vmul.f32 %v98, %v103
    %v107 = vmul.f32 %v99, %v103
    %v108 = vlaneseq
    %v109 = vshrl.u32 %v108, 7
    %v110 = vsub.s32 0, %v109
    %v111 = vrot.slane %v46, %v110
    %v112 = vadd.f32 %v104, %v111
    %v113 = vadd.f32 %v105, %v111
    %v114 = vadd.f32 %v106, %v111
    %v115 = vadd.f32 %v107, %v111
    %v116 = vld [vmem:[%s8 + $0x2] sm:$0x1]
    %v117 = vld [vmem:[%s8 + $0x3] sm:$0x1]
    %v118 = vsel %vm47, %v43, 0.0
    %119 = vadd.xlane.f32.xlu0 %v118
    %v120 = vpop.xlane.xlu0 %119
    %v121 = vsel %vm47, %v44, 0.0
    %122 = vadd.xlane.f32.xlu0 %v121
    %v123 = vpop.xlane.xlu0 %122
    %v124 = vmul.f32 %v120, 0.03125
    %v125 = vmul.f32 %v123, 0.03125
    %v126 = vsub.f32 %v43, %v124
    %v127 = vsub.f32 %v44, %v125
    %v128 = vmul.f32 %v126, %v126
    %v129 = vmul.f32 %v127, %v127
    %v130 = vsel %vm47, %v128, 0.0
    %131 = vadd.xlane.f32.xlu0 %v130
    %v132 = vpop.xlane.xlu0 %131
    %v133 = vsel %vm47, %v129, 0.0
    %134 = vadd.xlane.f32.xlu0 %v133
    %v135 = vpop.xlane.xlu0 %134
    %v136 = vmul.f32 %v132, 0.03125
    %v137 = vmul.f32 %v135, 0.03125
    %v138 = vadd.f32 %v136, 1e-05
    %v139 = vadd.f32 %v137, 1e-05
    %v140 = vrsqrt.pop %v138
    %v141 = vrsqrt.pop %v139
    %v142 = vmul.f32 %v126, %v140
    %v143 = vmul.f32 %v127, %v141
    %v144 = vlaneseq
    %v145 = vshrl.u32 %v144, 7
    %v146 = vsub.s32 0, %v145
    %v147 = vrot.slane %v116, %v146
    %v148 = vmul.f32 %v142, %v147
    %v149 = vmul.f32 %v143, %v147
    %v150 = vlaneseq
    %v151 = vshrl.u32 %v150, 7
    %v152 = vsub.s32 0, %v151
    %v153 = vrot.slane %v117, %v152
    %v154 = vadd.f32 %v148, %v153
    %v155 = vadd.f32 %v149, %v153
    %v156 = vld [vmem:[%s2] sm:$0xff]
    %v157 = vld [vmem:[%s2 + $0x8] sm:$0xff]
    %v158 = vld [vmem:[%s2 + $0x10] sm:$0xff]
    %v159 = vld [vmem:[%s2 + $0x18] sm:$0xff]
    %v160 = vld [vmem:[%s3] sm:$0x1]
    %v161 = vlaneseq
    %v162 = vshrl.u32 %v161, 7
    %v163 = vsub.s32 0, %v162
    %v164 = vrot.slane %v160, %v163
    %v166 = vsel %vm47, %v112, 0
    %v169 = vsel %vm47, %v113, 0
    %v172 = vsel %vm47, %v114, 0
    %v175 = vsel %vm47, %v115, 0
    %177 = vmatprep.subr.mxu0 0.0
    %178 = vmatpush1.msra.mxu0 %v156
    %179 = vmatprep.subr.mxu0 0.0
    %180 = vmatpush1.msra.mxu0 %v157
    %181 = vmatprep.subr.mxu0 0.0
    %182 = vmatpush1.msra.mxu0 %v158
    %183 = vmatprep.subr.mxu0 0.0
    %184 = vmatpush1.msra.mxu0 %v159
    %185 = vmatprep.subr.mxu0 0.0
    %186 = vmatpush1.msra.mxu0 0.0
    %187 = vmatprep.subr.mxu0 0.0
    %188 = vmatpush1.msra.mxu0 0.0
    %189 = vmatprep.subr.mxu0 0.0
    %190 = vmatpush1.msra.mxu0 0.0
    %191 = vmatprep.subr.mxu0 0.0
    %192 = vmatpush1.msra.mxu0 0.0
    %193 = vmatprep.subr.mxu0 0.0
    %194 = vmatpush1.msra.mxu0 0.0
    %195 = vmatprep.subr.mxu0 0.0
    %196 = vmatpush1.msra.mxu0 0.0
    %197 = vmatprep.subr.mxu0 0.0
    %198 = vmatpush1.msra.mxu0 0.0
    %199 = vmatprep.subr.mxu0 0.0
    %200 = vmatpush1.msra.mxu0 0.0
    %201 = vmatprep.subr.mxu0 0.0
    %202 = vmatpush1.msra.mxu0 0.0
    %203 = vmatprep.subr.mxu0 0.0
    %204 = vmatpush1.msra.mxu0 0.0
    %205 = vmatprep.subr.mxu0 0.0
    %206 = vmatpush1.msra.mxu0 0.0
    %207 = vmatprep.subr.mxu0 0.0
    %208 = vmatpush1.msra.mxu0 0.0
    %209 = vmatprep.subr.mxu0 0.0
    %210 = vmatpush1.msra.mxu0 0.0
    %211 = vmatprep.subr.mxu0 0.0
    %212 = vmatpush1.msra.mxu0 0.0
    %213 = vmatprep.subr.mxu0 0.0
    %214 = vmatpush1.msra.mxu0 0.0
    %215 = vmatprep.subr.mxu0 0.0
    %216 = vmatpush1.msra.mxu0 0.0
    %217 = vmatprep.subr.mxu0 0.0
    %218 = vmatpush1.msra.mxu0 0.0
    %219 = vmatprep.subr.mxu0 0.0
    %220 = vmatpush1.msra.mxu0 0.0
    %221 = vmatprep.subr.mxu0 0.0
    %222 = vmatpush1.msra.mxu0 0.0
    %223 = vmatprep.subr.mxu0 0.0
    %224 = vmatpush1.msra.mxu0 0.0
    %225 = vmatprep.subr.mxu0 0.0
    %226 = vmatpush1.msra.mxu0 0.0
    %227 = vmatprep.subr.mxu0 0.0
    %228 = vmatpush1.msra.mxu0 0.0
    %229 = vmatprep.subr.mxu0 0.0
    %230 = vmatpush1.msra.mxu0 0.0
    %231 = vmatprep.subr.mxu0 0.0
    %232 = vmatpush1.msra.mxu0 0.0
    %233 = vmatprep.subr.mxu0 0.0
    %234 = vmatpush1.msra.mxu0 0.0
    %235 = vmatprep.subr.mxu0 0.0
    %236 = vmatpush1.msra.mxu0 0.0
    %237 = vmatprep.subr.mxu0 0.0
    %238 = vmatpush1.msra.mxu0 0.0
    %239 = vmatprep.subr.mxu0 0.0
    %240 = vmatpush1.msra.mxu0 0.0
    %241 = vmatprep.mubr.f32.mxu0 0.0
    %242 = vmatmul.mubr.f32.gmra.mrb[0].mxu0 %v166
    %v243 = vpop.f32.mrb[0].mxu0
    %v244 = vadd.f32 %v164, %v243
    %v245 = vpop.f32.mrb[0].mxu0
    %246 = vmatprep.mubr.f32.mxu0 0.0
    %247 = vmatmul.mubr.f32.gmra.mrb[0].mxu0 %v169
    %v248 = vpop.f32.mrb[0].mxu0
    %v249 = vadd.f32 %v164, %v248
    %v250 = vpop.f32.mrb[0].mxu0
    %251 = vmatprep.mubr.f32.mxu0 0.0
    %252 = vmatmul.mubr.f32.gmra.mrb[0].mxu0 %v172
    %v253 = vpop.f32.mrb[0].mxu0
    %v254 = vadd.f32 %v164, %v253
    %v255 = vpop.f32.mrb[0].mxu0
    %256 = vmatprep.mubr.f32.mxu0 0.0
    %257 = vmatmul.mubr.f32.gmra.mrb[0].mxu0 %v175
    %v258 = vpop.f32.mrb[0].mxu0
    %v259 = vadd.f32 %v164, %v258
    %v260 = vpop.f32.mrb[0].mxu0
    %261 = vdwg.mxu0
    %v262 = vld [vmem:[%s4] sm:$0xff]
    %v263 = vld [vmem:[%s4 + $0x8] sm:$0xff]
    %v264 = vld [vmem:[%s4 + $0x10] sm:$0xff]
    %v265 = vld [vmem:[%s4 + $0x18] sm:$0xff]
    %v266 = vld [vmem:[%s4 + $0x20] sm:$0xff]
    %v267 = vld [vmem:[%s4 + $0x28] sm:$0xff]
    %v268 = vld [vmem:[%s4 + $0x30] sm:$0xff]
    %v269 = vld [vmem:[%s4 + $0x38] sm:$0xff]
    %v270 = vld [vmem:[%s5] ss:$2 sm:$0x3]
    %v272 = vlaneseq
    %v273 = vshrl.u32 %v272, 7
    %v274 = vsub.s32 0, %v273
    %v275 = vrot.slane %v270, %v274
    %v276 = vlaneseq
    %v277 = vshrl.u32 %v276, 7
    %v278 = vsub.s32 1, %v277
    %v279 = vrot.slane %v270, %v278
    %v283 = vsel %vm47, %v154, 0
    %v286 = vsel %vm47, %v155, 0
    %288 = vmatprep.subr.mxu0 %v263
    %289 = vmatpush1.msra.mxu0 %v262
    %290 = vmatprep.subr.mxu0 %v265
    %291 = vmatpush1.msra.mxu0 %v264
    %292 = vmatprep.subr.mxu0 %v267
    %293 = vmatpush1.msra.mxu0 %v266
    %294 = vmatprep.subr.mxu0 %v269
    %295 = vmatpush1.msra.mxu0 %v268
    %296 = vmatprep.subr.mxu0 0.0
    %297 = vmatpush1.msra.mxu0 0.0
    %298 = vmatprep.subr.mxu0 0.0
    %299 = vmatpush1.msra.mxu0 0.0
    %300 = vmatprep.subr.mxu0 0.0
    %301 = vmatpush1.msra.mxu0 0.0
    %302 = vmatprep.subr.mxu0 0.0
    %303 = vmatpush1.msra.mxu0 0.0
    %304 = vmatprep.subr.mxu0 0.0
    %305 = vmatpush1.msra.mxu0 0.0
    %306 = vmatprep.subr.mxu0 0.0
    %307 = vmatpush1.msra.mxu0 0.0
    %308 = vmatprep.subr.mxu0 0.0
    %309 = vmatpush1.msra.mxu0 0.0
    %310 = vmatprep.subr.mxu0 0.0
    %311 = vmatpush1.msra.mxu0 0.0
    %312 = vmatprep.subr.mxu0 0.0
    %313 = vmatpush1.msra.mxu0 0.0
    %314 = vmatprep.subr.mxu0 0.0
    %315 = vmatpush1.msra.mxu0 0.0
    %316 = vmatprep.subr.mxu0 0.0
    %317 = vmatpush1.msra.mxu0 0.0
    %318 = vmatprep.subr.mxu0 0.0
    %319 = vmatpush1.msra.mxu0 0.0
    %320 = vmatprep.subr.mxu0 0.0
    %321 = vmatpush1.msra.mxu0 0.0
    %322 = vmatprep.subr.mxu0 0.0
    %323 = vmatpush1.msra.mxu0 0.0
    %324 = vmatprep.subr.mxu0 0.0
    %325 = vmatpush1.msra.mxu0 0.0
    %326 = vmatprep.subr.mxu0 0.0
    %327 = vmatpush1.msra.mxu0 0.0
    %328 = vmatprep.subr.mxu0 0.0
    %329 = vmatpush1.msra.mxu0 0.0
    %330 = vmatprep.subr.mxu0 0.0
    %331 = vmatpush1.msra.mxu0 0.0
    %332 = vmatprep.subr.mxu0 0.0
    %333 = vmatpush1.msra.mxu0 0.0
    %334 = vmatprep.subr.mxu0 0.0
    %335 = vmatpush1.msra.mxu0 0.0
    %336 = vmatprep.subr.mxu0 0.0
    %337 = vmatpush1.msra.mxu0 0.0
    %338 = vmatprep.subr.mxu0 0.0
    %339 = vmatpush1.msra.mxu0 0.0
    %340 = vmatprep.subr.mxu0 0.0
    %341 = vmatpush1.msra.mxu0 0.0
    %342 = vmatprep.subr.mxu0 0.0
    %343 = vmatpush1.msra.mxu0 0.0
    %344 = vmatprep.subr.mxu0 0.0
    %345 = vmatpush1.msra.mxu0 0.0
    %346 = vmatprep.subr.mxu0 0.0
    %347 = vmatpush1.msra.mxu0 0.0
    %348 = vmatprep.subr.mxu0 0.0
    %349 = vmatpush1.msra.mxu0 0.0
    %350 = vmatprep.subr.mxu0 0.0
    %351 = vmatpush1.msra.mxu0 0.0
    %352 = vmatprep.mubr.f32.mxu0 0.0
    %353 = vmatmul.mubr.f32.gmra.mrb[0].mxu0 %v283
    %v354 = vpop.f32.mrb[0].mxu0
    %v355 = vadd.f32 %v275, %v354
    %v356 = vpop.f32.mrb[0].mxu0
    %v357 = vadd.f32 %v279, %v356
    %358 = vmatprep.mubr.f32.mxu0 0.0
    %359 = vmatmul.mubr.f32.gmra.mrb[0].mxu0 %v286
    %v360 = vpop.f32.mrb[0].mxu0
    %v361 = vadd.f32 %v275, %v360
    %v362 = vpop.f32.mrb[0].mxu0
    %v363 = vadd.f32 %v279, %v362
    %364 = vdwg.mxu0
    %369 = vrot.lane.b32.xlu0 %v244, 96
    %v370 = vpop.permute.xlu0 %369
    %371 = vrot.lane.b32.xlu0 %v249, 96
    %v372 = vpop.permute.xlu0 %371
    %373 = vrot.lane.b32.xlu0 %v254, 96
    %v374 = vpop.permute.xlu0 %373
    %375 = vrot.lane.b32.xlu0 %v259, 96
    %v376 = vpop.permute.xlu0 %375
    %377 = vrot.lane.b32.xlu0 %v244, 64
    %v378 = vpop.permute.xlu0 %377
    %379 = vrot.lane.b32.xlu0 %v249, 64
    %v380 = vpop.permute.xlu0 %379
    %381 = vrot.lane.b32.xlu0 %v254, 64
    %v382 = vpop.permute.xlu0 %381
    %383 = vrot.lane.b32.xlu0 %v259, 64
    %v384 = vpop.permute.xlu0 %383
    %385 = vrot.lane.b32.xlu0 %v244, 32
    %v386 = vpop.permute.xlu0 %385
    %387 = vrot.lane.b32.xlu0 %v249, 32
    %v388 = vpop.permute.xlu0 %387
    %389 = vrot.lane.b32.xlu0 %v254, 32
    %v390 = vpop.permute.xlu0 %389
    %391 = vrot.lane.b32.xlu0 %v259, 32
    %v392 = vpop.permute.xlu0 %391
    %395 = vrot.lane.b32.xlu0 %v355, 96
    %v396 = vpop.permute.xlu0 %395
    %397 = vrot.lane.b32.xlu0 %v361, 96
    %v398 = vpop.permute.xlu0 %397
    %399 = vrot.lane.b32.xlu0 %v355, 64
    %v400 = vpop.permute.xlu0 %399
    %401 = vrot.lane.b32.xlu0 %v361, 64
    %v402 = vpop.permute.xlu0 %401
    %403 = vrot.lane.b32.xlu0 %v355, 32
    %v404 = vpop.permute.xlu0 %403
    %405 = vrot.lane.b32.xlu0 %v361, 32
    %v406 = vpop.permute.xlu0 %405
    %409 = vrot.lane.b32.xlu0 %v357, 96
    %v410 = vpop.permute.xlu0 %409
    %411 = vrot.lane.b32.xlu0 %v363, 96
    %v412 = vpop.permute.xlu0 %411
    %415 = vrot.lane.b32.xlu0 %v357, 64
    %v416 = vpop.permute.xlu0 %415
    %417 = vrot.lane.b32.xlu0 %v363, 64
    %v418 = vpop.permute.xlu0 %417
    %421 = vrot.lane.b32.xlu0 %v357, 32
    %v422 = vpop.permute.xlu0 %421
    %423 = vrot.lane.b32.xlu0 %v363, 32
    %v424 = vpop.permute.xlu0 %423
    %v427 = vsel %vm47, %v244, 0
    %v429 = vsel %vm47, %v249, 0
    %v431 = vsel %vm47, %v355, 0
    %433 = vmatprep.subr.mxu0 0.0
    %434 = vmatpush1.xpose.msra.mxu0 %v431
    %435 = vmatprep.subr.mxu0 0.0
    %436 = vmatpush1.xpose.msra.mxu0 0.0
    %437 = vmatprep.subr.mxu0 0.0
    %438 = vmatpush1.xpose.msra.mxu0 0.0
    %439 = vmatprep.subr.mxu0 0.0
    %440 = vmatpush1.xpose.msra.mxu0 0.0
    %441 = vmatprep.subr.mxu0 0.0
    %442 = vmatpush1.xpose.msra.mxu0 0.0
    %443 = vmatprep.subr.mxu0 0.0
    %444 = vmatpush1.xpose.msra.mxu0 0.0
    %445 = vmatprep.subr.mxu0 0.0
    %446 = vmatpush1.xpose.msra.mxu0 0.0
    %447 = vmatprep.subr.mxu0 0.0
    %448 = vmatpush1.xpose.msra.mxu0 0.0
    %449 = vmatprep.subr.mxu0 0.0
    %450 = vmatpush1.xpose.msra.mxu0 0.0
    %451 = vmatprep.subr.mxu0 0.0
    %452 = vmatpush1.xpose.msra.mxu0 0.0
    %453 = vmatprep.subr.mxu0 0.0
    %454 = vmatpush1.xpose.msra.mxu0 0.0
    %455 = vmatprep.subr.mxu0 0.0
    %456 = vmatpush1.xpose.msra.mxu0 0.0
    %457 = vmatprep.subr.mxu0 0.0
    %458 = vmatpush1.xpose.msra.mxu0 0.0
    %459 = vmatprep.subr.mxu0 0.0
    %460 = vmatpush1.xpose.msra.mxu0 0.0
    %461 = vmatprep.subr.mxu0 0.0
    %462 = vmatpush1.xpose.msra.mxu0 0.0
    %463 = vmatprep.subr.mxu0 0.0
    %464 = vmatpush1.xpose.msra.mxu0 0.0
    %465 = vmatprep.subr.mxu0 0.0
    %466 = vmatpush1.xpose.msra.mxu0 0.0
    %467 = vmatprep.subr.mxu0 0.0
    %468 = vmatpush1.xpose.msra.mxu0 0.0
    %469 = vmatprep.subr.mxu0 0.0
    %470 = vmatpush1.xpose.msra.mxu0 0.0
    %471 = vmatprep.subr.mxu0 0.0
    %472 = vmatpush1.xpose.msra.mxu0 0.0
    %473 = vmatprep.subr.mxu0 0.0
    %474 = vmatpush1.xpose.msra.mxu0 0.0
    %475 = vmatprep.subr.mxu0 0.0
    %476 = vmatpush1.xpose.msra.mxu0 0.0
    %477 = vmatprep.subr.mxu0 0.0
    %478 = vmatpush1.xpose.msra.mxu0 0.0
    %479 = vmatprep.subr.mxu0 0.0
    %480 = vmatpush1.xpose.msra.mxu0 0.0
    %481 = vmatprep.subr.mxu0 0.0
    %482 = vmatpush1.xpose.msra.mxu0 0.0
    %483 = vmatprep.subr.mxu0 0.0
    %484 = vmatpush1.xpose.msra.mxu0 0.0
    %485 = vmatprep.subr.mxu0 0.0
    %486 = vmatpush1.xpose.msra.mxu0 0.0
    %487 = vmatprep.subr.mxu0 0.0
    %488 = vmatpush1.xpose.msra.mxu0 0.0
    %489 = vmatprep.subr.mxu0 0.0
    %490 = vmatpush1.xpose.msra.mxu0 0.0
    %491 = vmatprep.subr.mxu0 0.0
    %492 = vmatpush1.xpose.msra.mxu0 0.0
    %493 = vmatprep.subr.mxu0 0.0
    %494 = vmatpush1.xpose.msra.mxu0 0.0
    %495 = vmatprep.subr.mxu0 0.0
    %496 = vmatpush1.xpose.msra.mxu0 0.0
    %497 = vmatprep.mubr.f32.mxu0 0.0
    %498 = vmatmul.mubr.f32.gmra.mrb[0].mxu0 %v427
    %v499 = vpop.f32.mrb[0].mxu0
    %v500 = vadd.f32 0.0, %v499
    %v501 = vpop.f32.mrb[0].mxu0
    %502 = vmatprep.mubr.f32.mxu0 0.0
    %503 = vmatmul.mubr.f32.gmra.mrb[0].mxu0 %v429
    %v504 = vpop.f32.mrb[0].mxu0
    %v505 = vadd.f32 0.0, %v504
    %v506 = vpop.f32.mrb[0].mxu0
    %507 = vdwg.mxu0
    %v508 = vsel %vm47, %v254, 0
    %v510 = vsel %vm47, %v259, 0
    %v512 = vsel %vm47, %v361, 0
    %514 = vmatprep.subr.mxu0 0.0
    %515 = vmatpush1.xpose.msra.mxu0 %v512
    %516 = vmatprep.subr.mxu0 0.0
    %517 = vmatpush1.xpose.msra.mxu0 0.0
    %518 = vmatprep.subr.mxu0 0.0
    %519 = vmatpush1.xpose.msra.mxu0 0.0
    %520 = vmatprep.subr.mxu0 0.0
    %521 = vmatpush1.xpose.msra.mxu0 0.0
    %522 = vmatprep.subr.mxu0 0.0
    %523 = vmatpush1.xpose.msra.mxu0 0.0
    %524 = vmatprep.subr.mxu0 0.0
    %525 = vmatpush1.xpose.msra.mxu0 0.0
    %526 = vmatprep.subr.mxu0 0.0
    %527 = vmatpush1.xpose.msra.mxu0 0.0
    %528 = vmatprep.subr.mxu0 0.0
    %529 = vmatpush1.xpose.msra.mxu0 0.0
    %530 = vmatprep.subr.mxu0 0.0
    %531 = vmatpush1.xpose.msra.mxu0 0.0
    %532 = vmatprep.subr.mxu0 0.0
    %533 = vmatpush1.xpose.msra.mxu0 0.0
    %534 = vmatprep.subr.mxu0 0.0
    %535 = vmatpush1.xpose.msra.mxu0 0.0
    %536 = vmatprep.subr.mxu0 0.0
    %537 = vmatpush1.xpose.msra.mxu0 0.0
    %538 = vmatprep.subr.mxu0 0.0
    %539 = vmatpush1.xpose.msra.mxu0 0.0
    %540 = vmatprep.subr.mxu0 0.0
    %541 = vmatpush1.xpose.msra.mxu0 0.0
    %542 = vmatprep.subr.mxu0 0.0
    %543 = vmatpush1.xpose.msra.mxu0 0.0
    %544 = vmatprep.subr.mxu0 0.0
    %545 = vmatpush1.xpose.msra.mxu0 0.0
    %546 = vmatprep.subr.mxu0 0.0
    %547 = vmatpush1.xpose.msra.mxu0 0.0
    %548 = vmatprep.subr.mxu0 0.0
    %549 = vmatpush1.xpose.msra.mxu0 0.0
    %550 = vmatprep.subr.mxu0 0.0
    %551 = vmatpush1.xpose.msra.mxu0 0.0
    %552 = vmatprep.subr.mxu0 0.0
    %553 = vmatpush1.xpose.msra.mxu0 0.0
    %554 = vmatprep.subr.mxu0 0.0
    %555 = vmatpush1.xpose.msra.mxu0 0.0
    %556 = vmatprep.subr.mxu0 0.0
    %557 = vmatpush1.xpose.msra.mxu0 0.0
    %558 = vmatprep.subr.mxu0 0.0
    %559 = vmatpush1.xpose.msra.mxu0 0.0
    %560 = vmatprep.subr.mxu0 0.0
    %561 = vmatpush1.xpose.msra.mxu0 0.0
    %562 = vmatprep.subr.mxu0 0.0
    %563 = vmatpush1.xpose.msra.mxu0 0.0
    %564 = vmatprep.subr.mxu0 0.0
    %565 = vmatpush1.xpose.msra.mxu0 0.0
    %566 = vmatprep.subr.mxu0 0.0
    %567 = vmatpush1.xpose.msra.mxu0 0.0
    %568 = vmatprep.subr.mxu0 0.0
    %569 = vmatpush1.xpose.msra.mxu0 0.0
    %570 = vmatprep.subr.mxu0 0.0
    %571 = vmatpush1.xpose.msra.mxu0 0.0
    %572 = vmatprep.subr.mxu0 0.0
    %573 = vmatpush1.xpose.msra.mxu0 0.0
    %574 = vmatprep.subr.mxu0 0.0
    %575 = vmatpush1.xpose.msra.mxu0 0.0
    %576 = vmatprep.subr.mxu0 0.0
    %577 = vmatpush1.xpose.msra.mxu0 0.0
    %578 = vmatprep.mubr.f32.mxu0 0.0
    %579 = vmatmul.mubr.f32.gmra.mrb[0].mxu0 %v508
    %v580 = vpop.f32.mrb[0].mxu0
    %v581 = vadd.f32 0.0, %v580
    %v582 = vpop.f32.mrb[0].mxu0
    %583 = vmatprep.mubr.f32.mxu0 0.0
    %584 = vmatmul.mubr.f32.gmra.mrb[0].mxu0 %v510
    %v585 = vpop.f32.mrb[0].mxu0
    %v586 = vadd.f32 0.0, %v585
    %v587 = vpop.f32.mrb[0].mxu0
    %588 = vdwg.mxu0
    %v589 = vsel %vm47, %v370, 0
    %v591 = vsel %vm47, %v372, 0
    %v593 = vsel %vm47, %v396, 0
    %595 = vmatprep.subr.mxu0 0.0
    %596 = vmatpush1.xpose.msra.mxu0 %v593
    %597 = vmatprep.subr.mxu0 0.0
    %598 = vmatpush1.xpose.msra.mxu0 0.0
    %599 = vmatprep.subr.mxu0 0.0
    %600 = vmatpush1.xpose.msra.mxu0 0.0
    %601 = vmatprep.subr.mxu0 0.0
    %602 = vmatpush1.xpose.msra.mxu0 0.0
    %603 = vmatprep.subr.mxu0 0.0
    %604 = vmatpush1.xpose.msra.mxu0 0.0
    %605 = vmatprep.subr.mxu0 0.0
    %606 = vmatpush1.xpose.msra.mxu0 0.0
    %607 = vmatprep.subr.mxu0 0.0
    %608 = vmatpush1.xpose.msra.mxu0 0.0
    %609 = vmatprep.subr.mxu0 0.0
    %610 = vmatpush1.xpose.msra.mxu0 0.0
    %611 = vmatprep.subr.mxu0 0.0
    %612 = vmatpush1.xpose.msra.mxu0 0.0
    %613 = vmatprep.subr.mxu0 0.0
    %614 = vmatpush1.xpose.msra.mxu0 0.0
    %615 = vmatprep.subr.mxu0 0.0
    %616 = vmatpush1.xpose.msra.mxu0 0.0
    %617 = vmatprep.subr.mxu0 0.0
    %618 = vmatpush1.xpose.msra.mxu0 0.0
    %619 = vmatprep.subr.mxu0 0.0
    %620 = vmatpush1.xpose.msra.mxu0 0.0
    %621 = vmatprep.subr.mxu0 0.0
    %622 = vmatpush1.xpose.msra.mxu0 0.0
    %623 = vmatprep.subr.mxu0 0.0
    %624 = vmatpush1.xpose.msra.mxu0 0.0
    %625 = vmatprep.subr.mxu0 0.0
    %626 = vmatpush1.xpose.msra.mxu0 0.0
    %627 = vmatprep.subr.mxu0 0.0
    %628 = vmatpush1.xpose.msra.mxu0 0.0
    %629 = vmatprep.subr.mxu0 0.0
    %630 = vmatpush1.xpose.msra.mxu0 0.0
    %631 = vmatprep.subr.mxu0 0.0
    %632 = vmatpush1.xpose.msra.mxu0 0.0
    %633 = vmatprep.subr.mxu0 0.0
    %634 = vmatpush1.xpose.msra.mxu0 0.0
    %635 = vmatprep.subr.mxu0 0.0
    %636 = vmatpush1.xpose.msra.mxu0 0.0
    %637 = vmatprep.subr.mxu0 0.0
    %638 = vmatpush1.xpose.msra.mxu0 0.0
    %639 = vmatprep.subr.mxu0 0.0
    %640 = vmatpush1.xpose.msra.mxu0 0.0
    %641 = vmatprep.subr.mxu0 0.0
    %642 = vmatpush1.xpose.msra.mxu0 0.0
    %643 = vmatprep.subr.mxu0 0.0
    %644 = vmatpush1.xpose.msra.mxu0 0.0
    %645 = vmatprep.subr.mxu0 0.0
    %646 = vmatpush1.xpose.msra.mxu0 0.0
    %647 = vmatprep.subr.mxu0 0.0
    %648 = vmatpush1.xpose.msra.mxu0 0.0
    %649 = vmatprep.subr.mxu0 0.0
    %650 = vmatpush1.xpose.msra.mxu0 0.0
    %651 = vmatprep.subr.mxu0 0.0
    %652 = vmatpush1.xpose.msra.mxu0 0.0
    %653 = vmatprep.subr.mxu0 0.0
    %654 = vmatpush1.xpose.msra.mxu0 0.0
    %655 = vmatprep.subr.mxu0 0.0
    %656 = vmatpush1.xpose.msra.mxu0 0.0
    %657 = vmatprep.subr.mxu0 0.0
    %658 = vmatpush1.xpose.msra.mxu0 0.0
    %659 = vmatprep.mubr.f32.mxu0 0.0
    %660 = vmatmul.mubr.f32.gmra.mrb[0].mxu0 %v589
    %v661 = vpop.f32.mrb[0].mxu0
    %v662 = vadd.f32 0.0, %v661
    %v663 = vpop.f32.mrb[0].mxu0
    %664 = vmatprep.mubr.f32.mxu0 0.0
    %665 = vmatmul.mubr.f32.gmra.mrb[0].mxu0 %v591
    %v666 = vpop.f32.mrb[0].mxu0
    %v667 = vadd.f32 0.0, %v666
    %v668 = vpop.f32.mrb[0].mxu0
    %669 = vdwg.mxu0
    %v670 = vsel %vm47, %v374, 0
    %v672 = vsel %vm47, %v376, 0
    %v674 = vsel %vm47, %v398, 0
    %676 = vmatprep.subr.mxu0 0.0
    %677 = vmatpush1.xpose.msra.mxu0 %v674
    %678 = vmatprep.subr.mxu0 0.0
    %679 = vmatpush1.xpose.msra.mxu0 0.0
    %680 = vmatprep.subr.mxu0 0.0
    %681 = vmatpush1.xpose.msra.mxu0 0.0
    %682 = vmatprep.subr.mxu0 0.0
    %683 = vmatpush1.xpose.msra.mxu0 0.0
    %684 = vmatprep.subr.mxu0 0.0
    %685 = vmatpush1.xpose.msra.mxu0 0.0
    %686 = vmatprep.subr.mxu0 0.0
    %687 = vmatpush1.xpose.msra.mxu0 0.0
    %688 = vmatprep.subr.mxu0 0.0
    %689 = vmatpush1.xpose.msra.mxu0 0.0
    %690 = vmatprep.subr.mxu0 0.0
    %691 = vmatpush1.xpose.msra.mxu0 0.0
    %692 = vmatprep.subr.mxu0 0.0
    %693 = vmatpush1.xpose.msra.mxu0 0.0
    %694 = vmatprep.subr.mxu0 0.0
    %695 = vmatpush1.xpose.msra.mxu0 0.0
    %696 = vmatprep.subr.mxu0 0.0
    %697 = vmatpush1.xpose.msra.mxu0 0.0
    %698 = vmatprep.subr.mxu0 0.0
    %699 = vmatpush1.xpose.msra.mxu0 0.0
    %700 = vmatprep.subr.mxu0 0.0
    %701 = vmatpush1.xpose.msra.mxu0 0.0
    %702 = vmatprep.subr.mxu0 0.0
    %703 = vmatpush1.xpose.msra.mxu0 0.0
    %704 = vmatprep.subr.mxu0 0.0
    %705 = vmatpush1.xpose.msra.mxu0 0.0
    %706 = vmatprep.subr.mxu0 0.0
    %707 = vmatpush1.xpose.msra.mxu0 0.0
    %708 = vmatprep.subr.mxu0 0.0
    %709 = vmatpush1.xpose.msra.mxu0 0.0
    %710 = vmatprep.subr.mxu0 0.0
    %711 = vmatpush1.xpose.msra.mxu0 0.0
    %712 = vmatprep.subr.mxu0 0.0
    %713 = vmatpush1.xpose.msra.mxu0 0.0
    %714 = vmatprep.subr.mxu0 0.0
    %715 = vmatpush1.xpose.msra.mxu0 0.0
    %716 = vmatprep.subr.mxu0 0.0
    %717 = vmatpush1.xpose.msra.mxu0 0.0
    %718 = vmatprep.subr.mxu0 0.0
    %719 = vmatpush1.xpose.msra.mxu0 0.0
    %720 = vmatprep.subr.mxu0 0.0
    %721 = vmatpush1.xpose.msra.mxu0 0.0
    %722 = vmatprep.subr.mxu0 0.0
    %723 = vmatpush1.xpose.msra.mxu0 0.0
    %724 = vmatprep.subr.mxu0 0.0
    %725 = vmatpush1.xpose.msra.mxu0 0.0
    %726 = vmatprep.subr.mxu0 0.0
    %727 = vmatpush1.xpose.msra.mxu0 0.0
    %728 = vmatprep.subr.mxu0 0.0
    %729 = vmatpush1.xpose.msra.mxu0 0.0
    %730 = vmatprep.subr.mxu0 0.0
    %731 = vmatpush1.xpose.msra.mxu0 0.0
    %732 = vmatprep.subr.mxu0 0.0
    %733 = vmatpush1.xpose.msra.mxu0 0.0
    %734 = vmatprep.subr.mxu0 0.0
    %735 = vmatpush1.xpose.msra.mxu0 0.0
    %736 = vmatprep.subr.mxu0 0.0
    %737 = vmatpush1.xpose.msra.mxu0 0.0
    %738 = vmatprep.subr.mxu0 0.0
    %739 = vmatpush1.xpose.msra.mxu0 0.0
    %740 = vmatprep.mubr.f32.mxu0 0.0
    %741 = vmatmul.mubr.f32.gmra.mrb[0].mxu0 %v670
    %v742 = vpop.f32.mrb[0].mxu0
    %v743 = vadd.f32 0.0, %v742
    %v744 = vpop.f32.mrb[0].mxu0
    %745 = vmatprep.mubr.f32.mxu0 0.0
    %746 = vmatmul.mubr.f32.gmra.mrb[0].mxu0 %v672
    %v747 = vpop.f32.mrb[0].mxu0
    %v748 = vadd.f32 0.0, %v747
    %v749 = vpop.f32.mrb[0].mxu0
    %750 = vdwg.mxu0
    %v751 = vsel %vm47, %v378, 0
    %v753 = vsel %vm47, %v380, 0
    %v755 = vsel %vm47, %v400, 0
    %757 = vmatprep.subr.mxu0 0.0
    %758 = vmatpush1.xpose.msra.mxu0 %v755
    %759 = vmatprep.subr.mxu0 0.0
    %760 = vmatpush1.xpose.msra.mxu0 0.0
    %761 = vmatprep.subr.mxu0 0.0
    %762 = vmatpush1.xpose.msra.mxu0 0.0
    %763 = vmatprep.subr.mxu0 0.0
    %764 = vmatpush1.xpose.msra.mxu0 0.0
    %765 = vmatprep.subr.mxu0 0.0
    %766 = vmatpush1.xpose.msra.mxu0 0.0
    %767 = vmatprep.subr.mxu0 0.0
    %768 = vmatpush1.xpose.msra.mxu0 0.0
    %769 = vmatprep.subr.mxu0 0.0
    %770 = vmatpush1.xpose.msra.mxu0 0.0
    %771 = vmatprep.subr.mxu0 0.0
    %772 = vmatpush1.xpose.msra.mxu0 0.0
    %773 = vmatprep.subr.mxu0 0.0
    %774 = vmatpush1.xpose.msra.mxu0 0.0
    %775 = vmatprep.subr.mxu0 0.0
    %776 = vmatpush1.xpose.msra.mxu0 0.0
    %777 = vmatprep.subr.mxu0 0.0
    %778 = vmatpush1.xpose.msra.mxu0 0.0
    %779 = vmatprep.subr.mxu0 0.0
    %780 = vmatpush1.xpose.msra.mxu0 0.0
    %781 = vmatprep.subr.mxu0 0.0
    %782 = vmatpush1.xpose.msra.mxu0 0.0
    %783 = vmatprep.subr.mxu0 0.0
    %784 = vmatpush1.xpose.msra.mxu0 0.0
    %785 = vmatprep.subr.mxu0 0.0
    %786 = vmatpush1.xpose.msra.mxu0 0.0
    %787 = vmatprep.subr.mxu0 0.0
    %788 = vmatpush1.xpose.msra.mxu0 0.0
    %789 = vmatprep.subr.mxu0 0.0
    %790 = vmatpush1.xpose.msra.mxu0 0.0
    %791 = vmatprep.subr.mxu0 0.0
    %792 = vmatpush1.xpose.msra.mxu0 0.0
    %793 = vmatprep.subr.mxu0 0.0
    %794 = vmatpush1.xpose.msra.mxu0 0.0
    %795 = vmatprep.subr.mxu0 0.0
    %796 = vmatpush1.xpose.msra.mxu0 0.0
    %797 = vmatprep.subr.mxu0 0.0
    %798 = vmatpush1.xpose.msra.mxu0 0.0
    %799 = vmatprep.subr.mxu0 0.0
    %800 = vmatpush1.xpose.msra.mxu0 0.0
    %801 = vmatprep.subr.mxu0 0.0
    %802 = vmatpush1.xpose.msra.mxu0 0.0
    %803 = vmatprep.subr.mxu0 0.0
    %804 = vmatpush1.xpose.msra.mxu0 0.0
    %805 = vmatprep.subr.mxu0 0.0
    %806 = vmatpush1.xpose.msra.mxu0 0.0
    %807 = vmatprep.subr.mxu0 0.0
    %808 = vmatpush1.xpose.msra.mxu0 0.0
    %809 = vmatprep.subr.mxu0 0.0
    %810 = vmatpush1.xpose.msra.mxu0 0.0
    %811 = vmatprep.subr.mxu0 0.0
    %812 = vmatpush1.xpose.msra.mxu0 0.0
    %813 = vmatprep.subr.mxu0 0.0
    %814 = vmatpush1.xpose.msra.mxu0 0.0
    %815 = vmatprep.subr.mxu0 0.0
    %816 = vmatpush1.xpose.msra.mxu0 0.0
    %817 = vmatprep.subr.mxu0 0.0
    %818 = vmatpush1.xpose.msra.mxu0 0.0
    %819 = vmatprep.subr.mxu0 0.0
    %820 = vmatpush1.xpose.msra.mxu0 0.0
    %821 = vmatprep.mubr.f32.mxu0 0.0
    %822 = vmatmul.mubr.f32.gmra.mrb[0].mxu0 %v751
    %v823 = vpop.f32.mrb[0].mxu0
    %v824 = vadd.f32 0.0, %v823
    %v825 = vpop.f32.mrb[0].mxu0
    %826 = vmatprep.mubr.f32.mxu0 0.0
    %827 = vmatmul.mubr.f32.gmra.mrb[0].mxu0 %v753
    %v828 = vpop.f32.mrb[0].mxu0
    %v829 = vadd.f32 0.0, %v828
    %v830 = vpop.f32.mrb[0].mxu0
    %831 = vdwg.mxu0
    %v832 = vsel %vm47, %v382, 0
    %v834 = vsel %vm47, %v384, 0
    %v836 = vsel %vm47, %v402, 0
    %838 = vmatprep.subr.mxu0 0.0
    %839 = vmatpush1.xpose.msra.mxu0 %v836
    %840 = vmatprep.subr.mxu0 0.0
    %841 = vmatpush1.xpose.msra.mxu0 0.0
    %842 = vmatprep.subr.mxu0 0.0
    %843 = vmatpush1.xpose.msra.mxu0 0.0
    %844 = vmatprep.subr.mxu0 0.0
    %845 = vmatpush1.xpose.msra.mxu0 0.0
    %846 = vmatprep.subr.mxu0 0.0
    %847 = vmatpush1.xpose.msra.mxu0 0.0
    %848 = vmatprep.subr.mxu0 0.0
    %849 = vmatpush1.xpose.msra.mxu0 0.0
    %850 = vmatprep.subr.mxu0 0.0
    %851 = vmatpush1.xpose.msra.mxu0 0.0
    %852 = vmatprep.subr.mxu0 0.0
    %853 = vmatpush1.xpose.msra.mxu0 0.0
    %854 = vmatprep.subr.mxu0 0.0
    %855 = vmatpush1.xpose.msra.mxu0 0.0
    %856 = vmatprep.subr.mxu0 0.0
    %857 = vmatpush1.xpose.msra.mxu0 0.0
    %858 = vmatprep.subr.mxu0 0.0
    %859 = vmatpush1.xpose.msra.mxu0 0.0
    %860 = vmatprep.subr.mxu0 0.0
    %861 = vmatpush1.xpose.msra.mxu0 0.0
    %862 = vmatprep.subr.mxu0 0.0
    %863 = vmatpush1.xpose.msra.mxu0 0.0
    %864 = vmatprep.subr.mxu0 0.0
    %865 = vmatpush1.xpose.msra.mxu0 0.0
    %866 = vmatprep.subr.mxu0 0.0
    %867 = vmatpush1.xpose.msra.mxu0 0.0
    %868 = vmatprep.subr.mxu0 0.0
    %869 = vmatpush1.xpose.msra.mxu0 0.0
    %870 = vmatprep.subr.mxu0 0.0
    %871 = vmatpush1.xpose.msra.mxu0 0.0
    %872 = vmatprep.subr.mxu0 0.0
    %873 = vmatpush1.xpose.msra.mxu0 0.0
    %874 = vmatprep.subr.mxu0 0.0
    %875 = vmatpush1.xpose.msra.mxu0 0.0
    %876 = vmatprep.subr.mxu0 0.0
    %877 = vmatpush1.xpose.msra.mxu0 0.0
    %878 = vmatprep.subr.mxu0 0.0
    %879 = vmatpush1.xpose.msra.mxu0 0.0
    %880 = vmatprep.subr.mxu0 0.0
    %881 = vmatpush1.xpose.msra.mxu0 0.0
    %882 = vmatprep.subr.mxu0 0.0
    %883 = vmatpush1.xpose.msra.mxu0 0.0
    %884 = vmatprep.subr.mxu0 0.0
    %885 = vmatpush1.xpose.msra.mxu0 0.0
    %886 = vmatprep.subr.mxu0 0.0
    %887 = vmatpush1.xpose.msra.mxu0 0.0
    %888 = vmatprep.subr.mxu0 0.0
    %889 = vmatpush1.xpose.msra.mxu0 0.0
    %890 = vmatprep.subr.mxu0 0.0
    %891 = vmatpush1.xpose.msra.mxu0 0.0
    %892 = vmatprep.subr.mxu0 0.0
    %893 = vmatpush1.xpose.msra.mxu0 0.0
    %894 = vmatprep.subr.mxu0 0.0
    %895 = vmatpush1.xpose.msra.mxu0 0.0
    %896 = vmatprep.subr.mxu0 0.0
    %897 = vmatpush1.xpose.msra.mxu0 0.0
    %898 = vmatprep.subr.mxu0 0.0
    %899 = vmatpush1.xpose.msra.mxu0 0.0
    %900 = vmatprep.subr.mxu0 0.0
    %901 = vmatpush1.xpose.msra.mxu0 0.0
    %902 = vmatprep.mubr.f32.mxu0 0.0
    %903 = vmatmul.mubr.f32.gmra.mrb[0].mxu0 %v832
    %v904 = vpop.f32.mrb[0].mxu0
    %v905 = vadd.f32 0.0, %v904
    %v906 = vpop.f32.mrb[0].mxu0
    %907 = vmatprep.mubr.f32.mxu0 0.0
    %908 = vmatmul.mubr.f32.gmra.mrb[0].mxu0 %v834
    %v909 = vpop.f32.mrb[0].mxu0
    %v910 = vadd.f32 0.0, %v909
    %v911 = vpop.f32.mrb[0].mxu0
    %912 = vdwg.mxu0
    %v913 = vsel %vm47, %v386, 0
    %v915 = vsel %vm47, %v388, 0
    %v917 = vsel %vm47, %v404, 0
    %919 = vmatprep.subr.mxu0 0.0
    %920 = vmatpush1.xpose.msra.mxu0 %v917
    %921 = vmatprep.subr.mxu0 0.0
    %922 = vmatpush1.xpose.msra.mxu0 0.0
    %923 = vmatprep.subr.mxu0 0.0
    %924 = vmatpush1.xpose.msra.mxu0 0.0
    %925 = vmatprep.subr.mxu0 0.0
    %926 = vmatpush1.xpose.msra.mxu0 0.0
    %927 = vmatprep.subr.mxu0 0.0
    %928 = vmatpush1.xpose.msra.mxu0 0.0
    %929 = vmatprep.subr.mxu0 0.0
    %930 = vmatpush1.xpose.msra.mxu0 0.0
    %931 = vmatprep.subr.mxu0 0.0
    %932 = vmatpush1.xpose.msra.mxu0 0.0
    %933 = vmatprep.subr.mxu0 0.0
    %934 = vmatpush1.xpose.msra.mxu0 0.0
    %935 = vmatprep.subr.mxu0 0.0
    %936 = vmatpush1.xpose.msra.mxu0 0.0
    %937 = vmatprep.subr.mxu0 0.0
    %938 = vmatpush1.xpose.msra.mxu0 0.0
    %939 = vmatprep.subr.mxu0 0.0
    %940 = vmatpush1.xpose.msra.mxu0 0.0
    %941 = vmatprep.subr.mxu0 0.0
    %942 = vmatpush1.xpose.msra.mxu0 0.0
    %943 = vmatprep.subr.mxu0 0.0
    %944 = vmatpush1.xpose.msra.mxu0 0.0
    %945 = vmatprep.subr.mxu0 0.0
    %946 = vmatpush1.xpose.msra.mxu0 0.0
    %947 = vmatprep.subr.mxu0 0.0
    %948 = vmatpush1.xpose.msra.mxu0 0.0
    %949 = vmatprep.subr.mxu0 0.0
    %950 = vmatpush1.xpose.msra.mxu0 0.0
    %951 = vmatprep.subr.mxu0 0.0
    %952 = vmatpush1.xpose.msra.mxu0 0.0
    %953 = vmatprep.subr.mxu0 0.0
    %954 = vmatpush1.xpose.msra.mxu0 0.0
    %955 = vmatprep.subr.mxu0 0.0
    %956 = vmatpush1.xpose.msra.mxu0 0.0
    %957 = vmatprep.subr.mxu0 0.0
    %958 = vmatpush1.xpose.msra.mxu0 0.0
    %959 = vmatprep.subr.mxu0 0.0
    %960 = vmatpush1.xpose.msra.mxu0 0.0
    %961 = vmatprep.subr.mxu0 0.0
    %962 = vmatpush1.xpose.msra.mxu0 0.0
    %963 = vmatprep.subr.mxu0 0.0
    %964 = vmatpush1.xpose.msra.mxu0 0.0
    %965 = vmatprep.subr.mxu0 0.0
    %966 = vmatpush1.xpose.msra.mxu0 0.0
    %967 = vmatprep.subr.mxu0 0.0
    %968 = vmatpush1.xpose.msra.mxu0 0.0
    %969 = vmatprep.subr.mxu0 0.0
    %970 = vmatpush1.xpose.msra.mxu0 0.0
    %971 = vmatprep.subr.mxu0 0.0
    %972 = vmatpush1.xpose.msra.mxu0 0.0
    %973 = vmatprep.subr.mxu0 0.0
    %974 = vmatpush1.xpose.msra.mxu0 0.0
    %975 = vmatprep.subr.mxu0 0.0
    %976 = vmatpush1.xpose.msra.mxu0 0.0
    %977 = vmatprep.subr.mxu0 0.0
    %978 = vmatpush1.xpose.msra.mxu0 0.0
    %979 = vmatprep.subr.mxu0 0.0
    %980 = vmatpush1.xpose.msra.mxu0 0.0
    %981 = vmatprep.subr.mxu0 0.0
    %982 = vmatpush1.xpose.msra.mxu0 0.0
    %983 = vmatprep.mubr.f32.mxu0 0.0
    %984 = vmatmul.mubr.f32.gmra.mrb[0].mxu0 %v913
    %v985 = vpop.f32.mrb[0].mxu0
    %v986 = vadd.f32 0.0, %v985
    %v987 = vpop.f32.mrb[0].mxu0
    %988 = vmatprep.mubr.f32.mxu0 0.0
    %989 = vmatmul.mubr.f32.gmra.mrb[0].mxu0 %v915
    %v990 = vpop.f32.mrb[0].mxu0
    %v991 = vadd.f32 0.0, %v990
    %v992 = vpop.f32.mrb[0].mxu0
    %993 = vdwg.mxu0
    %v994 = vsel %vm47, %v390, 0
    %v996 = vsel %vm47, %v392, 0
    %v998 = vsel %vm47, %v406, 0
    %1000 = vmatprep.subr.mxu0 0.0
    %1001 = vmatpush1.xpose.msra.mxu0 %v998
    %1002 = vmatprep.subr.mxu0 0.0
    %1003 = vmatpush1.xpose.msra.mxu0 0.0
    %1004 = vmatprep.subr.mxu0 0.0
    %1005 = vmatpush1.xpose.msra.mxu0 0.0
    %1006 = vmatprep.subr.mxu0 0.0
    %1007 = vmatpush1.xpose.msra.mxu0 0.0
    %1008 = vmatprep.subr.mxu0 0.0
    %1009 = vmatpush1.xpose.msra.mxu0 0.0
    %1010 = vmatprep.subr.mxu0 0.0
    %1011 = vmatpush1.xpose.msra.mxu0 0.0
    %1012 = vmatprep.subr.mxu0 0.0
    %1013 = vmatpush1.xpose.msra.mxu0 0.0
    %1014 = vmatprep.subr.mxu0 0.0
    %1015 = vmatpush1.xpose.msra.mxu0 0.0
    %1016 = vmatprep.subr.mxu0 0.0
    %1017 = vmatpush1.xpose.msra.mxu0 0.0
    %1018 = vmatprep.subr.mxu0 0.0
    %1019 = vmatpush1.xpose.msra.mxu0 0.0
    %1020 = vmatprep.subr.mxu0 0.0
    %1021 = vmatpush1.xpose.msra.mxu0 0.0
    %1022 = vmatprep.subr.mxu0 0.0
    %1023 = vmatpush1.xpose.msra.mxu0 0.0
    %1024 = vmatprep.subr.mxu0 0.0
    %1025 = vmatpush1.xpose.msra.mxu0 0.0
    %1026 = vmatprep.subr.mxu0 0.0
    %1027 = vmatpush1.xpose.msra.mxu0 0.0
    %1028 = vmatprep.subr.mxu0 0.0
    %1029 = vmatpush1.xpose.msra.mxu0 0.0
    %1030 = vmatprep.subr.mxu0 0.0
    %1031 = vmatpush1.xpose.msra.mxu0 0.0
    %1032 = vmatprep.subr.mxu0 0.0
    %1033 = vmatpush1.xpose.msra.mxu0 0.0
    %1034 = vmatprep.subr.mxu0 0.0
    %1035 = vmatpush1.xpose.msra.mxu0 0.0
    %1036 = vmatprep.subr.mxu0 0.0
    %1037 = vmatpush1.xpose.msra.mxu0 0.0
    %1038 = vmatprep.subr.mxu0 0.0
    %1039 = vmatpush1.xpose.msra.mxu0 0.0
    %1040 = vmatprep.subr.mxu0 0.0
    %1041 = vmatpush1.xpose.msra.mxu0 0.0
    %1042 = vmatprep.subr.mxu0 0.0
    %1043 = vmatpush1.xpose.msra.mxu0 0.0
    %1044 = vmatprep.subr.mxu0 0.0
    %1045 = vmatpush1.xpose.msra.mxu0 0.0
    %1046 = vmatprep.subr.mxu0 0.0
    %1047 = vmatpush1.xpose.msra.mxu0 0.0
    %1048 = vmatprep.subr.mxu0 0.0
    %1049 = vmatpush1.xpose.msra.mxu0 0.0
    %1050 = vmatprep.subr.mxu0 0.0
    %1051 = vmatpush1.xpose.msra.mxu0 0.0
    %1052 = vmatprep.subr.mxu0 0.0
    %1053 = vmatpush1.xpose.msra.mxu0 0.0
    %1054 = vmatprep.subr.mxu0 0.0
    %1055 = vmatpush1.xpose.msra.mxu0 0.0
    %1056 = vmatprep.subr.mxu0 0.0
    %1057 = vmatpush1.xpose.msra.mxu0 0.0
    %1058 = vmatprep.subr.mxu0 0.0
    %1059 = vmatpush1.xpose.msra.mxu0 0.0
    %1060 = vmatprep.subr.mxu0 0.0
    %1061 = vmatpush1.xpose.msra.mxu0 0.0
    %1062 = vmatprep.subr.mxu0 0.0
    %1063 = vmatpush1.xpose.msra.mxu0 0.0
    %1064 = vmatprep.mubr.f32.mxu0 0.0
    %1065 = vmatmul.mubr.f32.gmra.mrb[0].mxu0 %v994
    %v1066 = vpop.f32.mrb[0].mxu0
    %v1067 = vadd.f32 0.0, %v1066
    %v1068 = vpop.f32.mrb[0].mxu0
    %1069 = vmatprep.mubr.f32.mxu0 0.0
    %1070 = vmatmul.mubr.f32.gmra.mrb[0].mxu0 %v996
    %v1071 = vpop.f32.mrb[0].mxu0
    %v1072 = vadd.f32 0.0, %v1071
    %v1073 = vpop.f32.mrb[0].mxu0
    %1074 = vdwg.mxu0
    %vm1075 = vcmask 64512
    %v1076 = vsel %vm1075, %v500, -inf
    %1077 = vmax.xlane.f32.xlu0 %v1076
    %v1078 = vpop.xlane.xlu0 %1077
    %v1079 = vsel %vm1075, %v505, -inf
    %1080 = vmax.xlane.f32.xlu0 %v1079
    %v1081 = vpop.xlane.xlu0 %1080
    %v1082 = vsel %vm1075, %v581, -inf
    %1083 = vmax.xlane.f32.xlu0 %v1082
    %v1084 = vpop.xlane.xlu0 %1083
    %v1085 = vsel %vm1075, %v586, -inf
    %1086 = vmax.xlane.f32.xlu0 %v1085
    %v1087 = vpop.xlane.xlu0 %1086
    %v1088 = vsel %vm1075, %v662, -inf
    %1089 = vmax.xlane.f32.xlu0 %v1088
    %v1090 = vpop.xlane.xlu0 %1089
    %v1091 = vsel %vm1075, %v667, -inf
    %1092 = vmax.xlane.f32.xlu0 %v1091
    %v1093 = vpop.xlane.xlu0 %1092
    %v1094 = vsel %vm1075, %v743, -inf
    %1095 = vmax.xlane.f32.xlu0 %v1094
    %v1096 = vpop.xlane.xlu0 %1095
    %v1097 = vsel %vm1075, %v748, -inf
    %1098 = vmax.xlane.f32.xlu0 %v1097
    %v1099 = vpop.xlane.xlu0 %1098
    %v1100 = vsel %vm1075, %v824, -inf
    %1101 = vmax.xlane.f32.xlu0 %v1100
    %v1102 = vpop.xlane.xlu0 %1101
    %v1103 = vsel %vm1075, %v829, -inf
    %1104 = vmax.xlane.f32.xlu0 %v1103
    %v1105 = vpop.xlane.xlu0 %1104
    %v1106 = vsel %vm1075, %v905, -inf
    %1107 = vmax.xlane.f32.xlu0 %v1106
    %v1108 = vpop.xlane.xlu0 %1107
    %v1109 = vsel %vm1075, %v910, -inf
    %1110 = vmax.xlane.f32.xlu0 %v1109
    %v1111 = vpop.xlane.xlu0 %1110
    %v1112 = vsel %vm1075, %v986, -inf
    %1113 = vmax.xlane.f32.xlu0 %v1112
    %v1114 = vpop.xlane.xlu0 %1113
    %v1115 = vsel %vm1075, %v991, -inf
    %1116 = vmax.xlane.f32.xlu0 %v1115
    %v1117 = vpop.xlane.xlu0 %1116
    %v1118 = vsel %vm1075, %v1067, -inf
    %1119 = vmax.xlane.f32.xlu0 %v1118
    %v1120 = vpop.xlane.xlu0 %1119
    %v1121 = vsel %vm1075, %v1072, -inf
    %1122 = vmax.xlane.f32.xlu0 %v1121
    %v1123 = vpop.xlane.xlu0 %1122
    %v1124 = vsub.f32 %v500, %v1078
    %v1125 = vsub.f32 %v505, %v1081
    %v1126 = vsub.f32 %v581, %v1084
    %v1127 = vsub.f32 %v586, %v1087
    %v1128 = vsub.f32 %v662, %v1090
    %v1129 = vsub.f32 %v667, %v1093
    %v1130 = vsub.f32 %v743, %v1096
    %v1131 = vsub.f32 %v748, %v1099
    %v1132 = vsub.f32 %v824, %v1102
    %v1133 = vsub.f32 %v829, %v1105
    %v1134 = vsub.f32 %v905, %v1108
    %v1135 = vsub.f32 %v910, %v1111
    %v1136 = vsub.f32 %v986, %v1114
    %v1137 = vsub.f32 %v991, %v1117
    %v1138 = vsub.f32 %v1067, %v1120
    %v1139 = vsub.f32 %v1072, %v1123
    %v1140 = vmul.f32 %v1124, 1.442695
    %v1141 = vpow.pop %v1140
    %v1142 = vmul.f32 %v1125, 1.442695
    %v1143 = vpow.pop %v1142
    %v1144 = vmul.f32 %v1126, 1.442695
    %v1145 = vpow.pop %v1144
    %v1146 = vmul.f32 %v1127, 1.442695
    %v1147 = vpow.pop %v1146
    %v1148 = vmul.f32 %v1128, 1.442695
    %v1149 = vpow.pop %v1148
    %v1150 = vmul.f32 %v1129, 1.442695
    %v1151 = vpow.pop %v1150
    %v1152 = vmul.f32 %v1130, 1.442695
    %v1153 = vpow.pop %v1152
    %v1154 = vmul.f32 %v1131, 1.442695
    %v1155 = vpow.pop %v1154
    %v1156 = vmul.f32 %v1132, 1.442695
    %v1157 = vpow.pop %v1156
    %v1158 = vmul.f32 %v1133, 1.442695
    %v1159 = vpow.pop %v1158
    %v1160 = vmul.f32 %v1134, 1.442695
    %v1161 = vpow.pop %v1160
    %v1162 = vmul.f32 %v1135, 1.442695
    %v1163 = vpow.pop %v1162
    %v1164 = vmul.f32 %v1136, 1.442695
    %v1165 = vpow.pop %v1164
    %v1166 = vmul.f32 %v1137, 1.442695
    %v1167 = vpow.pop %v1166
    %v1168 = vmul.f32 %v1138, 1.442695
    %v1169 = vpow.pop %v1168
    %v1170 = vmul.f32 %v1139, 1.442695
    %v1171 = vpow.pop %v1170
    %v1172 = vsel %vm1075, %v1141, 0.0
    %1173 = vadd.xlane.f32.xlu0 %v1172
    %v1174 = vpop.xlane.xlu0 %1173
    %v1175 = vsel %vm1075, %v1143, 0.0
    %1176 = vadd.xlane.f32.xlu0 %v1175
    %v1177 = vpop.xlane.xlu0 %1176
    %v1178 = vsel %vm1075, %v1145, 0.0
    %1179 = vadd.xlane.f32.xlu0 %v1178
    %v1180 = vpop.xlane.xlu0 %1179
    %v1181 = vsel %vm1075, %v1147, 0.0
    %1182 = vadd.xlane.f32.xlu0 %v1181
    %v1183 = vpop.xlane.xlu0 %1182
    %v1184 = vsel %vm1075, %v1149, 0.0
    %1185 = vadd.xlane.f32.xlu0 %v1184
    %v1186 = vpop.xlane.xlu0 %1185
    %v1187 = vsel %vm1075, %v1151, 0.0
    %1188 = vadd.xlane.f32.xlu0 %v1187
    %v1189 = vpop.xlane.xlu0 %1188
    %v1190 = vsel %vm1075, %v1153, 0.0
    %1191 = vadd.xlane.f32.xlu0 %v1190
    %v1192 = vpop.xlane.xlu0 %1191
    %v1193 = vsel %vm1075, %v1155, 0.0
    %1194 = vadd.xlane.f32.xlu0 %v1193
    %v1195 = vpop.xlane.xlu0 %1194
    %v1196 = vsel %vm1075, %v1157, 0.0
    %1197 = vadd.xlane.f32.xlu0 %v1196
    %v1198 = vpop.xlane.xlu0 %1197
    %v1199 = vsel %vm1075, %v1159, 0.0
    %1200 = vadd.xlane.f32.xlu0 %v1199
    %v1201 = vpop.xlane.xlu0 %1200
    %v1202 = vsel %vm1075, %v1161, 0.0
    %1203 = vadd.xlane.f32.xlu0 %v1202
    %v1204 = vpop.xlane.xlu0 %1203
    %v1205 = vsel %vm1075, %v1163, 0.0
    %1206 = vadd.xlane.f32.xlu0 %v1205
    %v1207 = vpop.xlane.xlu0 %1206
    %v1208 = vsel %vm1075, %v1165, 0.0
    %1209 = vadd.xlane.f32.xlu0 %v1208
    %v1210 = vpop.xlane.xlu0 %1209
    %v1211 = vsel %vm1075, %v1167, 0.0
    %1212 = vadd.xlane.f32.xlu0 %v1211
    %v1213 = vpop.xlane.xlu0 %1212
    %v1214 = vsel %vm1075, %v1169, 0.0
    %1215 = vadd.xlane.f32.xlu0 %v1214
    %v1216 = vpop.xlane.xlu0 %1215
    %v1217 = vsel %vm1075, %v1171, 0.0
    %1218 = vadd.xlane.f32.xlu0 %v1217
    %v1219 = vpop.xlane.xlu0 %1218
    %v1220 = vrcp.pop %v1174
    %v1221 = vmul.f32 %v1141, %v1220
    %v1222 = vrcp.pop %v1177
    %v1223 = vmul.f32 %v1143, %v1222
    %v1224 = vrcp.pop %v1180
    %v1225 = vmul.f32 %v1145, %v1224
    %v1226 = vrcp.pop %v1183
    %v1227 = vmul.f32 %v1147, %v1226
    %v1228 = vrcp.pop %v1186
    %v1229 = vmul.f32 %v1149, %v1228
    %v1230 = vrcp.pop %v1189
    %v1231 = vmul.f32 %v1151, %v1230
    %v1232 = vrcp.pop %v1192
    %v1233 = vmul.f32 %v1153, %v1232
    %v1234 = vrcp.pop %v1195
    %v1235 = vmul.f32 %v1155, %v1234
    %v1236 = vrcp.pop %v1198
    %v1237 = vmul.f32 %v1157, %v1236
    %v1238 = vrcp.pop %v1201
    %v1239 = vmul.f32 %v1159, %v1238
    %v1240 = vrcp.pop %v1204
    %v1241 = vmul.f32 %v1161, %v1240
    %v1242 = vrcp.pop %v1207
    %v1243 = vmul.f32 %v1163, %v1242
    %v1244 = vrcp.pop %v1210
    %v1245 = vmul.f32 %v1165, %v1244
    %v1246 = vrcp.pop %v1213
    %v1247 = vmul.f32 %v1167, %v1246
    %v1248 = vrcp.pop %v1216
    %v1249 = vmul.f32 %v1169, %v1248
    %v1250 = vrcp.pop %v1219
    %v1251 = vmul.f32 %v1171, %v1250
    %v1253 = vsel %vm1075, %v1221, 0
    %v1256 = vsel %vm1075, %v1223, 0
    %1258 = vmatprep.subr.mxu0 0.0
    %1259 = vmatpush1.msra.mxu0 %v357
    %1260 = vmatprep.subr.mxu0 0.0
    %1261 = vmatpush1.msra.mxu0 0.0
    %1262 = vmatprep.subr.mxu0 0.0
    %1263 = vmatpush1.msra.mxu0 0.0
    %1264 = vmatprep.subr.mxu0 0.0
    %1265 = vmatpush1.msra.mxu0 0.0
    %1266 = vmatprep.subr.mxu0 0.0
    %1267 = vmatpush1.msra.mxu0 0.0
    %1268 = vmatprep.subr.mxu0 0.0
    %1269 = vmatpush1.msra.mxu0 0.0
    %1270 = vmatprep.subr.mxu0 0.0
    %1271 = vmatpush1.msra.mxu0 0.0
    %1272 = vmatprep.subr.mxu0 0.0
    %1273 = vmatpush1.msra.mxu0 0.0
    %1274 = vmatprep.subr.mxu0 0.0
    %1275 = vmatpush1.msra.mxu0 0.0
    %1276 = vmatprep.subr.mxu0 0.0
    %1277 = vmatpush1.msra.mxu0 0.0
    %1278 = vmatprep.subr.mxu0 0.0
    %1279 = vmatpush1.msra.mxu0 0.0
    %1280 = vmatprep.subr.mxu0 0.0
    %1281 = vmatpush1.msra.mxu0 0.0
    %1282 = vmatprep.subr.mxu0 0.0
    %1283 = vmatpush1.msra.mxu0 0.0
    %1284 = vmatprep.subr.mxu0 0.0
    %1285 = vmatpush1.msra.mxu0 0.0
    %1286 = vmatprep.subr.mxu0 0.0
    %1287 = vmatpush1.msra.mxu0 0.0
    %1288 = vmatprep.subr.mxu0 0.0
    %1289 = vmatpush1.msra.mxu0 0.0
    %1290 = vmatprep.subr.mxu0 0.0
    %1291 = vmatpush1.msra.mxu0 0.0
    %1292 = vmatprep.subr.mxu0 0.0
    %1293 = vmatpush1.msra.mxu0 0.0
    %1294 = vmatprep.subr.mxu0 0.0
    %1295 = vmatpush1.msra.mxu0 0.0
    %1296 = vmatprep.subr.mxu0 0.0
    %1297 = vmatpush1.msra.mxu0 0.0
    %1298 = vmatprep.subr.mxu0 0.0
    %1299 = vmatpush1.msra.mxu0 0.0
    %1300 = vmatprep.subr.mxu0 0.0
    %1301 = vmatpush1.msra.mxu0 0.0
    %1302 = vmatprep.subr.mxu0 0.0
    %1303 = vmatpush1.msra.mxu0 0.0
    %1304 = vmatprep.subr.mxu0 0.0
    %1305 = vmatpush1.msra.mxu0 0.0
    %1306 = vmatprep.subr.mxu0 0.0
    %1307 = vmatpush1.msra.mxu0 0.0
    %1308 = vmatprep.subr.mxu0 0.0
    %1309 = vmatpush1.msra.mxu0 0.0
    %1310 = vmatprep.subr.mxu0 0.0
    %1311 = vmatpush1.msra.mxu0 0.0
    %1312 = vmatprep.subr.mxu0 0.0
    %1313 = vmatpush1.msra.mxu0 0.0
    %1314 = vmatprep.subr.mxu0 0.0
    %1315 = vmatpush1.msra.mxu0 0.0
    %1316 = vmatprep.subr.mxu0 0.0
    %1317 = vmatpush1.msra.mxu0 0.0
    %1318 = vmatprep.subr.mxu0 0.0
    %1319 = vmatpush1.msra.mxu0 0.0
    %1320 = vmatprep.subr.mxu0 0.0
    %1321 = vmatpush1.msra.mxu0 0.0
    %1322 = vmatprep.mubr.f32.mxu0 0.0
    %1323 = vmatmul.mubr.f32.gmra.mrb[0].mxu0 %v1253
    %v1324 = vpop.f32.mrb[0].mxu0
    %v1325 = vadd.f32 0.0, %v1324
    %v1326 = vpop.f32.mrb[0].mxu0
    %1327 = vmatprep.mubr.f32.mxu0 0.0
    %1328 = vmatmul.mubr.f32.gmra.mrb[0].mxu0 %v1256
    %v1329 = vpop.f32.mrb[0].mxu0
    %v1330 = vadd.f32 0.0, %v1329
    %v1331 = vpop.f32.mrb[0].mxu0
    %1332 = vdwg.mxu0
    %v1334 = vsel %vm1075, %v1225, 0
    %v1337 = vsel %vm1075, %v1227, 0
    %1339 = vmatprep.subr.mxu0 0.0
    %1340 = vmatpush1.msra.mxu0 %v363
    %1341 = vmatprep.subr.mxu0 0.0
    %1342 = vmatpush1.msra.mxu0 0.0
    %1343 = vmatprep.subr.mxu0 0.0
    %1344 = vmatpush1.msra.mxu0 0.0
    %1345 = vmatprep.subr.mxu0 0.0
    %1346 = vmatpush1.msra.mxu0 0.0
    %1347 = vmatprep.subr.mxu0 0.0
    %1348 = vmatpush1.msra.mxu0 0.0
    %1349 = vmatprep.subr.mxu0 0.0
    %1350 = vmatpush1.msra.mxu0 0.0
    %1351 = vmatprep.subr.mxu0 0.0
    %1352 = vmatpush1.msra.mxu0 0.0
    %1353 = vmatprep.subr.mxu0 0.0
    %1354 = vmatpush1.msra.mxu0 0.0
    %1355 = vmatprep.subr.mxu0 0.0
    %1356 = vmatpush1.msra.mxu0 0.0
    %1357 = vmatprep.subr.mxu0 0.0
    %1358 = vmatpush1.msra.mxu0 0.0
    %1359 = vmatprep.subr.mxu0 0.0
    %1360 = vmatpush1.msra.mxu0 0.0
    %1361 = vmatprep.subr.mxu0 0.0
    %1362 = vmatpush1.msra.mxu0 0.0
    %1363 = vmatprep.subr.mxu0 0.0
    %1364 = vmatpush1.msra.mxu0 0.0
    %1365 = vmatprep.subr.mxu0 0.0
    %1366 = vmatpush1.msra.mxu0 0.0
    %1367 = vmatprep.subr.mxu0 0.0
    %1368 = vmatpush1.msra.mxu0 0.0
    %1369 = vmatprep.subr.mxu0 0.0
    %1370 = vmatpush1.msra.mxu0 0.0
    %1371 = vmatprep.subr.mxu0 0.0
    %1372 = vmatpush1.msra.mxu0 0.0
    %1373 = vmatprep.subr.mxu0 0.0
    %1374 = vmatpush1.msra.mxu0 0.0
    %1375 = vmatprep.subr.mxu0 0.0
    %1376 = vmatpush1.msra.mxu0 0.0
    %1377 = vmatprep.subr.mxu0 0.0
    %1378 = vmatpush1.msra.mxu0 0.0
    %1379 = vmatprep.subr.mxu0 0.0
    %1380 = vmatpush1.msra.mxu0 0.0
    %1381 = vmatprep.subr.mxu0 0.0
    %1382 = vmatpush1.msra.mxu0 0.0
    %1383 = vmatprep.subr.mxu0 0.0
    %1384 = vmatpush1.msra.mxu0 0.0
    %1385 = vmatprep.subr.mxu0 0.0
    %1386 = vmatpush1.msra.mxu0 0.0
    %1387 = vmatprep.subr.mxu0 0.0
    %1388 = vmatpush1.msra.mxu0 0.0
    %1389 = vmatprep.subr.mxu0 0.0
    %1390 = vmatpush1.msra.mxu0 0.0
    %1391 = vmatprep.subr.mxu0 0.0
    %1392 = vmatpush1.msra.mxu0 0.0
    %1393 = vmatprep.subr.mxu0 0.0
    %1394 = vmatpush1.msra.mxu0 0.0
    %1395 = vmatprep.subr.mxu0 0.0
    %1396 = vmatpush1.msra.mxu0 0.0
    %1397 = vmatprep.subr.mxu0 0.0
    %1398 = vmatpush1.msra.mxu0 0.0
    %1399 = vmatprep.subr.mxu0 0.0
    %1400 = vmatpush1.msra.mxu0 0.0
    %1401 = vmatprep.subr.mxu0 0.0
    %1402 = vmatpush1.msra.mxu0 0.0
    %1403 = vmatprep.mubr.f32.mxu0 0.0
    %1404 = vmatmul.mubr.f32.gmra.mrb[0].mxu0 %v1334
    %v1405 = vpop.f32.mrb[0].mxu0
    %v1406 = vadd.f32 0.0, %v1405
    %v1407 = vpop.f32.mrb[0].mxu0
    %1408 = vmatprep.mubr.f32.mxu0 0.0
    %1409 = vmatmul.mubr.f32.gmra.mrb[0].mxu0 %v1337
    %v1410 = vpop.f32.mrb[0].mxu0
    %v1411 = vadd.f32 0.0, %v1410
    %v1412 = vpop.f32.mrb[0].mxu0
    %1413 = vdwg.mxu0
    %v1415 = vsel %vm1075, %v1229, 0
    %v1418 = vsel %vm1075, %v1231, 0
    %1420 = vmatprep.subr.mxu0 0.0
    %1421 = vmatpush1.msra.mxu0 %v410
    %1422 = vmatprep.subr.mxu0 0.0
    %1423 = vmatpush1.msra.mxu0 0.0
    %1424 = vmatprep.subr.mxu0 0.0
    %1425 = vmatpush1.msra.mxu0 0.0
    %1426 = vmatprep.subr.mxu0 0.0
    %1427 = vmatpush1.msra.mxu0 0.0
    %1428 = vmatprep.subr.mxu0 0.0
    %1429 = vmatpush1.msra.mxu0 0.0
    %1430 = vmatprep.subr.mxu0 0.0
    %1431 = vmatpush1.msra.mxu0 0.0
    %1432 = vmatprep.subr.mxu0 0.0
    %1433 = vmatpush1.msra.mxu0 0.0
    %1434 = vmatprep.subr.mxu0 0.0
    %1435 = vmatpush1.msra.mxu0 0.0
    %1436 = vmatprep.subr.mxu0 0.0
    %1437 = vmatpush1.msra.mxu0 0.0
    %1438 = vmatprep.subr.mxu0 0.0
    %1439 = vmatpush1.msra.mxu0 0.0
    %1440 = vmatprep.subr.mxu0 0.0
    %1441 = vmatpush1.msra.mxu0 0.0
    %1442 = vmatprep.subr.mxu0 0.0
    %1443 = vmatpush1.msra.mxu0 0.0
    %1444 = vmatprep.subr.mxu0 0.0
    %1445 = vmatpush1.msra.mxu0 0.0
    %1446 = vmatprep.subr.mxu0 0.0
    %1447 = vmatpush1.msra.mxu0 0.0
    %1448 = vmatprep.subr.mxu0 0.0
    %1449 = vmatpush1.msra.mxu0 0.0
    %1450 = vmatprep.subr.mxu0 0.0
    %1451 = vmatpush1.msra.mxu0 0.0
    %1452 = vmatprep.subr.mxu0 0.0
    %1453 = vmatpush1.msra.mxu0 0.0
    %1454 = vmatprep.subr.mxu0 0.0
    %1455 = vmatpush1.msra.mxu0 0.0
    %1456 = vmatprep.subr.mxu0 0.0
    %1457 = vmatpush1.msra.mxu0 0.0
    %1458 = vmatprep.subr.mxu0 0.0
    %1459 = vmatpush1.msra.mxu0 0.0
    %1460 = vmatprep.subr.mxu0 0.0
    %1461 = vmatpush1.msra.mxu0 0.0
    %1462 = vmatprep.subr.mxu0 0.0
    %1463 = vmatpush1.msra.mxu0 0.0
    %1464 = vmatprep.subr.mxu0 0.0
    %1465 = vmatpush1.msra.mxu0 0.0
    %1466 = vmatprep.subr.mxu0 0.0
    %1467 = vmatpush1.msra.mxu0 0.0
    %1468 = vmatprep.subr.mxu0 0.0
    %1469 = vmatpush1.msra.mxu0 0.0
    %1470 = vmatprep.subr.mxu0 0.0
    %1471 = vmatpush1.msra.mxu0 0.0
    %1472 = vmatprep.subr.mxu0 0.0
    %1473 = vmatpush1.msra.mxu0 0.0
    %1474 = vmatprep.subr.mxu0 0.0
    %1475 = vmatpush1.msra.mxu0 0.0
    %1476 = vmatprep.subr.mxu0 0.0
    %1477 = vmatpush1.msra.mxu0 0.0
    %1478 = vmatprep.subr.mxu0 0.0
    %1479 = vmatpush1.msra.mxu0 0.0
    %1480 = vmatprep.subr.mxu0 0.0
    %1481 = vmatpush1.msra.mxu0 0.0
    %1482 = vmatprep.subr.mxu0 0.0
    %1483 = vmatpush1.msra.mxu0 0.0
    %1484 = vmatprep.mubr.f32.mxu0 0.0
    %1485 = vmatmul.mubr.f32.gmra.mrb[0].mxu0 %v1415
    %v1486 = vpop.f32.mrb[0].mxu0
    %v1487 = vadd.f32 0.0, %v1486
    %v1488 = vpop.f32.mrb[0].mxu0
    %1489 = vmatprep.mubr.f32.mxu0 0.0
    %1490 = vmatmul.mubr.f32.gmra.mrb[0].mxu0 %v1418
    %v1491 = vpop.f32.mrb[0].mxu0
    %v1492 = vadd.f32 0.0, %v1491
    %v1493 = vpop.f32.mrb[0].mxu0
    %1494 = vdwg.mxu0
    %v1496 = vsel %vm1075, %v1233, 0
    %v1499 = vsel %vm1075, %v1235, 0
    %1501 = vmatprep.subr.mxu0 0.0
    %1502 = vmatpush1.msra.mxu0 %v412
    %1503 = vmatprep.subr.mxu0 0.0
    %1504 = vmatpush1.msra.mxu0 0.0
    %1505 = vmatprep.subr.mxu0 0.0
    %1506 = vmatpush1.msra.mxu0 0.0
    %1507 = vmatprep.subr.mxu0 0.0
    %1508 = vmatpush1.msra.mxu0 0.0
    %1509 = vmatprep.subr.mxu0 0.0
    %1510 = vmatpush1.msra.mxu0 0.0
    %1511 = vmatprep.subr.mxu0 0.0
    %1512 = vmatpush1.msra.mxu0 0.0
    %1513 = vmatprep.subr.mxu0 0.0
    %1514 = vmatpush1.msra.mxu0 0.0
    %1515 = vmatprep.subr.mxu0 0.0
    %1516 = vmatpush1.msra.mxu0 0.0
    %1517 = vmatprep.subr.mxu0 0.0
    %1518 = vmatpush1.msra.mxu0 0.0
    %1519 = vmatprep.subr.mxu0 0.0
    %1520 = vmatpush1.msra.mxu0 0.0
    %1521 = vmatprep.subr.mxu0 0.0
    %1522 = vmatpush1.msra.mxu0 0.0
    %1523 = vmatprep.subr.mxu0 0.0
    %1524 = vmatpush1.msra.mxu0 0.0
    %1525 = vmatprep.subr.mxu0 0.0
    %1526 = vmatpush1.msra.mxu0 0.0
    %1527 = vmatprep.subr.mxu0 0.0
    %1528 = vmatpush1.msra.mxu0 0.0
    %1529 = vmatprep.subr.mxu0 0.0
    %1530 = vmatpush1.msra.mxu0 0.0
    %1531 = vmatprep.subr.mxu0 0.0
    %1532 = vmatpush1.msra.mxu0 0.0
    %1533 = vmatprep.subr.mxu0 0.0
    %1534 = vmatpush1.msra.mxu0 0.0
    %1535 = vmatprep.subr.mxu0 0.0
    %1536 = vmatpush1.msra.mxu0 0.0
    %1537 = vmatprep.subr.mxu0 0.0
    %1538 = vmatpush1.msra.mxu0 0.0
    %1539 = vmatprep.subr.mxu0 0.0
    %1540 = vmatpush1.msra.mxu0 0.0
    %1541 = vmatprep.subr.mxu0 0.0
    %1542 = vmatpush1.msra.mxu0 0.0
    %1543 = vmatprep.subr.mxu0 0.0
    %1544 = vmatpush1.msra.mxu0 0.0
    %1545 = vmatprep.subr.mxu0 0.0
    %1546 = vmatpush1.msra.mxu0 0.0
    %1547 = vmatprep.subr.mxu0 0.0
    %1548 = vmatpush1.msra.mxu0 0.0
    %1549 = vmatprep.subr.mxu0 0.0
    %1550 = vmatpush1.msra.mxu0 0.0
    %1551 = vmatprep.subr.mxu0 0.0
    %1552 = vmatpush1.msra.mxu0 0.0
    %1553 = vmatprep.subr.mxu0 0.0
    %1554 = vmatpush1.msra.mxu0 0.0
    %1555 = vmatprep.subr.mxu0 0.0
    %1556 = vmatpush1.msra.mxu0 0.0
    %1557 = vmatprep.subr.mxu0 0.0
    %1558 = vmatpush1.msra.mxu0 0.0
    %1559 = vmatprep.subr.mxu0 0.0
    %1560 = vmatpush1.msra.mxu0 0.0
    %1561 = vmatprep.subr.mxu0 0.0
    %1562 = vmatpush1.msra.mxu0 0.0
    %1563 = vmatprep.subr.mxu0 0.0
    %1564 = vmatpush1.msra.mxu0 0.0
    %1565 = vmatprep.mubr.f32.mxu0 0.0
    %1566 = vmatmul.mubr.f32.gmra.mrb[0].mxu0 %v1496
    %v1567 = vpop.f32.mrb[0].mxu0
    %v1568 = vadd.f32 0.0, %v1567
    %v1569 = vpop.f32.mrb[0].mxu0
    %1570 = vmatprep.mubr.f32.mxu0 0.0
    %1571 = vmatmul.mubr.f32.gmra.mrb[0].mxu0 %v1499
    %v1572 = vpop.f32.mrb[0].mxu0
    %v1573 = vadd.f32 0.0, %v1572
    %v1574 = vpop.f32.mrb[0].mxu0
    %1575 = vdwg.mxu0
    %v1577 = vsel %vm1075, %v1237, 0
    %v1580 = vsel %vm1075, %v1239, 0
    %1582 = vmatprep.subr.mxu0 0.0
    %1583 = vmatpush1.msra.mxu0 %v416
    %1584 = vmatprep.subr.mxu0 0.0
    %1585 = vmatpush1.msra.mxu0 0.0
    %1586 = vmatprep.subr.mxu0 0.0
    %1587 = vmatpush1.msra.mxu0 0.0
    %1588 = vmatprep.subr.mxu0 0.0
    %1589 = vmatpush1.msra.mxu0 0.0
    %1590 = vmatprep.subr.mxu0 0.0
    %1591 = vmatpush1.msra.mxu0 0.0
    %1592 = vmatprep.subr.mxu0 0.0
    %1593 = vmatpush1.msra.mxu0 0.0
    %1594 = vmatprep.subr.mxu0 0.0
    %1595 = vmatpush1.msra.mxu0 0.0
    %1596 = vmatprep.subr.mxu0 0.0
    %1597 = vmatpush1.msra.mxu0 0.0
    %1598 = vmatprep.subr.mxu0 0.0
    %1599 = vmatpush1.msra.mxu0 0.0
    %1600 = vmatprep.subr.mxu0 0.0
    %1601 = vmatpush1.msra.mxu0 0.0
    %1602 = vmatprep.subr.mxu0 0.0
    %1603 = vmatpush1.msra.mxu0 0.0
    %1604 = vmatprep.subr.mxu0 0.0
    %1605 = vmatpush1.msra.mxu0 0.0
    %1606 = vmatprep.subr.mxu0 0.0
    %1607 = vmatpush1.msra.mxu0 0.0
    %1608 = vmatprep.subr.mxu0 0.0
    %1609 = vmatpush1.msra.mxu0 0.0
    %1610 = vmatprep.subr.mxu0 0.0
    %1611 = vmatpush1.msra.mxu0 0.0
    %1612 = vmatprep.subr.mxu0 0.0
    %1613 = vmatpush1.msra.mxu0 0.0
    %1614 = vmatprep.subr.mxu0 0.0
    %1615 = vmatpush1.msra.mxu0 0.0
    %1616 = vmatprep.subr.mxu0 0.0
    %1617 = vmatpush1.msra.mxu0 0.0
    %1618 = vmatprep.subr.mxu0 0.0
    %1619 = vmatpush1.msra.mxu0 0.0
    %1620 = vmatprep.subr.mxu0 0.0
    %1621 = vmatpush1.msra.mxu0 0.0
    %1622 = vmatprep.subr.mxu0 0.0
    %1623 = vmatpush1.msra.mxu0 0.0
    %1624 = vmatprep.subr.mxu0 0.0
    %1625 = vmatpush1.msra.mxu0 0.0
    %1626 = vmatprep.subr.mxu0 0.0
    %1627 = vmatpush1.msra.mxu0 0.0
    %1628 = vmatprep.subr.mxu0 0.0
    %1629 = vmatpush1.msra.mxu0 0.0
    %1630 = vmatprep.subr.mxu0 0.0
    %1631 = vmatpush1.msra.mxu0 0.0
    %1632 = vmatprep.subr.mxu0 0.0
    %1633 = vmatpush1.msra.mxu0 0.0
    %1634 = vmatprep.subr.mxu0 0.0
    %1635 = vmatpush1.msra.mxu0 0.0
    %1636 = vmatprep.subr.mxu0 0.0
    %1637 = vmatpush1.msra.mxu0 0.0
    %1638 = vmatprep.subr.mxu0 0.0
    %1639 = vmatpush1.msra.mxu0 0.0
    %1640 = vmatprep.subr.mxu0 0.0
    %1641 = vmatpush1.msra.mxu0 0.0
    %1642 = vmatprep.subr.mxu0 0.0
    %1643 = vmatpush1.msra.mxu0 0.0
    %1644 = vmatprep.subr.mxu0 0.0
    %1645 = vmatpush1.msra.mxu0 0.0
    %1646 = vmatprep.mubr.f32.mxu0 0.0
    %1647 = vmatmul.mubr.f32.gmra.mrb[0].mxu0 %v1577
    %v1648 = vpop.f32.mrb[0].mxu0
    %v1649 = vadd.f32 0.0, %v1648
    %v1650 = vpop.f32.mrb[0].mxu0
    %1651 = vmatprep.mubr.f32.mxu0 0.0
    %1652 = vmatmul.mubr.f32.gmra.mrb[0].mxu0 %v1580
    %v1653 = vpop.f32.mrb[0].mxu0
    %v1654 = vadd.f32 0.0, %v1653
    %v1655 = vpop.f32.mrb[0].mxu0
    %1656 = vdwg.mxu0
    %v1658 = vsel %vm1075, %v1241, 0
    %v1661 = vsel %vm1075, %v1243, 0
    %1663 = vmatprep.subr.mxu0 0.0
    %1664 = vmatpush1.msra.mxu0 %v418
    %1665 = vmatprep.subr.mxu0 0.0
    %1666 = vmatpush1.msra.mxu0 0.0
    %1667 = vmatprep.subr.mxu0 0.0
    %1668 = vmatpush1.msra.mxu0 0.0
    %1669 = vmatprep.subr.mxu0 0.0
    %1670 = vmatpush1.msra.mxu0 0.0
    %1671 = vmatprep.subr.mxu0 0.0
    %1672 = vmatpush1.msra.mxu0 0.0
    %1673 = vmatprep.subr.mxu0 0.0
    %1674 = vmatpush1.msra.mxu0 0.0
    %1675 = vmatprep.subr.mxu0 0.0
    %1676 = vmatpush1.msra.mxu0 0.0
    %1677 = vmatprep.subr.mxu0 0.0
    %1678 = vmatpush1.msra.mxu0 0.0
    %1679 = vmatprep.subr.mxu0 0.0
    %1680 = vmatpush1.msra.mxu0 0.0
    %1681 = vmatprep.subr.mxu0 0.0
    %1682 = vmatpush1.msra.mxu0 0.0
    %1683 = vmatprep.subr.mxu0 0.0
    %1684 = vmatpush1.msra.mxu0 0.0
    %1685 = vmatprep.subr.mxu0 0.0
    %1686 = vmatpush1.msra.mxu0 0.0
    %1687 = vmatprep.subr.mxu0 0.0
    %1688 = vmatpush1.msra.mxu0 0.0
    %1689 = vmatprep.subr.mxu0 0.0
    %1690 = vmatpush1.msra.mxu0 0.0
    %1691 = vmatprep.subr.mxu0 0.0
    %1692 = vmatpush1.msra.mxu0 0.0
    %1693 = vmatprep.subr.mxu0 0.0
    %1694 = vmatpush1.msra.mxu0 0.0
    %1695 = vmatprep.subr.mxu0 0.0
    %1696 = vmatpush1.msra.mxu0 0.0
    %1697 = vmatprep.subr.mxu0 0.0
    %1698 = vmatpush1.msra.mxu0 0.0
    %1699 = vmatprep.subr.mxu0 0.0
    %1700 = vmatpush1.msra.mxu0 0.0
    %1701 = vmatprep.subr.mxu0 0.0
    %1702 = vmatpush1.msra.mxu0 0.0
    %1703 = vmatprep.subr.mxu0 0.0
    %1704 = vmatpush1.msra.mxu0 0.0
    %1705 = vmatprep.subr.mxu0 0.0
    %1706 = vmatpush1.msra.mxu0 0.0
    %1707 = vmatprep.subr.mxu0 0.0
    %1708 = vmatpush1.msra.mxu0 0.0
    %1709 = vmatprep.subr.mxu0 0.0
    %1710 = vmatpush1.msra.mxu0 0.0
    %1711 = vmatprep.subr.mxu0 0.0
    %1712 = vmatpush1.msra.mxu0 0.0
    %1713 = vmatprep.subr.mxu0 0.0
    %1714 = vmatpush1.msra.mxu0 0.0
    %1715 = vmatprep.subr.mxu0 0.0
    %1716 = vmatpush1.msra.mxu0 0.0
    %1717 = vmatprep.subr.mxu0 0.0
    %1718 = vmatpush1.msra.mxu0 0.0
    %1719 = vmatprep.subr.mxu0 0.0
    %1720 = vmatpush1.msra.mxu0 0.0
    %1721 = vmatprep.subr.mxu0 0.0
    %1722 = vmatpush1.msra.mxu0 0.0
    %1723 = vmatprep.subr.mxu0 0.0
    %1724 = vmatpush1.msra.mxu0 0.0
    %1725 = vmatprep.subr.mxu0 0.0
    %1726 = vmatpush1.msra.mxu0 0.0
    %1727 = vmatprep.mubr.f32.mxu0 0.0
    %1728 = vmatmul.mubr.f32.gmra.mrb[0].mxu0 %v1658
    %v1729 = vpop.f32.mrb[0].mxu0
    %v1730 = vadd.f32 0.0, %v1729
    %v1731 = vpop.f32.mrb[0].mxu0
    %1732 = vmatprep.mubr.f32.mxu0 0.0
    %1733 = vmatmul.mubr.f32.gmra.mrb[0].mxu0 %v1661
    %v1734 = vpop.f32.mrb[0].mxu0
    %v1735 = vadd.f32 0.0, %v1734
    %v1736 = vpop.f32.mrb[0].mxu0
    %1737 = vdwg.mxu0
    %v1739 = vsel %vm1075, %v1245, 0
    %v1742 = vsel %vm1075, %v1247, 0
    %1744 = vmatprep.subr.mxu0 0.0
    %1745 = vmatpush1.msra.mxu0 %v422
    %1746 = vmatprep.subr.mxu0 0.0
    %1747 = vmatpush1.msra.mxu0 0.0
    %1748 = vmatprep.subr.mxu0 0.0
    %1749 = vmatpush1.msra.mxu0 0.0
    %1750 = vmatprep.subr.mxu0 0.0
    %1751 = vmatpush1.msra.mxu0 0.0
    %1752 = vmatprep.subr.mxu0 0.0
    %1753 = vmatpush1.msra.mxu0 0.0
    %1754 = vmatprep.subr.mxu0 0.0
    %1755 = vmatpush1.msra.mxu0 0.0
    %1756 = vmatprep.subr.mxu0 0.0
    %1757 = vmatpush1.msra.mxu0 0.0
    %1758 = vmatprep.subr.mxu0 0.0
    %1759 = vmatpush1.msra.mxu0 0.0
    %1760 = vmatprep.subr.mxu0 0.0
    %1761 = vmatpush1.msra.mxu0 0.0
    %1762 = vmatprep.subr.mxu0 0.0
    %1763 = vmatpush1.msra.mxu0 0.0
    %1764 = vmatprep.subr.mxu0 0.0
    %1765 = vmatpush1.msra.mxu0 0.0
    %1766 = vmatprep.subr.mxu0 0.0
    %1767 = vmatpush1.msra.mxu0 0.0
    %1768 = vmatprep.subr.mxu0 0.0
    %1769 = vmatpush1.msra.mxu0 0.0
    %1770 = vmatprep.subr.mxu0 0.0
    %1771 = vmatpush1.msra.mxu0 0.0
    %1772 = vmatprep.subr.mxu0 0.0
    %1773 = vmatpush1.msra.mxu0 0.0
    %1774 = vmatprep.subr.mxu0 0.0
    %1775 = vmatpush1.msra.mxu0 0.0
    %1776 = vmatprep.subr.mxu0 0.0
    %1777 = vmatpush1.msra.mxu0 0.0
    %1778 = vmatprep.subr.mxu0 0.0
    %1779 = vmatpush1.msra.mxu0 0.0
    %1780 = vmatprep.subr.mxu0 0.0
    %1781 = vmatpush1.msra.mxu0 0.0
    %1782 = vmatprep.subr.mxu0 0.0
    %1783 = vmatpush1.msra.mxu0 0.0
    %1784 = vmatprep.subr.mxu0 0.0
    %1785 = vmatpush1.msra.mxu0 0.0
    %1786 = vmatprep.subr.mxu0 0.0
    %1787 = vmatpush1.msra.mxu0 0.0
    %1788 = vmatprep.subr.mxu0 0.0
    %1789 = vmatpush1.msra.mxu0 0.0
    %1790 = vmatprep.subr.mxu0 0.0
    %1791 = vmatpush1.msra.mxu0 0.0
    %1792 = vmatprep.subr.mxu0 0.0
    %1793 = vmatpush1.msra.mxu0 0.0
    %1794 = vmatprep.subr.mxu0 0.0
    %1795 = vmatpush1.msra.mxu0 0.0
    %1796 = vmatprep.subr.mxu0 0.0
    %1797 = vmatpush1.msra.mxu0 0.0
    %1798 = vmatprep.subr.mxu0 0.0
    %1799 = vmatpush1.msra.mxu0 0.0
    %1800 = vmatprep.subr.mxu0 0.0
    %1801 = vmatpush1.msra.mxu0 0.0
    %1802 = vmatprep.subr.mxu0 0.0
    %1803 = vmatpush1.msra.mxu0 0.0
    %1804 = vmatprep.subr.mxu0 0.0
    %1805 = vmatpush1.msra.mxu0 0.0
    %1806 = vmatprep.subr.mxu0 0.0
    %1807 = vmatpush1.msra.mxu0 0.0
    %1808 = vmatprep.mubr.f32.mxu0 0.0
    %1809 = vmatmul.mubr.f32.gmra.mrb[0].mxu0 %v1739
    %v1810 = vpop.f32.mrb[0].mxu0
    %v1811 = vadd.f32 0.0, %v1810
    %v1812 = vpop.f32.mrb[0].mxu0
    %1813 = vmatprep.mubr.f32.mxu0 0.0
    %1814 = vmatmul.mubr.f32.gmra.mrb[0].mxu0 %v1742
    %v1815 = vpop.f32.mrb[0].mxu0
    %v1816 = vadd.f32 0.0, %v1815
    %v1817 = vpop.f32.mrb[0].mxu0
    %1818 = vdwg.mxu0
    %v1820 = vsel %vm1075, %v1249, 0
    %v1823 = vsel %vm1075, %v1251, 0
    %1825 = vmatprep.subr.mxu0 0.0
    %1826 = vmatpush1.msra.mxu0 %v424
    %1827 = vmatprep.subr.mxu0 0.0
    %1828 = vmatpush1.msra.mxu0 0.0
    %1829 = vmatprep.subr.mxu0 0.0
    %1830 = vmatpush1.msra.mxu0 0.0
    %1831 = vmatprep.subr.mxu0 0.0
    %1832 = vmatpush1.msra.mxu0 0.0
    %1833 = vmatprep.subr.mxu0 0.0
    %1834 = vmatpush1.msra.mxu0 0.0
    %1835 = vmatprep.subr.mxu0 0.0
    %1836 = vmatpush1.msra.mxu0 0.0
    %1837 = vmatprep.subr.mxu0 0.0
    %1838 = vmatpush1.msra.mxu0 0.0
    %1839 = vmatprep.subr.mxu0 0.0
    %1840 = vmatpush1.msra.mxu0 0.0
    %1841 = vmatprep.subr.mxu0 0.0
    %1842 = vmatpush1.msra.mxu0 0.0
    %1843 = vmatprep.subr.mxu0 0.0
    %1844 = vmatpush1.msra.mxu0 0.0
    %1845 = vmatprep.subr.mxu0 0.0
    %1846 = vmatpush1.msra.mxu0 0.0
    %1847 = vmatprep.subr.mxu0 0.0
    %1848 = vmatpush1.msra.mxu0 0.0
    %1849 = vmatprep.subr.mxu0 0.0
    %1850 = vmatpush1.msra.mxu0 0.0
    %1851 = vmatprep.subr.mxu0 0.0
    %1852 = vmatpush1.msra.mxu0 0.0
    %1853 = vmatprep.subr.mxu0 0.0
    %1854 = vmatpush1.msra.mxu0 0.0
    %1855 = vmatprep.subr.mxu0 0.0
    %1856 = vmatpush1.msra.mxu0 0.0
    %1857 = vmatprep.subr.mxu0 0.0
    %1858 = vmatpush1.msra.mxu0 0.0
    %1859 = vmatprep.subr.mxu0 0.0
    %1860 = vmatpush1.msra.mxu0 0.0
    %1861 = vmatprep.subr.mxu0 0.0
    %1862 = vmatpush1.msra.mxu0 0.0
    %1863 = vmatprep.subr.mxu0 0.0
    %1864 = vmatpush1.msra.mxu0 0.0
    %1865 = vmatprep.subr.mxu0 0.0
    %1866 = vmatpush1.msra.mxu0 0.0
    %1867 = vmatprep.subr.mxu0 0.0
    %1868 = vmatpush1.msra.mxu0 0.0
    %1869 = vmatprep.subr.mxu0 0.0
    %1870 = vmatpush1.msra.mxu0 0.0
    %1871 = vmatprep.subr.mxu0 0.0
    %1872 = vmatpush1.msra.mxu0 0.0
    %1873 = vmatprep.subr.mxu0 0.0
    %1874 = vmatpush1.msra.mxu0 0.0
    %1875 = vmatprep.subr.mxu0 0.0
    %1876 = vmatpush1.msra.mxu0 0.0
    %1877 = vmatprep.subr.mxu0 0.0
    %1878 = vmatpush1.msra.mxu0 0.0
    %1879 = vmatprep.subr.mxu0 0.0
    %1880 = vmatpush1.msra.mxu0 0.0
    %1881 = vmatprep.subr.mxu0 0.0
    %1882 = vmatpush1.msra.mxu0 0.0
    %1883 = vmatprep.subr.mxu0 0.0
    %1884 = vmatpush1.msra.mxu0 0.0
    %1885 = vmatprep.subr.mxu0 0.0
    %1886 = vmatpush1.msra.mxu0 0.0
    %1887 = vmatprep.subr.mxu0 0.0
    %1888 = vmatpush1.msra.mxu0 0.0
    %1889 = vmatprep.mubr.f32.mxu0 0.0
    %1890 = vmatmul.mubr.f32.gmra.mrb[0].mxu0 %v1820
    %v1891 = vpop.f32.mrb[0].mxu0
    %v1892 = vadd.f32 0.0, %v1891
    %v1893 = vpop.f32.mrb[0].mxu0
    %1894 = vmatprep.mubr.f32.mxu0 0.0
    %1895 = vmatmul.mubr.f32.gmra.mrb[0].mxu0 %v1823
    %v1896 = vpop.f32.mrb[0].mxu0
    %v1897 = vadd.f32 0.0, %v1896
    %v1898 = vpop.f32.mrb[0].mxu0
    %1899 = vdwg.mxu0
    %1904 = vrot.lane.b32.xlu0 %v1487, 32
    %v1905 = vpop.permute.xlu0 %1904
    %1906 = vrot.lane.b32.xlu0 %v1492, 32
    %v1907 = vpop.permute.xlu0 %1906
    %1908 = vrot.lane.b32.xlu0 %v1568, 32
    %v1909 = vpop.permute.xlu0 %1908
    %1910 = vrot.lane.b32.xlu0 %v1573, 32
    %v1911 = vpop.permute.xlu0 %1910
    %1920 = vrot.lane.b32.xlu0 %v1649, 64
    %v1921 = vpop.permute.xlu0 %1920
    %1922 = vrot.lane.b32.xlu0 %v1654, 64
    %v1923 = vpop.permute.xlu0 %1922
    %1924 = vrot.lane.b32.xlu0 %v1730, 64
    %v1925 = vpop.permute.xlu0 %1924
    %1926 = vrot.lane.b32.xlu0 %v1735, 64
    %v1927 = vpop.permute.xlu0 %1926
    %1936 = vrot.lane.b32.xlu0 %v1811, 96
    %v1937 = vpop.permute.xlu0 %1936
    %1938 = vrot.lane.b32.xlu0 %v1816, 96
    %v1939 = vpop.permute.xlu0 %1938
    %1940 = vrot.lane.b32.xlu0 %v1892, 96
    %v1941 = vpop.permute.xlu0 %1940
    %1942 = vrot.lane.b32.xlu0 %v1897, 96
    %v1943 = vpop.permute.xlu0 %1942
    %v1948 = vsel %vm47, %v1325, %v1905
    %v1949 = vsel %vm47, %v1330, %v1907
    %v1950 = vsel %vm47, %v1406, %v1909
    %v1951 = vsel %vm47, %v1411, %v1911
    %vm1952 = vcmask 523264
    %v1953 = vsel %vm1952, %v1948, %v1921
    %v1954 = vsel %vm1952, %v1949, %v1923
    %v1955 = vsel %vm1952, %v1950, %v1925
    %v1956 = vsel %vm1952, %v1951, %v1927
    %vm1957 = vcmask 785408
    %v1958 = vsel %vm1957, %v1953, %v1937
    %v1959 = vsel %vm1957, %v1954, %v1939
    %v1960 = vsel %vm1957, %v1955, %v1941
    %v1961 = vsel %vm1957, %v1956, %v1943
    %v1962 = vld [vmem:[%s6] sm:$0xff]
    %v1963 = vld [vmem:[%s6 + $0x8] sm:$0xff]
    %v1964 = vld [vmem:[%s6 + $0x10] sm:$0xff]
    %v1965 = vld [vmem:[%s6 + $0x18] sm:$0xff]
    %v1966 = vld [vmem:[%s6 + $0x20] sm:$0xff]
    %v1967 = vld [vmem:[%s6 + $0x28] sm:$0xff]
    %v1968 = vld [vmem:[%s6 + $0x30] sm:$0xff]
    %v1969 = vld [vmem:[%s6 + $0x38] sm:$0xff]
    %v1970 = vld [vmem:[%s6 + $0x40] sm:$0xff]
    %v1971 = vld [vmem:[%s6 + $0x48] sm:$0xff]
    %v1972 = vld [vmem:[%s6 + $0x50] sm:$0xff]
    %v1973 = vld [vmem:[%s6 + $0x58] sm:$0xff]
    %v1974 = vld [vmem:[%s6 + $0x60] sm:$0xff]
    %v1975 = vld [vmem:[%s6 + $0x68] sm:$0xff]
    %v1976 = vld [vmem:[%s6 + $0x70] sm:$0xff]
    %v1977 = vld [vmem:[%s6 + $0x78] sm:$0xff]
    %v1978 = vld [vmem:[%s7] sm:$0x1]
    %v1979 = vlaneseq
    %v1980 = vshrl.u32 %v1979, 7
    %v1981 = vsub.s32 0, %v1980
    %v1982 = vrot.slane %v1978, %v1981
    %1983 = vmatprep.subr.mxu0 0.0
    %1984 = vmatpush1.msra.mxu0 %v1962
    %1985 = vmatprep.subr.mxu0 0.0
    %1986 = vmatpush1.msra.mxu0 %v1963
    %1987 = vmatprep.subr.mxu0 0.0
    %1988 = vmatpush1.msra.mxu0 %v1964
    %1989 = vmatprep.subr.mxu0 0.0
    %1990 = vmatpush1.msra.mxu0 %v1965
    %1991 = vmatprep.subr.mxu0 0.0
    %1992 = vmatpush1.msra.mxu0 %v1966
    %1993 = vmatprep.subr.mxu0 0.0
    %1994 = vmatpush1.msra.mxu0 %v1967
    %1995 = vmatprep.subr.mxu0 0.0
    %1996 = vmatpush1.msra.mxu0 %v1968
    %1997 = vmatprep.subr.mxu0 0.0
    %1998 = vmatpush1.msra.mxu0 %v1969
    %1999 = vmatprep.subr.mxu0 0.0
    %2000 = vmatpush1.msra.mxu0 %v1970
    %2001 = vmatprep.subr.mxu0 0.0
    %2002 = vmatpush1.msra.mxu0 %v1971
    %2003 = vmatprep.subr.mxu0 0.0
    %2004 = vmatpush1.msra.mxu0 %v1972
    %2005 = vmatprep.subr.mxu0 0.0
    %2006 = vmatpush1.msra.mxu0 %v1973
    %2007 = vmatprep.subr.mxu0 0.0
    %2008 = vmatpush1.msra.mxu0 %v1974
    %2009 = vmatprep.subr.mxu0 0.0
    %2010 = vmatpush1.msra.mxu0 %v1975
    %2011 = vmatprep.subr.mxu0 0.0
    %2012 = vmatpush1.msra.mxu0 %v1976
    %2013 = vmatprep.subr.mxu0 0.0
    %2014 = vmatpush1.msra.mxu0 %v1977
    %2015 = vmatprep.subr.mxu0 0.0
    %2016 = vmatpush1.msra.mxu0 0.0
    %2017 = vmatprep.subr.mxu0 0.0
    %2018 = vmatpush1.msra.mxu0 0.0
    %2019 = vmatprep.subr.mxu0 0.0
    %2020 = vmatpush1.msra.mxu0 0.0
    %2021 = vmatprep.subr.mxu0 0.0
    %2022 = vmatpush1.msra.mxu0 0.0
    %2023 = vmatprep.subr.mxu0 0.0
    %2024 = vmatpush1.msra.mxu0 0.0
    %2025 = vmatprep.subr.mxu0 0.0
    %2026 = vmatpush1.msra.mxu0 0.0
    %2027 = vmatprep.subr.mxu0 0.0
    %2028 = vmatpush1.msra.mxu0 0.0
    %2029 = vmatprep.subr.mxu0 0.0
    %2030 = vmatpush1.msra.mxu0 0.0
    %2031 = vmatprep.subr.mxu0 0.0
    %2032 = vmatpush1.msra.mxu0 0.0
    %2033 = vmatprep.subr.mxu0 0.0
    %2034 = vmatpush1.msra.mxu0 0.0
    %2035 = vmatprep.subr.mxu0 0.0
    %2036 = vmatpush1.msra.mxu0 0.0
    %2037 = vmatprep.subr.mxu0 0.0
    %2038 = vmatpush1.msra.mxu0 0.0
    %2039 = vmatprep.subr.mxu0 0.0
    %2040 = vmatpush1.msra.mxu0 0.0
    %2041 = vmatprep.subr.mxu0 0.0
    %2042 = vmatpush1.msra.mxu0 0.0
    %2043 = vmatprep.subr.mxu0 0.0
    %2044 = vmatpush1.msra.mxu0 0.0
    %2045 = vmatprep.subr.mxu0 0.0
    %2046 = vmatpush1.msra.mxu0 0.0
    %2047 = vmatprep.mubr.f32.mxu0 0.0
    %2048 = vmatmul.mubr.f32.gmra.mrb[0].mxu0 %v1958
    %v2049 = vpop.f32.mrb[0].mxu0
    %v2050 = vadd.f32 %v1982, %v2049
    %v2051 = vpop.f32.mrb[0].mxu0
    %2052 = vmatprep.mubr.f32.mxu0 0.0
    %2053 = vmatmul.mubr.f32.gmra.mrb[0].mxu0 %v1959
    %v2054 = vpop.f32.mrb[0].mxu0
    %v2055 = vadd.f32 %v1982, %v2054
    %v2056 = vpop.f32.mrb[0].mxu0
    %2057 = vmatprep.mubr.f32.mxu0 0.0
    %2058 = vmatmul.mubr.f32.gmra.mrb[0].mxu0 %v1960
    %v2059 = vpop.f32.mrb[0].mxu0
    %v2060 = vadd.f32 %v1982, %v2059
    %v2061 = vpop.f32.mrb[0].mxu0
    %2062 = vmatprep.mubr.f32.mxu0 0.0
    %2063 = vmatmul.mubr.f32.gmra.mrb[0].mxu0 %v1961
    %v2064 = vpop.f32.mrb[0].mxu0
    %v2065 = vadd.f32 %v1982, %v2064
    %v2066 = vpop.f32.mrb[0].mxu0
    %2067 = vdwg.mxu0
    %s2068 = scalar_lea.vmem %s2, 32
    %v2069 = vld [vmem:[%s2068] sm:$0xff]
    %v2070 = vld [vmem:[%s2068 + $0x8] sm:$0xff]
    %v2071 = vld [vmem:[%s2068 + $0x10] sm:$0xff]
    %v2072 = vld [vmem:[%s2068 + $0x18] sm:$0xff]
    %v2073 = vld [vmem:[%s3 + $0x1] sm:$0x1]
    %v2074 = vlaneseq
    %v2075 = vshrl.u32 %v2074, 7
    %v2076 = vsub.s32 0, %v2075
    %v2077 = vrot.slane %v2073, %v2076
    %2078 = vmatprep.subr.mxu0 0.0
    %2079 = vmatpush1.msra.mxu0 %v2069
    %2080 = vmatprep.subr.mxu0 0.0
    %2081 = vmatpush1.msra.mxu0 %v2070
    %2082 = vmatprep.subr.mxu0 0.0
    %2083 = vmatpush1.msra.mxu0 %v2071
    %2084 = vmatprep.subr.mxu0 0.0
    %2085 = vmatpush1.msra.mxu0 %v2072
    %2086 = vmatprep.subr.mxu0 0.0
    %2087 = vmatpush1.msra.mxu0 0.0
    %2088 = vmatprep.subr.mxu0 0.0
    %2089 = vmatpush1.msra.mxu0 0.0
    %2090 = vmatprep.subr.mxu0 0.0
    %2091 = vmatpush1.msra.mxu0 0.0
    %2092 = vmatprep.subr.mxu0 0.0
    %2093 = vmatpush1.msra.mxu0 0.0
    %2094 = vmatprep.subr.mxu0 0.0
    %2095 = vmatpush1.msra.mxu0 0.0
    %2096 = vmatprep.subr.mxu0 0.0
    %2097 = vmatpush1.msra.mxu0 0.0
    %2098 = vmatprep.subr.mxu0 0.0
    %2099 = vmatpush1.msra.mxu0 0.0
    %2100 = vmatprep.subr.mxu0 0.0
    %2101 = vmatpush1.msra.mxu0 0.0
    %2102 = vmatprep.subr.mxu0 0.0
    %2103 = vmatpush1.msra.mxu0 0.0
    %2104 = vmatprep.subr.mxu0 0.0
    %2105 = vmatpush1.msra.mxu0 0.0
    %2106 = vmatprep.subr.mxu0 0.0
    %2107 = vmatpush1.msra.mxu0 0.0
    %2108 = vmatprep.subr.mxu0 0.0
    %2109 = vmatpush1.msra.mxu0 0.0
    %2110 = vmatprep.subr.mxu0 0.0
    %2111 = vmatpush1.msra.mxu0 0.0
    %2112 = vmatprep.subr.mxu0 0.0
    %2113 = vmatpush1.msra.mxu0 0.0
    %2114 = vmatprep.subr.mxu0 0.0
    %2115 = vmatpush1.msra.mxu0 0.0
    %2116 = vmatprep.subr.mxu0 0.0
    %2117 = vmatpush1.msra.mxu0 0.0
    %2118 = vmatprep.subr.mxu0 0.0
    %2119 = vmatpush1.msra.mxu0 0.0
    %2120 = vmatprep.subr.mxu0 0.0
    %2121 = vmatpush1.msra.mxu0 0.0
    %2122 = vmatprep.subr.mxu0 0.0
    %2123 = vmatpush1.msra.mxu0 0.0
    %2124 = vmatprep.subr.mxu0 0.0
    %2125 = vmatpush1.msra.mxu0 0.0
    %2126 = vmatprep.subr.mxu0 0.0
    %2127 = vmatpush1.msra.mxu0 0.0
    %2128 = vmatprep.subr.mxu0 0.0
    %2129 = vmatpush1.msra.mxu0 0.0
    %2130 = vmatprep.subr.mxu0 0.0
    %2131 = vmatpush1.msra.mxu0 0.0
    %2132 = vmatprep.subr.mxu0 0.0
    %2133 = vmatpush1.msra.mxu0 0.0
    %2134 = vmatprep.subr.mxu0 0.0
    %2135 = vmatpush1.msra.mxu0 0.0
    %2136 = vmatprep.subr.mxu0 0.0
    %2137 = vmatpush1.msra.mxu0 0.0
    %2138 = vmatprep.subr.mxu0 0.0
    %2139 = vmatpush1.msra.mxu0 0.0
    %2140 = vmatprep.subr.mxu0 0.0
    %2141 = vmatpush1.msra.mxu0 0.0
    %2142 = vmatprep.mubr.f32.mxu0 0.0
    %2143 = vmatmul.mubr.f32.gmra.mrb[0].mxu0 %v283
    %v2144 = vpop.f32.mrb[0].mxu0
    %v2145 = vadd.f32 %v2077, %v2144
    %v2146 = vpop.f32.mrb[0].mxu0
    %2147 = vmatprep.mubr.f32.mxu0 0.0
    %2148 = vmatmul.mubr.f32.gmra.mrb[0].mxu0 %v286
    %v2149 = vpop.f32.mrb[0].mxu0
    %v2150 = vadd.f32 %v2077, %v2149
    %v2151 = vpop.f32.mrb[0].mxu0
    %2152 = vdwg.mxu0
    %s2153 = scalar_lea.vmem %s4, 64
    %v2154 = vld [vmem:[%s2153] sm:$0xff]
    %v2155 = vld [vmem:[%s2153 + $0x8] sm:$0xff]
    %v2156 = vld [vmem:[%s2153 + $0x10] sm:$0xff]
    %v2157 = vld [vmem:[%s2153 + $0x18] sm:$0xff]
    %v2158 = vld [vmem:[%s2153 + $0x20] sm:$0xff]
    %v2159 = vld [vmem:[%s2153 + $0x28] sm:$0xff]
    %v2160 = vld [vmem:[%s2153 + $0x30] sm:$0xff]
    %v2161 = vld [vmem:[%s2153 + $0x38] sm:$0xff]
    %s2162 = scalar_lea.vmem %s5, 1
    %v2163 = vld [vmem:[%s2162] ss:$2 sm:$0x3]
    %v2165 = vlaneseq
    %v2166 = vshrl.u32 %v2165, 7
    %v2167 = vsub.s32 0, %v2166
    %v2168 = vrot.slane %v2163, %v2167
    %v2169 = vlaneseq
    %v2170 = vshrl.u32 %v2169, 7
    %v2171 = vsub.s32 1, %v2170
    %v2172 = vrot.slane %v2163, %v2171
    %2175 = vmatprep.subr.mxu0 %v2155
    %2176 = vmatpush1.msra.mxu0 %v2154
    %2177 = vmatprep.subr.mxu0 %v2157
    %2178 = vmatpush1.msra.mxu0 %v2156
    %2179 = vmatprep.subr.mxu0 %v2159
    %2180 = vmatpush1.msra.mxu0 %v2158
    %2181 = vmatprep.subr.mxu0 %v2161
    %2182 = vmatpush1.msra.mxu0 %v2160
    %2183 = vmatprep.subr.mxu0 0.0
    %2184 = vmatpush1.msra.mxu0 0.0
    %2185 = vmatprep.subr.mxu0 0.0
    %2186 = vmatpush1.msra.mxu0 0.0
    %2187 = vmatprep.subr.mxu0 0.0
    %2188 = vmatpush1.msra.mxu0 0.0
    %2189 = vmatprep.subr.mxu0 0.0
    %2190 = vmatpush1.msra.mxu0 0.0
    %2191 = vmatprep.subr.mxu0 0.0
    %2192 = vmatpush1.msra.mxu0 0.0
    %2193 = vmatprep.subr.mxu0 0.0
    %2194 = vmatpush1.msra.mxu0 0.0
    %2195 = vmatprep.subr.mxu0 0.0
    %2196 = vmatpush1.msra.mxu0 0.0
    %2197 = vmatprep.subr.mxu0 0.0
    %2198 = vmatpush1.msra.mxu0 0.0
    %2199 = vmatprep.subr.mxu0 0.0
    %2200 = vmatpush1.msra.mxu0 0.0
    %2201 = vmatprep.subr.mxu0 0.0
    %2202 = vmatpush1.msra.mxu0 0.0
    %2203 = vmatprep.subr.mxu0 0.0
    %2204 = vmatpush1.msra.mxu0 0.0
    %2205 = vmatprep.subr.mxu0 0.0
    %2206 = vmatpush1.msra.mxu0 0.0
    %2207 = vmatprep.subr.mxu0 0.0
    %2208 = vmatpush1.msra.mxu0 0.0
    %2209 = vmatprep.subr.mxu0 0.0
    %2210 = vmatpush1.msra.mxu0 0.0
    %2211 = vmatprep.subr.mxu0 0.0
    %2212 = vmatpush1.msra.mxu0 0.0
    %2213 = vmatprep.subr.mxu0 0.0
    %2214 = vmatpush1.msra.mxu0 0.0
    %2215 = vmatprep.subr.mxu0 0.0
    %2216 = vmatpush1.msra.mxu0 0.0
    %2217 = vmatprep.subr.mxu0 0.0
    %2218 = vmatpush1.msra.mxu0 0.0
    %2219 = vmatprep.subr.mxu0 0.0
    %2220 = vmatpush1.msra.mxu0 0.0
    %2221 = vmatprep.subr.mxu0 0.0
    %2222 = vmatpush1.msra.mxu0 0.0
    %2223 = vmatprep.subr.mxu0 0.0
    %2224 = vmatpush1.msra.mxu0 0.0
    %2225 = vmatprep.subr.mxu0 0.0
    %2226 = vmatpush1.msra.mxu0 0.0
    %2227 = vmatprep.subr.mxu0 0.0
    %2228 = vmatpush1.msra.mxu0 0.0
    %2229 = vmatprep.subr.mxu0 0.0
    %2230 = vmatpush1.msra.mxu0 0.0
    %2231 = vmatprep.subr.mxu0 0.0
    %2232 = vmatpush1.msra.mxu0 0.0
    %2233 = vmatprep.subr.mxu0 0.0
    %2234 = vmatpush1.msra.mxu0 0.0
    %2235 = vmatprep.subr.mxu0 0.0
    %2236 = vmatpush1.msra.mxu0 0.0
    %2237 = vmatprep.subr.mxu0 0.0
    %2238 = vmatpush1.msra.mxu0 0.0
    %2239 = vmatprep.mubr.f32.mxu0 0.0
    %2240 = vmatmul.mubr.f32.gmra.mrb[0].mxu0 %v166
    %v2241 = vpop.f32.mrb[0].mxu0
    %v2242 = vadd.f32 %v2168, %v2241
    %v2243 = vpop.f32.mrb[0].mxu0
    %v2244 = vadd.f32 %v2172, %v2243
    %2245 = vmatprep.mubr.f32.mxu0 0.0
    %2246 = vmatmul.mubr.f32.gmra.mrb[0].mxu0 %v169
    %v2247 = vpop.f32.mrb[0].mxu0
    %v2248 = vadd.f32 %v2168, %v2247
    %v2249 = vpop.f32.mrb[0].mxu0
    %v2250 = vadd.f32 %v2172, %v2249
    %2251 = vmatprep.mubr.f32.mxu0 0.0
    %2252 = vmatmul.mubr.f32.gmra.mrb[0].mxu0 %v172
    %v2253 = vpop.f32.mrb[0].mxu0
    %v2254 = vadd.f32 %v2168, %v2253
    %v2255 = vpop.f32.mrb[0].mxu0
    %v2256 = vadd.f32 %v2172, %v2255
    %2257 = vmatprep.mubr.f32.mxu0 0.0
    %2258 = vmatmul.mubr.f32.gmra.mrb[0].mxu0 %v175
    %v2259 = vpop.f32.mrb[0].mxu0
    %v2260 = vadd.f32 %v2168, %v2259
    %v2261 = vpop.f32.mrb[0].mxu0
    %v2262 = vadd.f32 %v2172, %v2261
    %2263 = vdwg.mxu0
    %2266 = vrot.lane.b32.xlu0 %v2145, 96
    %v2267 = vpop.permute.xlu0 %2266
    %2268 = vrot.lane.b32.xlu0 %v2150, 96
    %v2269 = vpop.permute.xlu0 %2268
    %2270 = vrot.lane.b32.xlu0 %v2145, 64
    %v2271 = vpop.permute.xlu0 %2270
    %2272 = vrot.lane.b32.xlu0 %v2150, 64
    %v2273 = vpop.permute.xlu0 %2272
    %2274 = vrot.lane.b32.xlu0 %v2145, 32
    %v2275 = vpop.permute.xlu0 %2274
    %2276 = vrot.lane.b32.xlu0 %v2150, 32
    %v2277 = vpop.permute.xlu0 %2276
    %2282 = vrot.lane.b32.xlu0 %v2242, 96
    %v2283 = vpop.permute.xlu0 %2282
    %2284 = vrot.lane.b32.xlu0 %v2248, 96
    %v2285 = vpop.permute.xlu0 %2284
    %2286 = vrot.lane.b32.xlu0 %v2254, 96
    %v2287 = vpop.permute.xlu0 %2286
    %2288 = vrot.lane.b32.xlu0 %v2260, 96
    %v2289 = vpop.permute.xlu0 %2288
    %2290 = vrot.lane.b32.xlu0 %v2242, 64
    %v2291 = vpop.permute.xlu0 %2290
    %2292 = vrot.lane.b32.xlu0 %v2248, 64
    %v2293 = vpop.permute.xlu0 %2292
    %2294 = vrot.lane.b32.xlu0 %v2254, 64
    %v2295 = vpop.permute.xlu0 %2294
    %2296 = vrot.lane.b32.xlu0 %v2260, 64
    %v2297 = vpop.permute.xlu0 %2296
    %2298 = vrot.lane.b32.xlu0 %v2242, 32
    %v2299 = vpop.permute.xlu0 %2298
    %2300 = vrot.lane.b32.xlu0 %v2248, 32
    %v2301 = vpop.permute.xlu0 %2300
    %2302 = vrot.lane.b32.xlu0 %v2254, 32
    %v2303 = vpop.permute.xlu0 %2302
    %2304 = vrot.lane.b32.xlu0 %v2260, 32
    %v2305 = vpop.permute.xlu0 %2304
    %2310 = vrot.lane.b32.xlu0 %v2244, 96
    %v2311 = vpop.permute.xlu0 %2310
    %2312 = vrot.lane.b32.xlu0 %v2250, 96
    %v2313 = vpop.permute.xlu0 %2312
    %2314 = vrot.lane.b32.xlu0 %v2256, 96
    %v2315 = vpop.permute.xlu0 %2314
    %2316 = vrot.lane.b32.xlu0 %v2262, 96
    %v2317 = vpop.permute.xlu0 %2316
    %2322 = vrot.lane.b32.xlu0 %v2244, 64
    %v2323 = vpop.permute.xlu0 %2322
    %2324 = vrot.lane.b32.xlu0 %v2250, 64
    %v2325 = vpop.permute.xlu0 %2324
    %2326 = vrot.lane.b32.xlu0 %v2256, 64
    %v2327 = vpop.permute.xlu0 %2326
    %2328 = vrot.lane.b32.xlu0 %v2262, 64
    %v2329 = vpop.permute.xlu0 %2328
    %2334 = vrot.lane.b32.xlu0 %v2244, 32
    %v2335 = vpop.permute.xlu0 %2334
    %2336 = vrot.lane.b32.xlu0 %v2250, 32
    %v2337 = vpop.permute.xlu0 %2336
    %2338 = vrot.lane.b32.xlu0 %v2256, 32
    %v2339 = vpop.permute.xlu0 %2338
    %2340 = vrot.lane.b32.xlu0 %v2262, 32
    %v2341 = vpop.permute.xlu0 %2340
    %v2346 = vsel %vm47, %v2145, 0
    %v2348 = vsel %vm47, %v2242, 0
    %v2350 = vsel %vm47, %v2248, 0
    %2352 = vmatprep.subr.mxu0 0.0
    %2353 = vmatpush1.xpose.msra.mxu0 %v2348
    %2354 = vmatprep.subr.mxu0 0.0
    %2355 = vmatpush1.xpose.msra.mxu0 %v2350
    %2356 = vmatprep.subr.mxu0 0.0
    %2357 = vmatpush1.xpose.msra.mxu0 0.0
    %2358 = vmatprep.subr.mxu0 0.0
    %2359 = vmatpush1.xpose.msra.mxu0 0.0
    %2360 = vmatprep.subr.mxu0 0.0
    %2361 = vmatpush1.xpose.msra.mxu0 0.0
    %2362 = vmatprep.subr.mxu0 0.0
    %2363 = vmatpush1.xpose.msra.mxu0 0.0
    %2364 = vmatprep.subr.mxu0 0.0
    %2365 = vmatpush1.xpose.msra.mxu0 0.0
    %2366 = vmatprep.subr.mxu0 0.0
    %2367 = vmatpush1.xpose.msra.mxu0 0.0
    %2368 = vmatprep.subr.mxu0 0.0
    %2369 = vmatpush1.xpose.msra.mxu0 0.0
    %2370 = vmatprep.subr.mxu0 0.0
    %2371 = vmatpush1.xpose.msra.mxu0 0.0
    %2372 = vmatprep.subr.mxu0 0.0
    %2373 = vmatpush1.xpose.msra.mxu0 0.0
    %2374 = vmatprep.subr.mxu0 0.0
    %2375 = vmatpush1.xpose.msra.mxu0 0.0
    %2376 = vmatprep.subr.mxu0 0.0
    %2377 = vmatpush1.xpose.msra.mxu0 0.0
    %2378 = vmatprep.subr.mxu0 0.0
    %2379 = vmatpush1.xpose.msra.mxu0 0.0
    %2380 = vmatprep.subr.mxu0 0.0
    %2381 = vmatpush1.xpose.msra.mxu0 0.0
    %2382 = vmatprep.subr.mxu0 0.0
    %2383 = vmatpush1.xpose.msra.mxu0 0.0
    %2384 = vmatprep.subr.mxu0 0.0
    %2385 = vmatpush1.xpose.msra.mxu0 0.0
    %2386 = vmatprep.subr.mxu0 0.0
    %2387 = vmatpush1.xpose.msra.mxu0 0.0
    %2388 = vmatprep.subr.mxu0 0.0
    %2389 = vmatpush1.xpose.msra.mxu0 0.0
    %2390 = vmatprep.subr.mxu0 0.0
    %2391 = vmatpush1.xpose.msra.mxu0 0.0
    %2392 = vmatprep.subr.mxu0 0.0
    %2393 = vmatpush1.xpose.msra.mxu0 0.0
    %2394 = vmatprep.subr.mxu0 0.0
    %2395 = vmatpush1.xpose.msra.mxu0 0.0
    %2396 = vmatprep.subr.mxu0 0.0
    %2397 = vmatpush1.xpose.msra.mxu0 0.0
    %2398 = vmatprep.subr.mxu0 0.0
    %2399 = vmatpush1.xpose.msra.mxu0 0.0
    %2400 = vmatprep.subr.mxu0 0.0
    %2401 = vmatpush1.xpose.msra.mxu0 0.0
    %2402 = vmatprep.subr.mxu0 0.0
    %2403 = vmatpush1.xpose.msra.mxu0 0.0
    %2404 = vmatprep.subr.mxu0 0.0
    %2405 = vmatpush1.xpose.msra.mxu0 0.0
    %2406 = vmatprep.subr.mxu0 0.0
    %2407 = vmatpush1.xpose.msra.mxu0 0.0
    %2408 = vmatprep.subr.mxu0 0.0
    %2409 = vmatpush1.xpose.msra.mxu0 0.0
    %2410 = vmatprep.subr.mxu0 0.0
    %2411 = vmatpush1.xpose.msra.mxu0 0.0
    %2412 = vmatprep.subr.mxu0 0.0
    %2413 = vmatpush1.xpose.msra.mxu0 0.0
    %2414 = vmatprep.subr.mxu0 0.0
    %2415 = vmatpush1.xpose.msra.mxu0 0.0
    %2416 = vmatprep.mubr.f32.mxu0 0.0
    %2417 = vmatmul.mubr.f32.gmra.mrb[0].mxu0 %v2346
    %v2418 = vpop.f32.mrb[0].mxu0
    %v2419 = vadd.f32 0.0, %v2418
    %v2420 = vpop.f32.mrb[0].mxu0
    %2421 = vdwg.mxu0
    %v2422 = vsel %vm47, %v2150, 0
    %v2424 = vsel %vm47, %v2254, 0
    %v2426 = vsel %vm47, %v2260, 0
    %2428 = vmatprep.subr.mxu0 0.0
    %2429 = vmatpush1.xpose.msra.mxu0 %v2424
    %2430 = vmatprep.subr.mxu0 0.0
    %2431 = vmatpush1.xpose.msra.mxu0 %v2426
    %2432 = vmatprep.subr.mxu0 0.0
    %2433 = vmatpush1.xpose.msra.mxu0 0.0
    %2434 = vmatprep.subr.mxu0 0.0
    %2435 = vmatpush1.xpose.msra.mxu0 0.0
    %2436 = vmatprep.subr.mxu0 0.0
    %2437 = vmatpush1.xpose.msra.mxu0 0.0
    %2438 = vmatprep.subr.mxu0 0.0
    %2439 = vmatpush1.xpose.msra.mxu0 0.0
    %2440 = vmatprep.subr.mxu0 0.0
    %2441 = vmatpush1.xpose.msra.mxu0 0.0
    %2442 = vmatprep.subr.mxu0 0.0
    %2443 = vmatpush1.xpose.msra.mxu0 0.0
    %2444 = vmatprep.subr.mxu0 0.0
    %2445 = vmatpush1.xpose.msra.mxu0 0.0
    %2446 = vmatprep.subr.mxu0 0.0
    %2447 = vmatpush1.xpose.msra.mxu0 0.0
    %2448 = vmatprep.subr.mxu0 0.0
    %2449 = vmatpush1.xpose.msra.mxu0 0.0
    %2450 = vmatprep.subr.mxu0 0.0
    %2451 = vmatpush1.xpose.msra.mxu0 0.0
    %2452 = vmatprep.subr.mxu0 0.0
    %2453 = vmatpush1.xpose.msra.mxu0 0.0
    %2454 = vmatprep.subr.mxu0 0.0
    %2455 = vmatpush1.xpose.msra.mxu0 0.0
    %2456 = vmatprep.subr.mxu0 0.0
    %2457 = vmatpush1.xpose.msra.mxu0 0.0
    %2458 = vmatprep.subr.mxu0 0.0
    %2459 = vmatpush1.xpose.msra.mxu0 0.0
    %2460 = vmatprep.subr.mxu0 0.0
    %2461 = vmatpush1.xpose.msra.mxu0 0.0
    %2462 = vmatprep.subr.mxu0 0.0
    %2463 = vmatpush1.xpose.msra.mxu0 0.0
    %2464 = vmatprep.subr.mxu0 0.0
    %2465 = vmatpush1.xpose.msra.mxu0 0.0
    %2466 = vmatprep.subr.mxu0 0.0
    %2467 = vmatpush1.xpose.msra.mxu0 0.0
    %2468 = vmatprep.subr.mxu0 0.0
    %2469 = vmatpush1.xpose.msra.mxu0 0.0
    %2470 = vmatprep.subr.mxu0 0.0
    %2471 = vmatpush1.xpose.msra.mxu0 0.0
    %2472 = vmatprep.subr.mxu0 0.0
    %2473 = vmatpush1.xpose.msra.mxu0 0.0
    %2474 = vmatprep.subr.mxu0 0.0
    %2475 = vmatpush1.xpose.msra.mxu0 0.0
    %2476 = vmatprep.subr.mxu0 0.0
    %2477 = vmatpush1.xpose.msra.mxu0 0.0
    %2478 = vmatprep.subr.mxu0 0.0
    %2479 = vmatpush1.xpose.msra.mxu0 0.0
    %2480 = vmatprep.subr.mxu0 0.0
    %2481 = vmatpush1.xpose.msra.mxu0 0.0
    %2482 = vmatprep.subr.mxu0 0.0
    %2483 = vmatpush1.xpose.msra.mxu0 0.0
    %2484 = vmatprep.subr.mxu0 0.0
    %2485 = vmatpush1.xpose.msra.mxu0 0.0
    %2486 = vmatprep.subr.mxu0 0.0
    %2487 = vmatpush1.xpose.msra.mxu0 0.0
    %2488 = vmatprep.subr.mxu0 0.0
    %2489 = vmatpush1.xpose.msra.mxu0 0.0
    %2490 = vmatprep.subr.mxu0 0.0
    %2491 = vmatpush1.xpose.msra.mxu0 0.0
    %2492 = vmatprep.mubr.f32.mxu0 0.0
    %2493 = vmatmul.mubr.f32.gmra.mrb[0].mxu0 %v2422
    %v2494 = vpop.f32.mrb[0].mxu0
    %v2495 = vadd.f32 0.0, %v2494
    %v2496 = vpop.f32.mrb[0].mxu0
    %2497 = vdwg.mxu0
    %v2498 = vsel %vm47, %v2267, 0
    %v2500 = vsel %vm47, %v2283, 0
    %v2502 = vsel %vm47, %v2285, 0
    %2504 = vmatprep.subr.mxu0 0.0
    %2505 = vmatpush1.xpose.msra.mxu0 %v2500
    %2506 = vmatprep.subr.mxu0 0.0
    %2507 = vmatpush1.xpose.msra.mxu0 %v2502
    %2508 = vmatprep.subr.mxu0 0.0
    %2509 = vmatpush1.xpose.msra.mxu0 0.0
    %2510 = vmatprep.subr.mxu0 0.0
    %2511 = vmatpush1.xpose.msra.mxu0 0.0
    %2512 = vmatprep.subr.mxu0 0.0
    %2513 = vmatpush1.xpose.msra.mxu0 0.0
    %2514 = vmatprep.subr.mxu0 0.0
    %2515 = vmatpush1.xpose.msra.mxu0 0.0
    %2516 = vmatprep.subr.mxu0 0.0
    %2517 = vmatpush1.xpose.msra.mxu0 0.0
    %2518 = vmatprep.subr.mxu0 0.0
    %2519 = vmatpush1.xpose.msra.mxu0 0.0
    %2520 = vmatprep.subr.mxu0 0.0
    %2521 = vmatpush1.xpose.msra.mxu0 0.0
    %2522 = vmatprep.subr.mxu0 0.0
    %2523 = vmatpush1.xpose.msra.mxu0 0.0
    %2524 = vmatprep.subr.mxu0 0.0
    %2525 = vmatpush1.xpose.msra.mxu0 0.0
    %2526 = vmatprep.subr.mxu0 0.0
    %2527 = vmatpush1.xpose.msra.mxu0 0.0
    %2528 = vmatprep.subr.mxu0 0.0
    %2529 = vmatpush1.xpose.msra.mxu0 0.0
    %2530 = vmatprep.subr.mxu0 0.0
    %2531 = vmatpush1.xpose.msra.mxu0 0.0
    %2532 = vmatprep.subr.mxu0 0.0
    %2533 = vmatpush1.xpose.msra.mxu0 0.0
    %2534 = vmatprep.subr.mxu0 0.0
    %2535 = vmatpush1.xpose.msra.mxu0 0.0
    %2536 = vmatprep.subr.mxu0 0.0
    %2537 = vmatpush1.xpose.msra.mxu0 0.0
    %2538 = vmatprep.subr.mxu0 0.0
    %2539 = vmatpush1.xpose.msra.mxu0 0.0
    %2540 = vmatprep.subr.mxu0 0.0
    %2541 = vmatpush1.xpose.msra.mxu0 0.0
    %2542 = vmatprep.subr.mxu0 0.0
    %2543 = vmatpush1.xpose.msra.mxu0 0.0
    %2544 = vmatprep.subr.mxu0 0.0
    %2545 = vmatpush1.xpose.msra.mxu0 0.0
    %2546 = vmatprep.subr.mxu0 0.0
    %2547 = vmatpush1.xpose.msra.mxu0 0.0
    %2548 = vmatprep.subr.mxu0 0.0
    %2549 = vmatpush1.xpose.msra.mxu0 0.0
    %2550 = vmatprep.subr.mxu0 0.0
    %2551 = vmatpush1.xpose.msra.mxu0 0.0
    %2552 = vmatprep.subr.mxu0 0.0
    %2553 = vmatpush1.xpose.msra.mxu0 0.0
    %2554 = vmatprep.subr.mxu0 0.0
    %2555 = vmatpush1.xpose.msra.mxu0 0.0
    %2556 = vmatprep.subr.mxu0 0.0
    %2557 = vmatpush1.xpose.msra.mxu0 0.0
    %2558 = vmatprep.subr.mxu0 0.0
    %2559 = vmatpush1.xpose.msra.mxu0 0.0
    %2560 = vmatprep.subr.mxu0 0.0
    %2561 = vmatpush1.xpose.msra.mxu0 0.0
    %2562 = vmatprep.subr.mxu0 0.0
    %2563 = vmatpush1.xpose.msra.mxu0 0.0
    %2564 = vmatprep.subr.mxu0 0.0
    %2565 = vmatpush1.xpose.msra.mxu0 0.0
    %2566 = vmatprep.subr.mxu0 0.0
    %2567 = vmatpush1.xpose.msra.mxu0 0.0
    %2568 = vmatprep.mubr.f32.mxu0 0.0
    %2569 = vmatmul.mubr.f32.gmra.mrb[0].mxu0 %v2498
    %v2570 = vpop.f32.mrb[0].mxu0
    %v2571 = vadd.f32 0.0, %v2570
    %v2572 = vpop.f32.mrb[0].mxu0
    %2573 = vdwg.mxu0
    %v2574 = vsel %vm47, %v2269, 0
    %v2576 = vsel %vm47, %v2287, 0
    %v2578 = vsel %vm47, %v2289, 0
    %2580 = vmatprep.subr.mxu0 0.0
    %2581 = vmatpush1.xpose.msra.mxu0 %v2576
    %2582 = vmatprep.subr.mxu0 0.0
    %2583 = vmatpush1.xpose.msra.mxu0 %v2578
    %2584 = vmatprep.subr.mxu0 0.0
    %2585 = vmatpush1.xpose.msra.mxu0 0.0
    %2586 = vmatprep.subr.mxu0 0.0
    %2587 = vmatpush1.xpose.msra.mxu0 0.0
    %2588 = vmatprep.subr.mxu0 0.0
    %2589 = vmatpush1.xpose.msra.mxu0 0.0
    %2590 = vmatprep.subr.mxu0 0.0
    %2591 = vmatpush1.xpose.msra.mxu0 0.0
    %2592 = vmatprep.subr.mxu0 0.0
    %2593 = vmatpush1.xpose.msra.mxu0 0.0
    %2594 = vmatprep.subr.mxu0 0.0
    %2595 = vmatpush1.xpose.msra.mxu0 0.0
    %2596 = vmatprep.subr.mxu0 0.0
    %2597 = vmatpush1.xpose.msra.mxu0 0.0
    %2598 = vmatprep.subr.mxu0 0.0
    %2599 = vmatpush1.xpose.msra.mxu0 0.0
    %2600 = vmatprep.subr.mxu0 0.0
    %2601 = vmatpush1.xpose.msra.mxu0 0.0
    %2602 = vmatprep.subr.mxu0 0.0
    %2603 = vmatpush1.xpose.msra.mxu0 0.0
    %2604 = vmatprep.subr.mxu0 0.0
    %2605 = vmatpush1.xpose.msra.mxu0 0.0
    %2606 = vmatprep.subr.mxu0 0.0
    %2607 = vmatpush1.xpose.msra.mxu0 0.0
    %2608 = vmatprep.subr.mxu0 0.0
    %2609 = vmatpush1.xpose.msra.mxu0 0.0
    %2610 = vmatprep.subr.mxu0 0.0
    %2611 = vmatpush1.xpose.msra.mxu0 0.0
    %2612 = vmatprep.subr.mxu0 0.0
    %2613 = vmatpush1.xpose.msra.mxu0 0.0
    %2614 = vmatprep.subr.mxu0 0.0
    %2615 = vmatpush1.xpose.msra.mxu0 0.0
    %2616 = vmatprep.subr.mxu0 0.0
    %2617 = vmatpush1.xpose.msra.mxu0 0.0
    %2618 = vmatprep.subr.mxu0 0.0
    %2619 = vmatpush1.xpose.msra.mxu0 0.0
    %2620 = vmatprep.subr.mxu0 0.0
    %2621 = vmatpush1.xpose.msra.mxu0 0.0
    %2622 = vmatprep.subr.mxu0 0.0
    %2623 = vmatpush1.xpose.msra.mxu0 0.0
    %2624 = vmatprep.subr.mxu0 0.0
    %2625 = vmatpush1.xpose.msra.mxu0 0.0
    %2626 = vmatprep.subr.mxu0 0.0
    %2627 = vmatpush1.xpose.msra.mxu0 0.0
    %2628 = vmatprep.subr.mxu0 0.0
    %2629 = vmatpush1.xpose.msra.mxu0 0.0
    %2630 = vmatprep.subr.mxu0 0.0
    %2631 = vmatpush1.xpose.msra.mxu0 0.0
    %2632 = vmatprep.subr.mxu0 0.0
    %2633 = vmatpush1.xpose.msra.mxu0 0.0
    %2634 = vmatprep.subr.mxu0 0.0
    %2635 = vmatpush1.xpose.msra.mxu0 0.0
    %2636 = vmatprep.subr.mxu0 0.0
    %2637 = vmatpush1.xpose.msra.mxu0 0.0
    %2638 = vmatprep.subr.mxu0 0.0
    %2639 = vmatpush1.xpose.msra.mxu0 0.0
    %2640 = vmatprep.subr.mxu0 0.0
    %2641 = vmatpush1.xpose.msra.mxu0 0.0
    %2642 = vmatprep.subr.mxu0 0.0
    %2643 = vmatpush1.xpose.msra.mxu0 0.0
    %2644 = vmatprep.mubr.f32.mxu0 0.0
    %2645 = vmatmul.mubr.f32.gmra.mrb[0].mxu0 %v2574
    %v2646 = vpop.f32.mrb[0].mxu0
    %v2647 = vadd.f32 0.0, %v2646
    %v2648 = vpop.f32.mrb[0].mxu0
    %2649 = vdwg.mxu0
    %v2650 = vsel %vm47, %v2271, 0
    %v2652 = vsel %vm47, %v2291, 0
    %v2654 = vsel %vm47, %v2293, 0
    %2656 = vmatprep.subr.mxu0 0.0
    %2657 = vmatpush1.xpose.msra.mxu0 %v2652
    %2658 = vmatprep.subr.mxu0 0.0
    %2659 = vmatpush1.xpose.msra.mxu0 %v2654
    %2660 = vmatprep.subr.mxu0 0.0
    %2661 = vmatpush1.xpose.msra.mxu0 0.0
    %2662 = vmatprep.subr.mxu0 0.0
    %2663 = vmatpush1.xpose.msra.mxu0 0.0
    %2664 = vmatprep.subr.mxu0 0.0
    %2665 = vmatpush1.xpose.msra.mxu0 0.0
    %2666 = vmatprep.subr.mxu0 0.0
    %2667 = vmatpush1.xpose.msra.mxu0 0.0
    %2668 = vmatprep.subr.mxu0 0.0
    %2669 = vmatpush1.xpose.msra.mxu0 0.0
    %2670 = vmatprep.subr.mxu0 0.0
    %2671 = vmatpush1.xpose.msra.mxu0 0.0
    %2672 = vmatprep.subr.mxu0 0.0
    %2673 = vmatpush1.xpose.msra.mxu0 0.0
    %2674 = vmatprep.subr.mxu0 0.0
    %2675 = vmatpush1.xpose.msra.mxu0 0.0
    %2676 = vmatprep.subr.mxu0 0.0
    %2677 = vmatpush1.xpose.msra.mxu0 0.0
    %2678 = vmatprep.subr.mxu0 0.0
    %2679 = vmatpush1.xpose.msra.mxu0 0.0
    %2680 = vmatprep.subr.mxu0 0.0
    %2681 = vmatpush1.xpose.msra.mxu0 0.0
    %2682 = vmatprep.subr.mxu0 0.0
    %2683 = vmatpush1.xpose.msra.mxu0 0.0
    %2684 = vmatprep.subr.mxu0 0.0
    %2685 = vmatpush1.xpose.msra.mxu0 0.0
    %2686 = vmatprep.subr.mxu0 0.0
    %2687 = vmatpush1.xpose.msra.mxu0 0.0
    %2688 = vmatprep.subr.mxu0 0.0
    %2689 = vmatpush1.xpose.msra.mxu0 0.0
    %2690 = vmatprep.subr.mxu0 0.0
    %2691 = vmatpush1.xpose.msra.mxu0 0.0
    %2692 = vmatprep.subr.mxu0 0.0
    %2693 = vmatpush1.xpose.msra.mxu0 0.0
    %2694 = vmatprep.subr.mxu0 0.0
    %2695 = vmatpush1.xpose.msra.mxu0 0.0
    %2696 = vmatprep.subr.mxu0 0.0
    %2697 = vmatpush1.xpose.msra.mxu0 0.0
    %2698 = vmatprep.subr.mxu0 0.0
    %2699 = vmatpush1.xpose.msra.mxu0 0.0
    %2700 = vmatprep.subr.mxu0 0.0
    %2701 = vmatpush1.xpose.msra.mxu0 0.0
    %2702 = vmatprep.subr.mxu0 0.0
    %2703 = vmatpush1.xpose.msra.mxu0 0.0
    %2704 = vmatprep.subr.mxu0 0.0
    %2705 = vmatpush1.xpose.msra.mxu0 0.0
    %2706 = vmatprep.subr.mxu0 0.0
    %2707 = vmatpush1.xpose.msra.mxu0 0.0
    %2708 = vmatprep.subr.mxu0 0.0
    %2709 = vmatpush1.xpose.msra.mxu0 0.0
    %2710 = vmatprep.subr.mxu0 0.0
    %2711 = vmatpush1.xpose.msra.mxu0 0.0
    %2712 = vmatprep.subr.mxu0 0.0
    %2713 = vmatpush1.xpose.msra.mxu0 0.0
    %2714 = vmatprep.subr.mxu0 0.0
    %2715 = vmatpush1.xpose.msra.mxu0 0.0
    %2716 = vmatprep.subr.mxu0 0.0
    %2717 = vmatpush1.xpose.msra.mxu0 0.0
    %2718 = vmatprep.subr.mxu0 0.0
    %2719 = vmatpush1.xpose.msra.mxu0 0.0
    %2720 = vmatprep.mubr.f32.mxu0 0.0
    %2721 = vmatmul.mubr.f32.gmra.mrb[0].mxu0 %v2650
    %v2722 = vpop.f32.mrb[0].mxu0
    %v2723 = vadd.f32 0.0, %v2722
    %v2724 = vpop.f32.mrb[0].mxu0
    %2725 = vdwg.mxu0
    %v2726 = vsel %vm47, %v2273, 0
    %v2728 = vsel %vm47, %v2295, 0
    %v2730 = vsel %vm47, %v2297, 0
    %2732 = vmatprep.subr.mxu0 0.0
    %2733 = vmatpush1.xpose.msra.mxu0 %v2728
    %2734 = vmatprep.subr.mxu0 0.0
    %2735 = vmatpush1.xpose.msra.mxu0 %v2730
    %2736 = vmatprep.subr.mxu0 0.0
    %2737 = vmatpush1.xpose.msra.mxu0 0.0
    %2738 = vmatprep.subr.mxu0 0.0
    %2739 = vmatpush1.xpose.msra.mxu0 0.0
    %2740 = vmatprep.subr.mxu0 0.0
    %2741 = vmatpush1.xpose.msra.mxu0 0.0
    %2742 = vmatprep.subr.mxu0 0.0
    %2743 = vmatpush1.xpose.msra.mxu0 0.0
    %2744 = vmatprep.subr.mxu0 0.0
    %2745 = vmatpush1.xpose.msra.mxu0 0.0
    %2746 = vmatprep.subr.mxu0 0.0
    %2747 = vmatpush1.xpose.msra.mxu0 0.0
    %2748 = vmatprep.subr.mxu0 0.0
    %2749 = vmatpush1.xpose.msra.mxu0 0.0
    %2750 = vmatprep.subr.mxu0 0.0
    %2751 = vmatpush1.xpose.msra.mxu0 0.0
    %2752 = vmatprep.subr.mxu0 0.0
    %2753 = vmatpush1.xpose.msra.mxu0 0.0
    %2754 = vmatprep.subr.mxu0 0.0
    %2755 = vmatpush1.xpose.msra.mxu0 0.0
    %2756 = vmatprep.subr.mxu0 0.0
    %2757 = vmatpush1.xpose.msra.mxu0 0.0
    %2758 = vmatprep.subr.mxu0 0.0
    %2759 = vmatpush1.xpose.msra.mxu0 0.0
    %2760 = vmatprep.subr.mxu0 0.0
    %2761 = vmatpush1.xpose.msra.mxu0 0.0
    %2762 = vmatprep.subr.mxu0 0.0
    %2763 = vmatpush1.xpose.msra.mxu0 0.0
    %2764 = vmatprep.subr.mxu0 0.0
    %2765 = vmatpush1.xpose.msra.mxu0 0.0
    %2766 = vmatprep.subr.mxu0 0.0
    %2767 = vmatpush1.xpose.msra.mxu0 0.0
    %2768 = vmatprep.subr.mxu0 0.0
    %2769 = vmatpush1.xpose.msra.mxu0 0.0
    %2770 = vmatprep.subr.mxu0 0.0
    %2771 = vmatpush1.xpose.msra.mxu0 0.0
    %2772 = vmatprep.subr.mxu0 0.0
    %2773 = vmatpush1.xpose.msra.mxu0 0.0
    %2774 = vmatprep.subr.mxu0 0.0
    %2775 = vmatpush1.xpose.msra.mxu0 0.0
    %2776 = vmatprep.subr.mxu0 0.0
    %2777 = vmatpush1.xpose.msra.mxu0 0.0
    %2778 = vmatprep.subr.mxu0 0.0
    %2779 = vmatpush1.xpose.msra.mxu0 0.0
    %2780 = vmatprep.subr.mxu0 0.0
    %2781 = vmatpush1.xpose.msra.mxu0 0.0
    %2782 = vmatprep.subr.mxu0 0.0
    %2783 = vmatpush1.xpose.msra.mxu0 0.0
    %2784 = vmatprep.subr.mxu0 0.0
    %2785 = vmatpush1.xpose.msra.mxu0 0.0
    %2786 = vmatprep.subr.mxu0 0.0
    %2787 = vmatpush1.xpose.msra.mxu0 0.0
    %2788 = vmatprep.subr.mxu0 0.0
    %2789 = vmatpush1.xpose.msra.mxu0 0.0
    %2790 = vmatprep.subr.mxu0 0.0
    %2791 = vmatpush1.xpose.msra.mxu0 0.0
    %2792 = vmatprep.subr.mxu0 0.0
    %2793 = vmatpush1.xpose.msra.mxu0 0.0
    %2794 = vmatprep.subr.mxu0 0.0
    %2795 = vmatpush1.xpose.msra.mxu0 0.0
    %2796 = vmatprep.mubr.f32.mxu0 0.0
    %2797 = vmatmul.mubr.f32.gmra.mrb[0].mxu0 %v2726
    %v2798 = vpop.f32.mrb[0].mxu0
    %v2799 = vadd.f32 0.0, %v2798
    %v2800 = vpop.f32.mrb[0].mxu0
    %2801 = vdwg.mxu0
    %v2802 = vsel %vm47, %v2275, 0
    %v2804 = vsel %vm47, %v2299, 0
    %v2806 = vsel %vm47, %v2301, 0
    %2808 = vmatprep.subr.mxu0 0.0
    %2809 = vmatpush1.xpose.msra.mxu0 %v2804
    %2810 = vmatprep.subr.mxu0 0.0
    %2811 = vmatpush1.xpose.msra.mxu0 %v2806
    %2812 = vmatprep.subr.mxu0 0.0
    %2813 = vmatpush1.xpose.msra.mxu0 0.0
    %2814 = vmatprep.subr.mxu0 0.0
    %2815 = vmatpush1.xpose.msra.mxu0 0.0
    %2816 = vmatprep.subr.mxu0 0.0
    %2817 = vmatpush1.xpose.msra.mxu0 0.0
    %2818 = vmatprep.subr.mxu0 0.0
    %2819 = vmatpush1.xpose.msra.mxu0 0.0
    %2820 = vmatprep.subr.mxu0 0.0
    %2821 = vmatpush1.xpose.msra.mxu0 0.0
    %2822 = vmatprep.subr.mxu0 0.0
    %2823 = vmatpush1.xpose.msra.mxu0 0.0
    %2824 = vmatprep.subr.mxu0 0.0
    %2825 = vmatpush1.xpose.msra.mxu0 0.0
    %2826 = vmatprep.subr.mxu0 0.0
    %2827 = vmatpush1.xpose.msra.mxu0 0.0
    %2828 = vmatprep.subr.mxu0 0.0
    %2829 = vmatpush1.xpose.msra.mxu0 0.0
    %2830 = vmatprep.subr.mxu0 0.0
    %2831 = vmatpush1.xpose.msra.mxu0 0.0
    %2832 = vmatprep.subr.mxu0 0.0
    %2833 = vmatpush1.xpose.msra.mxu0 0.0
    %2834 = vmatprep.subr.mxu0 0.0
    %2835 = vmatpush1.xpose.msra.mxu0 0.0
    %2836 = vmatprep.subr.mxu0 0.0
    %2837 = vmatpush1.xpose.msra.mxu0 0.0
    %2838 = vmatprep.subr.mxu0 0.0
    %2839 = vmatpush1.xpose.msra.mxu0 0.0
    %2840 = vmatprep.subr.mxu0 0.0
    %2841 = vmatpush1.xpose.msra.mxu0 0.0
    %2842 = vmatprep.subr.mxu0 0.0
    %2843 = vmatpush1.xpose.msra.mxu0 0.0
    %2844 = vmatprep.subr.mxu0 0.0
    %2845 = vmatpush1.xpose.msra.mxu0 0.0
    %2846 = vmatprep.subr.mxu0 0.0
    %2847 = vmatpush1.xpose.msra.mxu0 0.0
    %2848 = vmatprep.subr.mxu0 0.0
    %2849 = vmatpush1.xpose.msra.mxu0 0.0
    %2850 = vmatprep.subr.mxu0 0.0
    %2851 = vmatpush1.xpose.msra.mxu0 0.0
    %2852 = vmatprep.subr.mxu0 0.0
    %2853 = vmatpush1.xpose.msra.mxu0 0.0
    %2854 = vmatprep.subr.mxu0 0.0
    %2855 = vmatpush1.xpose.msra.mxu0 0.0
    %2856 = vmatprep.subr.mxu0 0.0
    %2857 = vmatpush1.xpose.msra.mxu0 0.0
    %2858 = vmatprep.subr.mxu0 0.0
    %2859 = vmatpush1.xpose.msra.mxu0 0.0
    %2860 = vmatprep.subr.mxu0 0.0
    %2861 = vmatpush1.xpose.msra.mxu0 0.0
    %2862 = vmatprep.subr.mxu0 0.0
    %2863 = vmatpush1.xpose.msra.mxu0 0.0
    %2864 = vmatprep.subr.mxu0 0.0
    %2865 = vmatpush1.xpose.msra.mxu0 0.0
    %2866 = vmatprep.subr.mxu0 0.0
    %2867 = vmatpush1.xpose.msra.mxu0 0.0
    %2868 = vmatprep.subr.mxu0 0.0
    %2869 = vmatpush1.xpose.msra.mxu0 0.0
    %2870 = vmatprep.subr.mxu0 0.0
    %2871 = vmatpush1.xpose.msra.mxu0 0.0
    %2872 = vmatprep.mubr.f32.mxu0 0.0
    %2873 = vmatmul.mubr.f32.gmra.mrb[0].mxu0 %v2802
    %v2874 = vpop.f32.mrb[0].mxu0
    %v2875 = vadd.f32 0.0, %v2874
    %v2876 = vpop.f32.mrb[0].mxu0
    %2877 = vdwg.mxu0
    %v2878 = vsel %vm47, %v2277, 0
    %v2880 = vsel %vm47, %v2303, 0
    %v2882 = vsel %vm47, %v2305, 0
    %2884 = vmatprep.subr.mxu0 0.0
    %2885 = vmatpush1.xpose.msra.mxu0 %v2880
    %2886 = vmatprep.subr.mxu0 0.0
    %2887 = vmatpush1.xpose.msra.mxu0 %v2882
    %2888 = vmatprep.subr.mxu0 0.0
    %2889 = vmatpush1.xpose.msra.mxu0 0.0
    %2890 = vmatprep.subr.mxu0 0.0
    %2891 = vmatpush1.xpose.msra.mxu0 0.0
    %2892 = vmatprep.subr.mxu0 0.0
    %2893 = vmatpush1.xpose.msra.mxu0 0.0
    %2894 = vmatprep.subr.mxu0 0.0
    %2895 = vmatpush1.xpose.msra.mxu0 0.0
    %2896 = vmatprep.subr.mxu0 0.0
    %2897 = vmatpush1.xpose.msra.mxu0 0.0
    %2898 = vmatprep.subr.mxu0 0.0
    %2899 = vmatpush1.xpose.msra.mxu0 0.0
    %2900 = vmatprep.subr.mxu0 0.0
    %2901 = vmatpush1.xpose.msra.mxu0 0.0
    %2902 = vmatprep.subr.mxu0 0.0
    %2903 = vmatpush1.xpose.msra.mxu0 0.0
    %2904 = vmatprep.subr.mxu0 0.0
    %2905 = vmatpush1.xpose.msra.mxu0 0.0
    %2906 = vmatprep.subr.mxu0 0.0
    %2907 = vmatpush1.xpose.msra.mxu0 0.0
    %2908 = vmatprep.subr.mxu0 0.0
    %2909 = vmatpush1.xpose.msra.mxu0 0.0
    %2910 = vmatprep.subr.mxu0 0.0
    %2911 = vmatpush1.xpose.msra.mxu0 0.0
    %2912 = vmatprep.subr.mxu0 0.0
    %2913 = vmatpush1.xpose.msra.mxu0 0.0
    %2914 = vmatprep.subr.mxu0 0.0
    %2915 = vmatpush1.xpose.msra.mxu0 0.0
    %2916 = vmatprep.subr.mxu0 0.0
    %2917 = vmatpush1.xpose.msra.mxu0 0.0
    %2918 = vmatprep.subr.mxu0 0.0
    %2919 = vmatpush1.xpose.msra.mxu0 0.0
    %2920 = vmatprep.subr.mxu0 0.0
    %2921 = vmatpush1.xpose.msra.mxu0 0.0
    %2922 = vmatprep.subr.mxu0 0.0
    %2923 = vmatpush1.xpose.msra.mxu0 0.0
    %2924 = vmatprep.subr.mxu0 0.0
    %2925 = vmatpush1.xpose.msra.mxu0 0.0
    %2926 = vmatprep.subr.mxu0 0.0
    %2927 = vmatpush1.xpose.msra.mxu0 0.0
    %2928 = vmatprep.subr.mxu0 0.0
    %2929 = vmatpush1.xpose.msra.mxu0 0.0
    %2930 = vmatprep.subr.mxu0 0.0
    %2931 = vmatpush1.xpose.msra.mxu0 0.0
    %2932 = vmatprep.subr.mxu0 0.0
    %2933 = vmatpush1.xpose.msra.mxu0 0.0
    %2934 = vmatprep.subr.mxu0 0.0
    %2935 = vmatpush1.xpose.msra.mxu0 0.0
    %2936 = vmatprep.subr.mxu0 0.0
    %2937 = vmatpush1.xpose.msra.mxu0 0.0
    %2938 = vmatprep.subr.mxu0 0.0
    %2939 = vmatpush1.xpose.msra.mxu0 0.0
    %2940 = vmatprep.subr.mxu0 0.0
    %2941 = vmatpush1.xpose.msra.mxu0 0.0
    %2942 = vmatprep.subr.mxu0 0.0
    %2943 = vmatpush1.xpose.msra.mxu0 0.0
    %2944 = vmatprep.subr.mxu0 0.0
    %2945 = vmatpush1.xpose.msra.mxu0 0.0
    %2946 = vmatprep.subr.mxu0 0.0
    %2947 = vmatpush1.xpose.msra.mxu0 0.0
    %2948 = vmatprep.mubr.f32.mxu0 0.0
    %2949 = vmatmul.mubr.f32.gmra.mrb[0].mxu0 %v2878
    %v2950 = vpop.f32.mrb[0].mxu0
    %v2951 = vadd.f32 0.0, %v2950
    %v2952 = vpop.f32.mrb[0].mxu0
    %2953 = vdwg.mxu0
    %vm2954 = vcmask 130048
    %v2955 = vsel %vm2954, %v2419, -inf
    %2956 = vmax.xlane.f32.xlu0 %v2955
    %v2957 = vpop.xlane.xlu0 %2956
    %v2958 = vsel %vm2954, %v2495, -inf
    %2959 = vmax.xlane.f32.xlu0 %v2958
    %v2960 = vpop.xlane.xlu0 %2959
    %v2961 = vsel %vm2954, %v2571, -inf
    %2962 = vmax.xlane.f32.xlu0 %v2961
    %v2963 = vpop.xlane.xlu0 %2962
    %v2964 = vsel %vm2954, %v2647, -inf
    %2965 = vmax.xlane.f32.xlu0 %v2964
    %v2966 = vpop.xlane.xlu0 %2965
    %v2967 = vsel %vm2954, %v2723, -inf
    %2968 = vmax.xlane.f32.xlu0 %v2967
    %v2969 = vpop.xlane.xlu0 %2968
    %v2970 = vsel %vm2954, %v2799, -inf
    %2971 = vmax.xlane.f32.xlu0 %v2970
    %v2972 = vpop.xlane.xlu0 %2971
    %v2973 = vsel %vm2954, %v2875, -inf
    %2974 = vmax.xlane.f32.xlu0 %v2973
    %v2975 = vpop.xlane.xlu0 %2974
    %v2976 = vsel %vm2954, %v2951, -inf
    %2977 = vmax.xlane.f32.xlu0 %v2976
    %v2978 = vpop.xlane.xlu0 %2977
    %v2979 = vsub.f32 %v2419, %v2957
    %v2980 = vsub.f32 %v2495, %v2960
    %v2981 = vsub.f32 %v2571, %v2963
    %v2982 = vsub.f32 %v2647, %v2966
    %v2983 = vsub.f32 %v2723, %v2969
    %v2984 = vsub.f32 %v2799, %v2972
    %v2985 = vsub.f32 %v2875, %v2975
    %v2986 = vsub.f32 %v2951, %v2978
    %v2987 = vmul.f32 %v2979, 1.442695
    %v2988 = vpow.pop %v2987
    %v2989 = vmul.f32 %v2980, 1.442695
    %v2990 = vpow.pop %v2989
    %v2991 = vmul.f32 %v2981, 1.442695
    %v2992 = vpow.pop %v2991
    %v2993 = vmul.f32 %v2982, 1.442695
    %v2994 = vpow.pop %v2993
    %v2995 = vmul.f32 %v2983, 1.442695
    %v2996 = vpow.pop %v2995
    %v2997 = vmul.f32 %v2984, 1.442695
    %v2998 = vpow.pop %v2997
    %v2999 = vmul.f32 %v2985, 1.442695
    %v3000 = vpow.pop %v2999
    %v3001 = vmul.f32 %v2986, 1.442695
    %v3002 = vpow.pop %v3001
    %v3003 = vsel %vm2954, %v2988, 0.0
    %3004 = vadd.xlane.f32.xlu0 %v3003
    %v3005 = vpop.xlane.xlu0 %3004
    %v3006 = vsel %vm2954, %v2990, 0.0
    %3007 = vadd.xlane.f32.xlu0 %v3006
    %v3008 = vpop.xlane.xlu0 %3007
    %v3009 = vsel %vm2954, %v2992, 0.0
    %3010 = vadd.xlane.f32.xlu0 %v3009
    %v3011 = vpop.xlane.xlu0 %3010
    %v3012 = vsel %vm2954, %v2994, 0.0
    %3013 = vadd.xlane.f32.xlu0 %v3012
    %v3014 = vpop.xlane.xlu0 %3013
    %v3015 = vsel %vm2954, %v2996, 0.0
    %3016 = vadd.xlane.f32.xlu0 %v3015
    %v3017 = vpop.xlane.xlu0 %3016
    %v3018 = vsel %vm2954, %v2998, 0.0
    %3019 = vadd.xlane.f32.xlu0 %v3018
    %v3020 = vpop.xlane.xlu0 %3019
    %v3021 = vsel %vm2954, %v3000, 0.0
    %3022 = vadd.xlane.f32.xlu0 %v3021
    %v3023 = vpop.xlane.xlu0 %3022
    %v3024 = vsel %vm2954, %v3002, 0.0
    %3025 = vadd.xlane.f32.xlu0 %v3024
    %v3026 = vpop.xlane.xlu0 %3025
    %v3027 = vrcp.pop %v3005
    %v3028 = vmul.f32 %v2988, %v3027
    %v3029 = vrcp.pop %v3008
    %v3030 = vmul.f32 %v2990, %v3029
    %v3031 = vrcp.pop %v3011
    %v3032 = vmul.f32 %v2992, %v3031
    %v3033 = vrcp.pop %v3014
    %v3034 = vmul.f32 %v2994, %v3033
    %v3035 = vrcp.pop %v3017
    %v3036 = vmul.f32 %v2996, %v3035
    %v3037 = vrcp.pop %v3020
    %v3038 = vmul.f32 %v2998, %v3037
    %v3039 = vrcp.pop %v3023
    %v3040 = vmul.f32 %v3000, %v3039
    %v3041 = vrcp.pop %v3026
    %v3042 = vmul.f32 %v3002, %v3041
    %v3044 = vsel %vm2954, %v3028, 0
    %3046 = vmatprep.subr.mxu0 0.0
    %3047 = vmatpush1.msra.mxu0 %v2244
    %3048 = vmatprep.subr.mxu0 0.0
    %3049 = vmatpush1.msra.mxu0 %v2250
    %3050 = vmatprep.subr.mxu0 0.0
    %3051 = vmatpush1.msra.mxu0 0.0
    %3052 = vmatprep.subr.mxu0 0.0
    %3053 = vmatpush1.msra.mxu0 0.0
    %3054 = vmatprep.subr.mxu0 0.0
    %3055 = vmatpush1.msra.mxu0 0.0
    %3056 = vmatprep.subr.mxu0 0.0
    %3057 = vmatpush1.msra.mxu0 0.0
    %3058 = vmatprep.subr.mxu0 0.0
    %3059 = vmatpush1.msra.mxu0 0.0
    %3060 = vmatprep.subr.mxu0 0.0
    %3061 = vmatpush1.msra.mxu0 0.0
    %3062 = vmatprep.subr.mxu0 0.0
    %3063 = vmatpush1.msra.mxu0 0.0
    %3064 = vmatprep.subr.mxu0 0.0
    %3065 = vmatpush1.msra.mxu0 0.0
    %3066 = vmatprep.subr.mxu0 0.0
    %3067 = vmatpush1.msra.mxu0 0.0
    %3068 = vmatprep.subr.mxu0 0.0
    %3069 = vmatpush1.msra.mxu0 0.0
    %3070 = vmatprep.subr.mxu0 0.0
    %3071 = vmatpush1.msra.mxu0 0.0
    %3072 = vmatprep.subr.mxu0 0.0
    %3073 = vmatpush1.msra.mxu0 0.0
    %3074 = vmatprep.subr.mxu0 0.0
    %3075 = vmatpush1.msra.mxu0 0.0
    %3076 = vmatprep.subr.mxu0 0.0
    %3077 = vmatpush1.msra.mxu0 0.0
    %3078 = vmatprep.subr.mxu0 0.0
    %3079 = vmatpush1.msra.mxu0 0.0
    %3080 = vmatprep.subr.mxu0 0.0
    %3081 = vmatpush1.msra.mxu0 0.0
    %3082 = vmatprep.subr.mxu0 0.0
    %3083 = vmatpush1.msra.mxu0 0.0
    %3084 = vmatprep.subr.mxu0 0.0
    %3085 = vmatpush1.msra.mxu0 0.0
    %3086 = vmatprep.subr.mxu0 0.0
    %3087 = vmatpush1.msra.mxu0 0.0
    %3088 = vmatprep.subr.mxu0 0.0
    %3089 = vmatpush1.msra.mxu0 0.0
    %3090 = vmatprep.subr.mxu0 0.0
    %3091 = vmatpush1.msra.mxu0 0.0
    %3092 = vmatprep.subr.mxu0 0.0
    %3093 = vmatpush1.msra.mxu0 0.0
    %3094 = vmatprep.subr.mxu0 0.0
    %3095 = vmatpush1.msra.mxu0 0.0
    %3096 = vmatprep.subr.mxu0 0.0
    %3097 = vmatpush1.msra.mxu0 0.0
    %3098 = vmatprep.subr.mxu0 0.0
    %3099 = vmatpush1.msra.mxu0 0.0
    %3100 = vmatprep.subr.mxu0 0.0
    %3101 = vmatpush1.msra.mxu0 0.0
    %3102 = vmatprep.subr.mxu0 0.0
    %3103 = vmatpush1.msra.mxu0 0.0
    %3104 = vmatprep.subr.mxu0 0.0
    %3105 = vmatpush1.msra.mxu0 0.0
    %3106 = vmatprep.subr.mxu0 0.0
    %3107 = vmatpush1.msra.mxu0 0.0
    %3108 = vmatprep.subr.mxu0 0.0
    %3109 = vmatpush1.msra.mxu0 0.0
    %3110 = vmatprep.mubr.f32.mxu0 0.0
    %3111 = vmatmul.mubr.f32.gmra.mrb[0].mxu0 %v3044
    %v3112 = vpop.f32.mrb[0].mxu0
    %v3113 = vadd.f32 0.0, %v3112
    %v3114 = vpop.f32.mrb[0].mxu0
    %3115 = vdwg.mxu0
    %v3117 = vsel %vm2954, %v3030, 0
    %3119 = vmatprep.subr.mxu0 0.0
    %3120 = vmatpush1.msra.mxu0 %v2256
    %3121 = vmatprep.subr.mxu0 0.0
    %3122 = vmatpush1.msra.mxu0 %v2262
    %3123 = vmatprep.subr.mxu0 0.0
    %3124 = vmatpush1.msra.mxu0 0.0
    %3125 = vmatprep.subr.mxu0 0.0
    %3126 = vmatpush1.msra.mxu0 0.0
    %3127 = vmatprep.subr.mxu0 0.0
    %3128 = vmatpush1.msra.mxu0 0.0
    %3129 = vmatprep.subr.mxu0 0.0
    %3130 = vmatpush1.msra.mxu0 0.0
    %3131 = vmatprep.subr.mxu0 0.0
    %3132 = vmatpush1.msra.mxu0 0.0
    %3133 = vmatprep.subr.mxu0 0.0
    %3134 = vmatpush1.msra.mxu0 0.0
    %3135 = vmatprep.subr.mxu0 0.0
    %3136 = vmatpush1.msra.mxu0 0.0
    %3137 = vmatprep.subr.mxu0 0.0
    %3138 = vmatpush1.msra.mxu0 0.0
    %3139 = vmatprep.subr.mxu0 0.0
    %3140 = vmatpush1.msra.mxu0 0.0
    %3141 = vmatprep.subr.mxu0 0.0
    %3142 = vmatpush1.msra.mxu0 0.0
    %3143 = vmatprep.subr.mxu0 0.0
    %3144 = vmatpush1.msra.mxu0 0.0
    %3145 = vmatprep.subr.mxu0 0.0
    %3146 = vmatpush1.msra.mxu0 0.0
    %3147 = vmatprep.subr.mxu0 0.0
    %3148 = vmatpush1.msra.mxu0 0.0
    %3149 = vmatprep.subr.mxu0 0.0
    %3150 = vmatpush1.msra.mxu0 0.0
    %3151 = vmatprep.subr.mxu0 0.0
    %3152 = vmatpush1.msra.mxu0 0.0
    %3153 = vmatprep.subr.mxu0 0.0
    %3154 = vmatpush1.msra.mxu0 0.0
    %3155 = vmatprep.subr.mxu0 0.0
    %3156 = vmatpush1.msra.mxu0 0.0
    %3157 = vmatprep.subr.mxu0 0.0
    %3158 = vmatpush1.msra.mxu0 0.0
    %3159 = vmatprep.subr.mxu0 0.0
    %3160 = vmatpush1.msra.mxu0 0.0
    %3161 = vmatprep.subr.mxu0 0.0
    %3162 = vmatpush1.msra.mxu0 0.0
    %3163 = vmatprep.subr.mxu0 0.0
    %3164 = vmatpush1.msra.mxu0 0.0
    %3165 = vmatprep.subr.mxu0 0.0
    %3166 = vmatpush1.msra.mxu0 0.0
    %3167 = vmatprep.subr.mxu0 0.0
    %3168 = vmatpush1.msra.mxu0 0.0
    %3169 = vmatprep.subr.mxu0 0.0
    %3170 = vmatpush1.msra.mxu0 0.0
    %3171 = vmatprep.subr.mxu0 0.0
    %3172 = vmatpush1.msra.mxu0 0.0
    %3173 = vmatprep.subr.mxu0 0.0
    %3174 = vmatpush1.msra.mxu0 0.0
    %3175 = vmatprep.subr.mxu0 0.0
    %3176 = vmatpush1.msra.mxu0 0.0
    %3177 = vmatprep.subr.mxu0 0.0
    %3178 = vmatpush1.msra.mxu0 0.0
    %3179 = vmatprep.subr.mxu0 0.0
    %3180 = vmatpush1.msra.mxu0 0.0
    %3181 = vmatprep.subr.mxu0 0.0
    %3182 = vmatpush1.msra.mxu0 0.0
    %3183 = vmatprep.mubr.f32.mxu0 0.0
    %3184 = vmatmul.mubr.f32.gmra.mrb[0].mxu0 %v3117
    %v3185 = vpop.f32.mrb[0].mxu0
    %v3186 = vadd.f32 0.0, %v3185
    %v3187 = vpop.f32.mrb[0].mxu0
    %3188 = vdwg.mxu0
    %v3190 = vsel %vm2954, %v3032, 0
    %3192 = vmatprep.subr.mxu0 0.0
    %3193 = vmatpush1.msra.mxu0 %v2311
    %3194 = vmatprep.subr.mxu0 0.0
    %3195 = vmatpush1.msra.mxu0 %v2313
    %3196 = vmatprep.subr.mxu0 0.0
    %3197 = vmatpush1.msra.mxu0 0.0
    %3198 = vmatprep.subr.mxu0 0.0
    %3199 = vmatpush1.msra.mxu0 0.0
    %3200 = vmatprep.subr.mxu0 0.0
    %3201 = vmatpush1.msra.mxu0 0.0
    %3202 = vmatprep.subr.mxu0 0.0
    %3203 = vmatpush1.msra.mxu0 0.0
    %3204 = vmatprep.subr.mxu0 0.0
    %3205 = vmatpush1.msra.mxu0 0.0
    %3206 = vmatprep.subr.mxu0 0.0
    %3207 = vmatpush1.msra.mxu0 0.0
    %3208 = vmatprep.subr.mxu0 0.0
    %3209 = vmatpush1.msra.mxu0 0.0
    %3210 = vmatprep.subr.mxu0 0.0
    %3211 = vmatpush1.msra.mxu0 0.0
    %3212 = vmatprep.subr.mxu0 0.0
    %3213 = vmatpush1.msra.mxu0 0.0
    %3214 = vmatprep.subr.mxu0 0.0
    %3215 = vmatpush1.msra.mxu0 0.0
    %3216 = vmatprep.subr.mxu0 0.0
    %3217 = vmatpush1.msra.mxu0 0.0
    %3218 = vmatprep.subr.mxu0 0.0
    %3219 = vmatpush1.msra.mxu0 0.0
    %3220 = vmatprep.subr.mxu0 0.0
    %3221 = vmatpush1.msra.mxu0 0.0
    %3222 = vmatprep.subr.mxu0 0.0
    %3223 = vmatpush1.msra.mxu0 0.0
    %3224 = vmatprep.subr.mxu0 0.0
    %3225 = vmatpush1.msra.mxu0 0.0
    %3226 = vmatprep.subr.mxu0 0.0
    %3227 = vmatpush1.msra.mxu0 0.0
    %3228 = vmatprep.subr.mxu0 0.0
    %3229 = vmatpush1.msra.mxu0 0.0
    %3230 = vmatprep.subr.mxu0 0.0
    %3231 = vmatpush1.msra.mxu0 0.0
    %3232 = vmatprep.subr.mxu0 0.0
    %3233 = vmatpush1.msra.mxu0 0.0
    %3234 = vmatprep.subr.mxu0 0.0
    %3235 = vmatpush1.msra.mxu0 0.0
    %3236 = vmatprep.subr.mxu0 0.0
    %3237 = vmatpush1.msra.mxu0 0.0
    %3238 = vmatprep.subr.mxu0 0.0
    %3239 = vmatpush1.msra.mxu0 0.0
    %3240 = vmatprep.subr.mxu0 0.0
    %3241 = vmatpush1.msra.mxu0 0.0
    %3242 = vmatprep.subr.mxu0 0.0
    %3243 = vmatpush1.msra.mxu0 0.0
    %3244 = vmatprep.subr.mxu0 0.0
    %3245 = vmatpush1.msra.mxu0 0.0
    %3246 = vmatprep.subr.mxu0 0.0
    %3247 = vmatpush1.msra.mxu0 0.0
    %3248 = vmatprep.subr.mxu0 0.0
    %3249 = vmatpush1.msra.mxu0 0.0
    %3250 = vmatprep.subr.mxu0 0.0
    %3251 = vmatpush1.msra.mxu0 0.0
    %3252 = vmatprep.subr.mxu0 0.0
    %3253 = vmatpush1.msra.mxu0 0.0
    %3254 = vmatprep.subr.mxu0 0.0
    %3255 = vmatpush1.msra.mxu0 0.0
    %3256 = vmatprep.mubr.f32.mxu0 0.0
    %3257 = vmatmul.mubr.f32.gmra.mrb[0].mxu0 %v3190
    %v3258 = vpop.f32.mrb[0].mxu0
    %v3259 = vadd.f32 0.0, %v3258
    %v3260 = vpop.f32.mrb[0].mxu0
    %3261 = vdwg.mxu0
    %v3263 = vsel %vm2954, %v3034, 0
    %3265 = vmatprep.subr.mxu0 0.0
    %3266 = vmatpush1.msra.mxu0 %v2315
    %3267 = vmatprep.subr.mxu0 0.0
    %3268 = vmatpush1.msra.mxu0 %v2317
    %3269 = vmatprep.subr.mxu0 0.0
    %3270 = vmatpush1.msra.mxu0 0.0
    %3271 = vmatprep.subr.mxu0 0.0
    %3272 = vmatpush1.msra.mxu0 0.0
    %3273 = vmatprep.subr.mxu0 0.0
    %3274 = vmatpush1.msra.mxu0 0.0
    %3275 = vmatprep.subr.mxu0 0.0
    %3276 = vmatpush1.msra.mxu0 0.0
    %3277 = vmatprep.subr.mxu0 0.0
    %3278 = vmatpush1.msra.mxu0 0.0
    %3279 = vmatprep.subr.mxu0 0.0
    %3280 = vmatpush1.msra.mxu0 0.0
    %3281 = vmatprep.subr.mxu0 0.0
    %3282 = vmatpush1.msra.mxu0 0.0
    %3283 = vmatprep.subr.mxu0 0.0
    %3284 = vmatpush1.msra.mxu0 0.0
    %3285 = vmatprep.subr.mxu0 0.0
    %3286 = vmatpush1.msra.mxu0 0.0
    %3287 = vmatprep.subr.mxu0 0.0
    %3288 = vmatpush1.msra.mxu0 0.0
    %3289 = vmatprep.subr.mxu0 0.0
    %3290 = vmatpush1.msra.mxu0 0.0
    %3291 = vmatprep.subr.mxu0 0.0
    %3292 = vmatpush1.msra.mxu0 0.0
    %3293 = vmatprep.subr.mxu0 0.0
    %3294 = vmatpush1.msra.mxu0 0.0
    %3295 = vmatprep.subr.mxu0 0.0
    %3296 = vmatpush1.msra.mxu0 0.0
    %3297 = vmatprep.subr.mxu0 0.0
    %3298 = vmatpush1.msra.mxu0 0.0
    %3299 = vmatprep.subr.mxu0 0.0
    %3300 = vmatpush1.msra.mxu0 0.0
    %3301 = vmatprep.subr.mxu0 0.0
    %3302 = vmatpush1.msra.mxu0 0.0
    %3303 = vmatprep.subr.mxu0 0.0
    %3304 = vmatpush1.msra.mxu0 0.0
    %3305 = vmatprep.subr.mxu0 0.0
    %3306 = vmatpush1.msra.mxu0 0.0
    %3307 = vmatprep.subr.mxu0 0.0
    %3308 = vmatpush1.msra.mxu0 0.0
    %3309 = vmatprep.subr.mxu0 0.0
    %3310 = vmatpush1.msra.mxu0 0.0
    %3311 = vmatprep.subr.mxu0 0.0
    %3312 = vmatpush1.msra.mxu0 0.0
    %3313 = vmatprep.subr.mxu0 0.0
    %3314 = vmatpush1.msra.mxu0 0.0
    %3315 = vmatprep.subr.mxu0 0.0
    %3316 = vmatpush1.msra.mxu0 0.0
    %3317 = vmatprep.subr.mxu0 0.0
    %3318 = vmatpush1.msra.mxu0 0.0
    %3319 = vmatprep.subr.mxu0 0.0
    %3320 = vmatpush1.msra.mxu0 0.0
    %3321 = vmatprep.subr.mxu0 0.0
    %3322 = vmatpush1.msra.mxu0 0.0
    %3323 = vmatprep.subr.mxu0 0.0
    %3324 = vmatpush1.msra.mxu0 0.0
    %3325 = vmatprep.subr.mxu0 0.0
    %3326 = vmatpush1.msra.mxu0 0.0
    %3327 = vmatprep.subr.mxu0 0.0
    %3328 = vmatpush1.msra.mxu0 0.0
    %3329 = vmatprep.mubr.f32.mxu0 0.0
    %3330 = vmatmul.mubr.f32.gmra.mrb[0].mxu0 %v3263
    %v3331 = vpop.f32.mrb[0].mxu0
    %v3332 = vadd.f32 0.0, %v3331
    %v3333 = vpop.f32.mrb[0].mxu0
    %3334 = vdwg.mxu0
    %v3336 = vsel %vm2954, %v3036, 0
    %3338 = vmatprep.subr.mxu0 0.0
    %3339 = vmatpush1.msra.mxu0 %v2323
    %3340 = vmatprep.subr.mxu0 0.0
    %3341 = vmatpush1.msra.mxu0 %v2325
    %3342 = vmatprep.subr.mxu0 0.0
    %3343 = vmatpush1.msra.mxu0 0.0
    %3344 = vmatprep.subr.mxu0 0.0
    %3345 = vmatpush1.msra.mxu0 0.0
    %3346 = vmatprep.subr.mxu0 0.0
    %3347 = vmatpush1.msra.mxu0 0.0
    %3348 = vmatprep.subr.mxu0 0.0
    %3349 = vmatpush1.msra.mxu0 0.0
    %3350 = vmatprep.subr.mxu0 0.0
    %3351 = vmatpush1.msra.mxu0 0.0
    %3352 = vmatprep.subr.mxu0 0.0
    %3353 = vmatpush1.msra.mxu0 0.0
    %3354 = vmatprep.subr.mxu0 0.0
    %3355 = vmatpush1.msra.mxu0 0.0
    %3356 = vmatprep.subr.mxu0 0.0
    %3357 = vmatpush1.msra.mxu0 0.0
    %3358 = vmatprep.subr.mxu0 0.0
    %3359 = vmatpush1.msra.mxu0 0.0
    %3360 = vmatprep.subr.mxu0 0.0
    %3361 = vmatpush1.msra.mxu0 0.0
    %3362 = vmatprep.subr.mxu0 0.0
    %3363 = vmatpush1.msra.mxu0 0.0
    %3364 = vmatprep.subr.mxu0 0.0
    %3365 = vmatpush1.msra.mxu0 0.0
    %3366 = vmatprep.subr.mxu0 0.0
    %3367 = vmatpush1.msra.mxu0 0.0
    %3368 = vmatprep.subr.mxu0 0.0
    %3369 = vmatpush1.msra.mxu0 0.0
    %3370 = vmatprep.subr.mxu0 0.0
    %3371 = vmatpush1.msra.mxu0 0.0
    %3372 = vmatprep.subr.mxu0 0.0
    %3373 = vmatpush1.msra.mxu0 0.0
    %3374 = vmatprep.subr.mxu0 0.0
    %3375 = vmatpush1.msra.mxu0 0.0
    %3376 = vmatprep.subr.mxu0 0.0
    %3377 = vmatpush1.msra.mxu0 0.0
    %3378 = vmatprep.subr.mxu0 0.0
    %3379 = vmatpush1.msra.mxu0 0.0
    %3380 = vmatprep.subr.mxu0 0.0
    %3381 = vmatpush1.msra.mxu0 0.0
    %3382 = vmatprep.subr.mxu0 0.0
    %3383 = vmatpush1.msra.mxu0 0.0
    %3384 = vmatprep.subr.mxu0 0.0
    %3385 = vmatpush1.msra.mxu0 0.0
    %3386 = vmatprep.subr.mxu0 0.0
    %3387 = vmatpush1.msra.mxu0 0.0
    %3388 = vmatprep.subr.mxu0 0.0
    %3389 = vmatpush1.msra.mxu0 0.0
    %3390 = vmatprep.subr.mxu0 0.0
    %3391 = vmatpush1.msra.mxu0 0.0
    %3392 = vmatprep.subr.mxu0 0.0
    %3393 = vmatpush1.msra.mxu0 0.0
    %3394 = vmatprep.subr.mxu0 0.0
    %3395 = vmatpush1.msra.mxu0 0.0
    %3396 = vmatprep.subr.mxu0 0.0
    %3397 = vmatpush1.msra.mxu0 0.0
    %3398 = vmatprep.subr.mxu0 0.0
    %3399 = vmatpush1.msra.mxu0 0.0
    %3400 = vmatprep.subr.mxu0 0.0
    %3401 = vmatpush1.msra.mxu0 0.0
    %3402 = vmatprep.mubr.f32.mxu0 0.0
    %3403 = vmatmul.mubr.f32.gmra.mrb[0].mxu0 %v3336
    %v3404 = vpop.f32.mrb[0].mxu0
    %v3405 = vadd.f32 0.0, %v3404
    %v3406 = vpop.f32.mrb[0].mxu0
    %3407 = vdwg.mxu0
    %v3409 = vsel %vm2954, %v3038, 0
    %3411 = vmatprep.subr.mxu0 0.0
    %3412 = vmatpush1.msra.mxu0 %v2327
    %3413 = vmatprep.subr.mxu0 0.0
    %3414 = vmatpush1.msra.mxu0 %v2329
    %3415 = vmatprep.subr.mxu0 0.0
    %3416 = vmatpush1.msra.mxu0 0.0
    %3417 = vmatprep.subr.mxu0 0.0
    %3418 = vmatpush1.msra.mxu0 0.0
    %3419 = vmatprep.subr.mxu0 0.0
    %3420 = vmatpush1.msra.mxu0 0.0
    %3421 = vmatprep.subr.mxu0 0.0
    %3422 = vmatpush1.msra.mxu0 0.0
    %3423 = vmatprep.subr.mxu0 0.0
    %3424 = vmatpush1.msra.mxu0 0.0
    %3425 = vmatprep.subr.mxu0 0.0
    %3426 = vmatpush1.msra.mxu0 0.0
    %3427 = vmatprep.subr.mxu0 0.0
    %3428 = vmatpush1.msra.mxu0 0.0
    %3429 = vmatprep.subr.mxu0 0.0
    %3430 = vmatpush1.msra.mxu0 0.0
    %3431 = vmatprep.subr.mxu0 0.0
    %3432 = vmatpush1.msra.mxu0 0.0
    %3433 = vmatprep.subr.mxu0 0.0
    %3434 = vmatpush1.msra.mxu0 0.0
    %3435 = vmatprep.subr.mxu0 0.0
    %3436 = vmatpush1.msra.mxu0 0.0
    %3437 = vmatprep.subr.mxu0 0.0
    %3438 = vmatpush1.msra.mxu0 0.0
    %3439 = vmatprep.subr.mxu0 0.0
    %3440 = vmatpush1.msra.mxu0 0.0
    %3441 = vmatprep.subr.mxu0 0.0
    %3442 = vmatpush1.msra.mxu0 0.0
    %3443 = vmatprep.subr.mxu0 0.0
    %3444 = vmatpush1.msra.mxu0 0.0
    %3445 = vmatprep.subr.mxu0 0.0
    %3446 = vmatpush1.msra.mxu0 0.0
    %3447 = vmatprep.subr.mxu0 0.0
    %3448 = vmatpush1.msra.mxu0 0.0
    %3449 = vmatprep.subr.mxu0 0.0
    %3450 = vmatpush1.msra.mxu0 0.0
    %3451 = vmatprep.subr.mxu0 0.0
    %3452 = vmatpush1.msra.mxu0 0.0
    %3453 = vmatprep.subr.mxu0 0.0
    %3454 = vmatpush1.msra.mxu0 0.0
    %3455 = vmatprep.subr.mxu0 0.0
    %3456 = vmatpush1.msra.mxu0 0.0
    %3457 = vmatprep.subr.mxu0 0.0
    %3458 = vmatpush1.msra.mxu0 0.0
    %3459 = vmatprep.subr.mxu0 0.0
    %3460 = vmatpush1.msra.mxu0 0.0
    %3461 = vmatprep.subr.mxu0 0.0
    %3462 = vmatpush1.msra.mxu0 0.0
    %3463 = vmatprep.subr.mxu0 0.0
    %3464 = vmatpush1.msra.mxu0 0.0
    %3465 = vmatprep.subr.mxu0 0.0
    %3466 = vmatpush1.msra.mxu0 0.0
    %3467 = vmatprep.subr.mxu0 0.0
    %3468 = vmatpush1.msra.mxu0 0.0
    %3469 = vmatprep.subr.mxu0 0.0
    %3470 = vmatpush1.msra.mxu0 0.0
    %3471 = vmatprep.subr.mxu0 0.0
    %3472 = vmatpush1.msra.mxu0 0.0
    %3473 = vmatprep.subr.mxu0 0.0
    %3474 = vmatpush1.msra.mxu0 0.0
    %3475 = vmatprep.mubr.f32.mxu0 0.0
    %3476 = vmatmul.mubr.f32.gmra.mrb[0].mxu0 %v3409
    %v3477 = vpop.f32.mrb[0].mxu0
    %v3478 = vadd.f32 0.0, %v3477
    %v3479 = vpop.f32.mrb[0].mxu0
    %3480 = vdwg.mxu0
    %v3482 = vsel %vm2954, %v3040, 0
    %3484 = vmatprep.subr.mxu0 0.0
    %3485 = vmatpush1.msra.mxu0 %v2335
    %3486 = vmatprep.subr.mxu0 0.0
    %3487 = vmatpush1.msra.mxu0 %v2337
    %3488 = vmatprep.subr.mxu0 0.0
    %3489 = vmatpush1.msra.mxu0 0.0
    %3490 = vmatprep.subr.mxu0 0.0
    %3491 = vmatpush1.msra.mxu0 0.0
    %3492 = vmatprep.subr.mxu0 0.0
    %3493 = vmatpush1.msra.mxu0 0.0
    %3494 = vmatprep.subr.mxu0 0.0
    %3495 = vmatpush1.msra.mxu0 0.0
    %3496 = vmatprep.subr.mxu0 0.0
    %3497 = vmatpush1.msra.mxu0 0.0
    %3498 = vmatprep.subr.mxu0 0.0
    %3499 = vmatpush1.msra.mxu0 0.0
    %3500 = vmatprep.subr.mxu0 0.0
    %3501 = vmatpush1.msra.mxu0 0.0
    %3502 = vmatprep.subr.mxu0 0.0
    %3503 = vmatpush1.msra.mxu0 0.0
    %3504 = vmatprep.subr.mxu0 0.0
    %3505 = vmatpush1.msra.mxu0 0.0
    %3506 = vmatprep.subr.mxu0 0.0
    %3507 = vmatpush1.msra.mxu0 0.0
    %3508 = vmatprep.subr.mxu0 0.0
    %3509 = vmatpush1.msra.mxu0 0.0
    %3510 = vmatprep.subr.mxu0 0.0
    %3511 = vmatpush1.msra.mxu0 0.0
    %3512 = vmatprep.subr.mxu0 0.0
    %3513 = vmatpush1.msra.mxu0 0.0
    %3514 = vmatprep.subr.mxu0 0.0
    %3515 = vmatpush1.msra.mxu0 0.0
    %3516 = vmatprep.subr.mxu0 0.0
    %3517 = vmatpush1.msra.mxu0 0.0
    %3518 = vmatprep.subr.mxu0 0.0
    %3519 = vmatpush1.msra.mxu0 0.0
    %3520 = vmatprep.subr.mxu0 0.0
    %3521 = vmatpush1.msra.mxu0 0.0
    %3522 = vmatprep.subr.mxu0 0.0
    %3523 = vmatpush1.msra.mxu0 0.0
    %3524 = vmatprep.subr.mxu0 0.0
    %3525 = vmatpush1.msra.mxu0 0.0
    %3526 = vmatprep.subr.mxu0 0.0
    %3527 = vmatpush1.msra.mxu0 0.0
    %3528 = vmatprep.subr.mxu0 0.0
    %3529 = vmatpush1.msra.mxu0 0.0
    %3530 = vmatprep.subr.mxu0 0.0
    %3531 = vmatpush1.msra.mxu0 0.0
    %3532 = vmatprep.subr.mxu0 0.0
    %3533 = vmatpush1.msra.mxu0 0.0
    %3534 = vmatprep.subr.mxu0 0.0
    %3535 = vmatpush1.msra.mxu0 0.0
    %3536 = vmatprep.subr.mxu0 0.0
    %3537 = vmatpush1.msra.mxu0 0.0
    %3538 = vmatprep.subr.mxu0 0.0
    %3539 = vmatpush1.msra.mxu0 0.0
    %3540 = vmatprep.subr.mxu0 0.0
    %3541 = vmatpush1.msra.mxu0 0.0
    %3542 = vmatprep.subr.mxu0 0.0
    %3543 = vmatpush1.msra.mxu0 0.0
    %3544 = vmatprep.subr.mxu0 0.0
    %3545 = vmatpush1.msra.mxu0 0.0
    %3546 = vmatprep.subr.mxu0 0.0
    %3547 = vmatpush1.msra.mxu0 0.0
    %3548 = vmatprep.mubr.f32.mxu0 0.0
    %3549 = vmatmul.mubr.f32.gmra.mrb[0].mxu0 %v3482
    %v3550 = vpop.f32.mrb[0].mxu0
    %v3551 = vadd.f32 0.0, %v3550
    %v3552 = vpop.f32.mrb[0].mxu0
    %3553 = vdwg.mxu0
    %v3555 = vsel %vm2954, %v3042, 0
    %3557 = vmatprep.subr.mxu0 0.0
    %3558 = vmatpush1.msra.mxu0 %v2339
    %3559 = vmatprep.subr.mxu0 0.0
    %3560 = vmatpush1.msra.mxu0 %v2341
    %3561 = vmatprep.subr.mxu0 0.0
    %3562 = vmatpush1.msra.mxu0 0.0
    %3563 = vmatprep.subr.mxu0 0.0
    %3564 = vmatpush1.msra.mxu0 0.0
    %3565 = vmatprep.subr.mxu0 0.0
    %3566 = vmatpush1.msra.mxu0 0.0
    %3567 = vmatprep.subr.mxu0 0.0
    %3568 = vmatpush1.msra.mxu0 0.0
    %3569 = vmatprep.subr.mxu0 0.0
    %3570 = vmatpush1.msra.mxu0 0.0
    %3571 = vmatprep.subr.mxu0 0.0
    %3572 = vmatpush1.msra.mxu0 0.0
    %3573 = vmatprep.subr.mxu0 0.0
    %3574 = vmatpush1.msra.mxu0 0.0
    %3575 = vmatprep.subr.mxu0 0.0
    %3576 = vmatpush1.msra.mxu0 0.0
    %3577 = vmatprep.subr.mxu0 0.0
    %3578 = vmatpush1.msra.mxu0 0.0
    %3579 = vmatprep.subr.mxu0 0.0
    %3580 = vmatpush1.msra.mxu0 0.0
    %3581 = vmatprep.subr.mxu0 0.0
    %3582 = vmatpush1.msra.mxu0 0.0
    %3583 = vmatprep.subr.mxu0 0.0
    %3584 = vmatpush1.msra.mxu0 0.0
    %3585 = vmatprep.subr.mxu0 0.0
    %3586 = vmatpush1.msra.mxu0 0.0
    %3587 = vmatprep.subr.mxu0 0.0
    %3588 = vmatpush1.msra.mxu0 0.0
    %3589 = vmatprep.subr.mxu0 0.0
    %3590 = vmatpush1.msra.mxu0 0.0
    %3591 = vmatprep.subr.mxu0 0.0
    %3592 = vmatpush1.msra.mxu0 0.0
    %3593 = vmatprep.subr.mxu0 0.0
    %3594 = vmatpush1.msra.mxu0 0.0
    %3595 = vmatprep.subr.mxu0 0.0
    %3596 = vmatpush1.msra.mxu0 0.0
    %3597 = vmatprep.subr.mxu0 0.0
    %3598 = vmatpush1.msra.mxu0 0.0
    %3599 = vmatprep.subr.mxu0 0.0
    %3600 = vmatpush1.msra.mxu0 0.0
    %3601 = vmatprep.subr.mxu0 0.0
    %3602 = vmatpush1.msra.mxu0 0.0
    %3603 = vmatprep.subr.mxu0 0.0
    %3604 = vmatpush1.msra.mxu0 0.0
    %3605 = vmatprep.subr.mxu0 0.0
    %3606 = vmatpush1.msra.mxu0 0.0
    %3607 = vmatprep.subr.mxu0 0.0
    %3608 = vmatpush1.msra.mxu0 0.0
    %3609 = vmatprep.subr.mxu0 0.0
    %3610 = vmatpush1.msra.mxu0 0.0
    %3611 = vmatprep.subr.mxu0 0.0
    %3612 = vmatpush1.msra.mxu0 0.0
    %3613 = vmatprep.subr.mxu0 0.0
    %3614 = vmatpush1.msra.mxu0 0.0
    %3615 = vmatprep.subr.mxu0 0.0
    %3616 = vmatpush1.msra.mxu0 0.0
    %3617 = vmatprep.subr.mxu0 0.0
    %3618 = vmatpush1.msra.mxu0 0.0
    %3619 = vmatprep.subr.mxu0 0.0
    %3620 = vmatpush1.msra.mxu0 0.0
    %3621 = vmatprep.mubr.f32.mxu0 0.0
    %3622 = vmatmul.mubr.f32.gmra.mrb[0].mxu0 %v3555
    %v3623 = vpop.f32.mrb[0].mxu0
    %v3624 = vadd.f32 0.0, %v3623
    %v3625 = vpop.f32.mrb[0].mxu0
    %3626 = vdwg.mxu0
    %3629 = vrot.lane.b32.xlu0 %v3259, 32
    %v3630 = vpop.permute.xlu0 %3629
    %3631 = vrot.lane.b32.xlu0 %v3332, 32
    %v3632 = vpop.permute.xlu0 %3631
    %3637 = vrot.lane.b32.xlu0 %v3405, 64
    %v3638 = vpop.permute.xlu0 %3637
    %3639 = vrot.lane.b32.xlu0 %v3478, 64
    %v3640 = vpop.permute.xlu0 %3639
    %3645 = vrot.lane.b32.xlu0 %v3551, 96
    %v3646 = vpop.permute.xlu0 %3645
    %3647 = vrot.lane.b32.xlu0 %v3624, 96
    %v3648 = vpop.permute.xlu0 %3647
    %v3651 = vsel %vm47, %v3113, %v3630
    %v3652 = vsel %vm47, %v3186, %v3632
    %v3653 = vsel %vm1952, %v3651, %v3638
    %v3654 = vsel %vm1952, %v3652, %v3640
    %v3655 = vsel %vm1957, %v3653, %v3646
    %v3656 = vsel %vm1957, %v3654, %v3648
    %s3657 = scalar_lea.vmem %s6, 128
    %v3658 = vld [vmem:[%s3657] sm:$0xff]
    %v3659 = vld [vmem:[%s3657 + $0x8] sm:$0xff]
    %v3660 = vld [vmem:[%s3657 + $0x10] sm:$0xff]
    %v3661 = vld [vmem:[%s3657 + $0x18] sm:$0xff]
    %v3662 = vld [vmem:[%s3657 + $0x20] sm:$0xff]
    %v3663 = vld [vmem:[%s3657 + $0x28] sm:$0xff]
    %v3664 = vld [vmem:[%s3657 + $0x30] sm:$0xff]
    %v3665 = vld [vmem:[%s3657 + $0x38] sm:$0xff]
    %v3666 = vld [vmem:[%s3657 + $0x40] sm:$0xff]
    %v3667 = vld [vmem:[%s3657 + $0x48] sm:$0xff]
    %v3668 = vld [vmem:[%s3657 + $0x50] sm:$0xff]
    %v3669 = vld [vmem:[%s3657 + $0x58] sm:$0xff]
    %v3670 = vld [vmem:[%s3657 + $0x60] sm:$0xff]
    %v3671 = vld [vmem:[%s3657 + $0x68] sm:$0xff]
    %v3672 = vld [vmem:[%s3657 + $0x70] sm:$0xff]
    %v3673 = vld [vmem:[%s3657 + $0x78] sm:$0xff]
    %v3674 = vld [vmem:[%s7 + $0x1] sm:$0x1]
    %v3675 = vlaneseq
    %v3676 = vshrl.u32 %v3675, 7
    %v3677 = vsub.s32 0, %v3676
    %v3678 = vrot.slane %v3674, %v3677
    %3679 = vmatprep.subr.mxu0 0.0
    %3680 = vmatpush1.msra.mxu0 %v3658
    %3681 = vmatprep.subr.mxu0 0.0
    %3682 = vmatpush1.msra.mxu0 %v3659
    %3683 = vmatprep.subr.mxu0 0.0
    %3684 = vmatpush1.msra.mxu0 %v3660
    %3685 = vmatprep.subr.mxu0 0.0
    %3686 = vmatpush1.msra.mxu0 %v3661
    %3687 = vmatprep.subr.mxu0 0.0
    %3688 = vmatpush1.msra.mxu0 %v3662
    %3689 = vmatprep.subr.mxu0 0.0
    %3690 = vmatpush1.msra.mxu0 %v3663
    %3691 = vmatprep.subr.mxu0 0.0
    %3692 = vmatpush1.msra.mxu0 %v3664
    %3693 = vmatprep.subr.mxu0 0.0
    %3694 = vmatpush1.msra.mxu0 %v3665
    %3695 = vmatprep.subr.mxu0 0.0
    %3696 = vmatpush1.msra.mxu0 %v3666
    %3697 = vmatprep.subr.mxu0 0.0
    %3698 = vmatpush1.msra.mxu0 %v3667
    %3699 = vmatprep.subr.mxu0 0.0
    %3700 = vmatpush1.msra.mxu0 %v3668
    %3701 = vmatprep.subr.mxu0 0.0
    %3702 = vmatpush1.msra.mxu0 %v3669
    %3703 = vmatprep.subr.mxu0 0.0
    %3704 = vmatpush1.msra.mxu0 %v3670
    %3705 = vmatprep.subr.mxu0 0.0
    %3706 = vmatpush1.msra.mxu0 %v3671
    %3707 = vmatprep.subr.mxu0 0.0
    %3708 = vmatpush1.msra.mxu0 %v3672
    %3709 = vmatprep.subr.mxu0 0.0
    %3710 = vmatpush1.msra.mxu0 %v3673
    %3711 = vmatprep.subr.mxu0 0.0
    %3712 = vmatpush1.msra.mxu0 0.0
    %3713 = vmatprep.subr.mxu0 0.0
    %3714 = vmatpush1.msra.mxu0 0.0
    %3715 = vmatprep.subr.mxu0 0.0
    %3716 = vmatpush1.msra.mxu0 0.0
    %3717 = vmatprep.subr.mxu0 0.0
    %3718 = vmatpush1.msra.mxu0 0.0
    %3719 = vmatprep.subr.mxu0 0.0
    %3720 = vmatpush1.msra.mxu0 0.0
    %3721 = vmatprep.subr.mxu0 0.0
    %3722 = vmatpush1.msra.mxu0 0.0
    %3723 = vmatprep.subr.mxu0 0.0
    %3724 = vmatpush1.msra.mxu0 0.0
    %3725 = vmatprep.subr.mxu0 0.0
    %3726 = vmatpush1.msra.mxu0 0.0
    %3727 = vmatprep.subr.mxu0 0.0
    %3728 = vmatpush1.msra.mxu0 0.0
    %3729 = vmatprep.subr.mxu0 0.0
    %3730 = vmatpush1.msra.mxu0 0.0
    %3731 = vmatprep.subr.mxu0 0.0
    %3732 = vmatpush1.msra.mxu0 0.0
    %3733 = vmatprep.subr.mxu0 0.0
    %3734 = vmatpush1.msra.mxu0 0.0
    %3735 = vmatprep.subr.mxu0 0.0
    %3736 = vmatpush1.msra.mxu0 0.0
    %3737 = vmatprep.subr.mxu0 0.0
    %3738 = vmatpush1.msra.mxu0 0.0
    %3739 = vmatprep.subr.mxu0 0.0
    %3740 = vmatpush1.msra.mxu0 0.0
    %3741 = vmatprep.subr.mxu0 0.0
    %3742 = vmatpush1.msra.mxu0 0.0
    %3743 = vmatprep.mubr.f32.mxu0 0.0
    %3744 = vmatmul.mubr.f32.gmra.mrb[0].mxu0 %v3655
    %v3745 = vpop.f32.mrb[0].mxu0
    %v3746 = vadd.f32 %v3678, %v3745
    %v3747 = vpop.f32.mrb[0].mxu0
    %3748 = vmatprep.mubr.f32.mxu0 0.0
    %3749 = vmatmul.mubr.f32.gmra.mrb[0].mxu0 %v3656
    %v3750 = vpop.f32.mrb[0].mxu0
    %v3751 = vadd.f32 %v3678, %v3750
    %v3752 = vpop.f32.mrb[0].mxu0
    %3753 = vdwg.mxu0
    %v3754 = vld [vmem:[%s9] sm:$0x1]
    %v3755 = vlaneseq
    %v3756 = vshrl.u32 %v3755, 7
    %v3757 = vsub.s32 0, %v3756
    %v3758 = vrot.slane %v3754, %v3757
    %v3759 = vmul.f32 %v3758, %v2050
    %v3760 = vmul.f32 %v3758, %v2055
    %v3761 = vmul.f32 %v3758, %v2060
    %v3762 = vmul.f32 %v3758, %v2065
    %v3763 = vadd.f32 %v39, %v3759
    %v3764 = vadd.f32 %v40, %v3760
    %v3765 = vadd.f32 %v41, %v3761
    %v3766 = vadd.f32 %v42, %v3762
    %3767 = vst.msk [vmem:[#allocation2] sm:$0xff] %vm47, %v3763
    %3768 = vst.msk [vmem:[#allocation2 + $0x8] sm:$0xff] %vm47, %v3764
    %3769 = vst.msk [vmem:[#allocation2 + $0x10] sm:$0xff] %vm47, %v3765
    %3770 = vst.msk [vmem:[#allocation2 + $0x18] sm:$0xff] %vm47, %v3766
    %v3771 = vld [vmem:[%s9 + $0x1] sm:$0x1]
    %v3772 = vlaneseq
    %v3773 = vshrl.u32 %v3772, 7
    %v3774 = vsub.s32 0, %v3773
    %v3775 = vrot.slane %v3771, %v3774
    %v3776 = vmul.f32 %v3775, %v3746
    %v3777 = vmul.f32 %v3775, %v3751
    %v3778 = vadd.f32 %v43, %v3776
    %v3779 = vadd.f32 %v44, %v3777
    %3780 = vst.msk [vmem:[#allocation4] sm:$0xff] %vm47, %v3778
    %3781 = vst.msk [vmem:[#allocation4 + $0x8] sm:$0xff] %vm47, %v3779
    // Predicated region
    $region42: #{tpu_custom_call.1} parent=1 // pred_check
      _
    $region43: #{tpu_custom_call.1} parent=1 // pred_check_branch
      %3783 = sbr.rel (0) target = $region45
    $region44: #{tpu_custom_call.1} parent=1 // pred_region
      %s3785 = ssub.s32 512, 512
      %3786 = vsyncadd [#allocation3], %s3785
      %s3787 = sshll.u32 [#allocation2], 4
      %s3788 = int_to_ptr.vmem [resolvable:$true] %s3787
      %3793 = dma.vmem_to_hbm [thread:$0]  %s3788, 512, %s10, [#allocation3], 128, 128, 8
    $region45: #{tpu_custom_call.1} parent=1 // pred_fallthru
      _
    // Predicated region
    $region46: #{tpu_custom_call.1} parent=1 // pred_check
      _
    $region47: #{tpu_custom_call.1} parent=1 // pred_check_branch
      %3795 = sbr.rel (0) target = $region49
    $region48: #{tpu_custom_call.1} parent=1 // pred_region
      %s3797 = ssub.s32 256, 256
      %3798 = vsyncadd [#allocation5], %s3797
      %s3799 = sshll.u32 [#allocation4], 4
      %s3800 = int_to_ptr.vmem [resolvable:$true] %s3799
      %3805 = dma.vmem_to_hbm [thread:$0]  %s3800, 256, %s11, [#allocation5], 128, 128, 8
    $region49: #{tpu_custom_call.1} parent=1 // pred_fallthru
      _
    // Predicated region
    $region50: #{tpu_custom_call.1} parent=1 // pred_check
      _
    $region51: #{tpu_custom_call.1} parent=1 // pred_check_branch
      %3807 = sbr.rel (0) target = $region53
    $region52: #{tpu_custom_call.1} parent=1 // pred_region
      %3808 = dma.done [#allocation3], 512
    $region53: #{tpu_custom_call.1} parent=1 // pred_fallthru
      _
    // Predicated region
    $region54: #{tpu_custom_call.1} parent=1 // pred_check
      _
    $region55: #{tpu_custom_call.1} parent=1 // pred_check_branch
      %3810 = sbr.rel (0) target = $region57
    $region56: #{tpu_custom_call.1} parent=1 // pred_region
      %3811 = dma.done [#allocation5], 256
    $region57: #{tpu_custom_call.1} parent=1 // pred_fallthru
      _
    %3812 = vsyncpa [#allocation3], 1
    %3813 = vsyncpa [#allocation5], 1

</llo_original>
